<compile_context>
chip_gen: v6e
topology: v6e:2x2x1
jax: 0.10.0
libtpu: 0.0.40
codegen_flags: <defaults>
</compile_context>

<pallas_src>
import functools

import jax
import jax.numpy as jnp
from jax import lax
from jax.experimental import pallas as pl
from jax.experimental.pallas import tpu as pltpu


def _round_up(x, m):
    return (x + m - 1) // m * m


def _cab_kernel(W, PAD, x_ref,
                cw1_ref, cb1_ref, cw2_ref, cb2_ref,
                aw1_ref, ab1_ref, aw2_ref, ab2_ref,
                mleft_ref, mright_ref,
                o_ref,
                xp1_ref, xp2_ref, xs1_ref, xs2_ref):
    # x_ref: (1, C, HW); conv weights (Cout, 9*Cin_pad) bf16; conv biases
    # (Cout, 1) f32; aw1: (C, Csq) [= torch W1.T], ab1: (1, Csq),
    # aw2: (C, Csq), ab2: (C, 1); masks: (1, HW) bf16;
    # scratch: padded line buffers (Cin, HW+2*PAD) bf16 and staged K operands
    # (9*Cin_pad, HW) bf16.
    HW = x_ref.shape[-1]

    # One-time scratch init (scratch persists across grid steps): the PAD lane
    # regions must read as zero and are never written again; the staged-K pad
    # rows must be finite (their weight columns are zero, but 0 * NaN = NaN).
    @pl.when(pl.program_id(0) == 0)
    def _init():
        xp1_ref[...] = jnp.zeros_like(xp1_ref)
        xp2_ref[...] = jnp.zeros_like(xp2_ref)
        xs1_ref[...] = jnp.zeros_like(xs1_ref)
        xs2_ref[...] = jnp.zeros_like(xs2_ref)

    mleft = mleft_ref[...]                       # (1, HW) bf16 {0,1}
    mright = mright_ref[...]

    def conv3x3(xp_ref, xs_ref, src, w_ref, b_ref):
        # src: (Cin, HW) bf16, already in vregs.  Stage the 9 shifted /
        # edge-masked slices and run a single MXU pass with K = 9*Cin_pad.
        cin = src.shape[0]
        cin_pad = xs_ref.shape[0] // 9
        xp_ref[:, pl.ds(PAD, HW)] = src          # interior of the line buffer
        taps = [(dy, dx) for dy in (-1, 0, 1) for dx in (-1, 0, 1)]
        for t, (dy, dx) in enumerate(taps):
            if dy == 0 and dx == 0:
                xs = src                         # reuse vregs; skip the reload
            else:
                start = PAD + dy * W + dx        # static lane offset
                xs = xp_ref[:, pl.ds(start, HW)]
            if dx == -1:
                xs = xs * mleft                  # kill wrapped left column
            elif dx == 1:
                xs = xs * mright                 # kill wrapped right column
            xs_ref[pl.ds(t * cin_pad, cin), :] = xs
        acc = jnp.dot(w_ref[...], xs_ref[...],   # (Cout, 9*Cin_pad)@(..., HW)
                      preferred_element_type=jnp.float32)
        return acc + b_ref[...]                  # (Cout, 1) broadcast on lanes

    # conv1 -> GELU (tanh approx) -> conv2, f32 accumulation throughout.
    x = x_ref[0].astype(jnp.bfloat16)
    mid = conv3x3(xp1_ref, xs1_ref, x, cw1_ref, cb1_ref)        # (Cmid, HW)
    mid = jax.nn.gelu(mid, approximate=True)
    y = conv3x3(xp2_ref, xs2_ref, mid.astype(jnp.bfloat16),
                cw2_ref, cb2_ref)                               # (C, HW) f32

    # --- Channel attention: tiny squeeze MLP on VPU/XLU/EUP only (no MXU) ---
    pooled = jnp.sum(y, axis=1, keepdims=True) * (1.0 / HW)     # (C, 1)
    h = jnp.sum(aw1_ref[...] * pooled, axis=0, keepdims=True)   # (1, Csq)
    h = jnp.maximum(h + ab1_ref[...], 0.0)                      # ReLU
    att = jnp.sum(aw2_ref[...] * h, axis=1, keepdims=True) + ab2_ref[...]
    att = jax.nn.sigmoid(att)                                   # (C, 1)

    o_ref[0] = (y * att).astype(o_ref.dtype)


def cab_forward(x, cw1, cb1, cw2, cb2, aw1, ab1, aw2, ab2):
    """CAB forward.  x: (B, C, H, W).  Conv weights in torch OIHW layout,
    attention 1x1-conv weights as (Csq, C) and (C, Csq)."""
    B, C, H, W = x.shape
    Cmid = cw1.shape[0]
    Csq = aw1.shape[0]
    HW = H * W
    PAD = pl.cdiv(W + 1, 128) * 128          # lane-aligned left pad, >= W+1
    HWP = HW + 2 * PAD
    CIN1P = _round_up(C, 16)                 # bf16 sublane tile alignment
    CIN2P = _round_up(Cmid, 16)
    f32, bf16 = jnp.float32, jnp.bfloat16

    x_flat = x.reshape(B, C, HW)

    def pack_w(w, cin_pad):
        # OIHW -> (Cout, 9*cin_pad) with K ordered (tap, cin); pad rows of the
        # staged operand get zero weight columns.
        cout, cin = w.shape[0], w.shape[1]
        wt = jnp.transpose(w, (0, 2, 3, 1)).reshape(cout, 9, cin)
        wt = jnp.pad(wt, ((0, 0), (0, 0), (0, cin_pad - cin)))
        return wt.reshape(cout, 9 * cin_pad).astype(bf16)

    cw1_big = pack_w(cw1, CIN1P)                  # (Cmid, 9*CIN1P) bf16
    cw2_big = pack_w(cw2, CIN2P)                  # (C,    9*CIN2P) bf16
    cb1_c = cb1.reshape(Cmid, 1).astype(f32)
    cb2_c = cb2.reshape(C, 1).astype(f32)
    # Squeeze-excite params laid out for VPU broadcast-mul + reduce.
    aw1_t = aw1.T.astype(f32)                     # (C, Csq)
    ab1_r = ab1.reshape(1, Csq).astype(f32)       # lane-major row
    aw2_m = aw2.astype(f32)                       # (C, Csq)
    ab2_c = ab2.reshape(C, 1).astype(f32)

    # Column-validity masks for the dx = -1 / +1 taps in flattened-HW space,
    # precomputed host-side (no in-kernel iota/mod), bf16 so staging stays bf16.
    col = jnp.arange(HW, dtype=jnp.int32) % W
    mleft = (col >= 1).astype(bf16).reshape(1, HW)
    mright = (col <= W - 2).astype(bf16).reshape(1, HW)

    kernel = functools.partial(_cab_kernel, W, PAD)

    cost = pl.CostEstimate(
        flops=int(B * (4 * 9 * HW * C * Cmid + 12 * C * HW)),
        transcendentals=int(B * (Cmid * HW + C)),
        bytes_accessed=int(4 * 2 * B * C * HW
                           + 2 * (cw1_big.size + cw2_big.size + 2 * HW)
                           + 4 * (cb1_c.size + cb2_c.size + aw1_t.size
                                  + ab1_r.size + aw2_m.size + ab2_c.size)),
    )

    out = pl.pallas_call(
        kernel,
        out_shape=jax.ShapeDtypeStruct((B, C, HW), x.dtype),
        grid_spec=pltpu.PrefetchScalarGridSpec(
            num_scalar_prefetch=0,
            grid=(B,),
            in_specs=[
                pl.BlockSpec((1, C, HW), lambda b: (b, 0, 0)),      # x
                pl.BlockSpec((Cmid, 9 * CIN1P), lambda b: (0, 0)),  # conv1 W
                pl.BlockSpec((Cmid, 1), lambda b: (0, 0)),          # conv1 b
                pl.BlockSpec((C, 9 * CIN2P), lambda b: (0, 0)),     # conv2 W
                pl.BlockSpec((C, 1), lambda b: (0, 0)),             # conv2 b
                pl.BlockSpec((C, Csq), lambda b: (0, 0)),           # attn W1^T
                pl.BlockSpec((1, Csq), lambda b: (0, 0)),           # attn b1
                pl.BlockSpec((C, Csq), lambda b: (0, 0)),           # attn W2
                pl.BlockSpec((C, 1), lambda b: (0, 0)),             # attn b2
                pl.BlockSpec((1, HW), lambda b: (0, 0)),            # mask dx=-1
                pl.BlockSpec((1, HW), lambda b: (0, 0)),            # mask dx=+1
            ],
            out_specs=pl.BlockSpec((1, C, HW), lambda b: (b, 0, 0)),
            scratch_shapes=[
                pltpu.VMEM((C, HWP), bf16),          # padded conv1 line buffer
                pltpu.VMEM((Cmid, HWP), bf16),       # padded conv2 line buffer
                pltpu.VMEM((9 * CIN1P, HW), bf16),   # staged conv1 K operand
                pltpu.VMEM((9 * CIN2P, HW), bf16),   # staged conv2 K operand
            ],
        ),
        compiler_params=pltpu.CompilerParams(
            dimension_semantics=("parallel",)),
        cost_estimate=cost,
    )(x_flat, cw1_big, cb1_c, cw2_big, cb2_c, aw1_t, ab1_r, aw2_m, ab2_c,
      mleft, mright)

    return out.reshape(B, C, H, W)


def _reference(x, cw1, cb1, cw2, cb2, aw1, ab1, aw2, ab2):
    # Pure-JAX reference mirroring the PyTorch CAB forward (tanh-approx GELU).
    dn = ('NCHW', 'OIHW', 'NCHW')
    hp = lax.Precision.HIGHEST
    y = lax.conv_general_dilated(x, cw1, (1, 1), ((1, 1), (1, 1)),
                                 dimension_numbers=dn, precision=hp)
    y = y + cb1[None, :, None, None]
    y = jax.nn.gelu(y, approximate=True)
    y = lax.conv_general_dilated(y, cw2, (1, 1), ((1, 1), (1, 1)),
                                 dimension_numbers=dn, precision=hp)
    y = y + cb2[None, :, None, None]
    pooled = jnp.mean(y, axis=(2, 3))                        # (B, C)
    h = jnp.maximum(pooled @ aw1.T + ab1, 0.0)               # (B, Csq)
    att = jax.nn.sigmoid(h @ aw2.T + ab2)                    # (B, C)
    return y * att[:, :, None, None]


if __name__ == "__main__":
    # CAB(num_feat=60, compress_ratio=3, squeeze_factor=30):
    #   Cmid = 20, Csq = 2;  H*W = 256 (multiple of 128 -> lane-dense).
    B, num_feat, H, W = 2, 60, 16, 16
    compress_ratio, squeeze_factor = 3, 30
    Cmid = num_feat // compress_ratio
    Csq = num_feat // squeeze_factor

    key = jax.random.PRNGKey(0)
    ks = jax.random.split(key, 9)
    s = 0.05
    x = jax.random.normal(ks[0], (B, num_feat, H, W), dtype=jnp.float32)
    cw1 = jax.random.normal(ks[1], (Cmid, num_feat, 3, 3), jnp.float32) * s
    cb1 = jax.random.normal(ks[2], (Cmid,), jnp.float32) * s
    cw2 = jax.random.normal(ks[3], (num_feat, Cmid, 3, 3), jnp.float32) * s
    cb2 = jax.random.normal(ks[4], (num_feat,), jnp.float32) * s
    aw1 = jax.random.normal(ks[5], (Csq, num_feat), jnp.float32) * s
    ab1 = jax.random.normal(ks[6], (Csq,), jnp.float32) * s
    aw2 = jax.random.normal(ks[7], (num_feat, Csq), jnp.float32) * s
    ab2 = jax.random.normal(ks[8], (num_feat,), jnp.float32) * s

    out = cab_forward(x, cw1, cb1, cw2, cb2, aw1, ab1, aw2, ab2)
    out = jax.block_until_ready(out)

    ref = _reference(x, cw1, cb1, cw2, cb2, aw1, ab1, aw2, ab2)
    assert out.shape == x.shape
    assert jnp.allclose(out, ref, atol=1e-2, rtol=1e-2), (
        "mismatch vs reference: max abs err = "
        f"{float(jnp.max(jnp.abs(out - ref)))}")

    print("KERNEL_OK")
</pallas_src>

<mosaic_0001>
module attributes {stable_mosaic.version = 11 : i64} {
  func.func @_cab_kernel(%arg0: i32, %arg1: memref<1x60x256xf32, #tpu.memory_space<vmem>>, %arg2: memref<20x576xbf16, #tpu.memory_space<vmem>>, %arg3: memref<20x1xf32, #tpu.memory_space<vmem>>, %arg4: memref<60x288xbf16, #tpu.memory_space<vmem>>, %arg5: memref<60x1xf32, #tpu.memory_space<vmem>>, %arg6: memref<60x2xf32, #tpu.memory_space<vmem>>, %arg7: memref<1x2xf32, #tpu.memory_space<vmem>>, %arg8: memref<60x2xf32, #tpu.memory_space<vmem>>, %arg9: memref<60x1xf32, #tpu.memory_space<vmem>>, %arg10: memref<1x256xbf16, #tpu.memory_space<vmem>>, %arg11: memref<1x256xbf16, #tpu.memory_space<vmem>>, %arg12: memref<1x60x256xf32, #tpu.memory_space<vmem>>, %arg13: memref<60x512xbf16, #tpu.memory_space<vmem>>, %arg14: memref<20x512xbf16, #tpu.memory_space<vmem>>, %arg15: memref<576x256xbf16, #tpu.memory_space<vmem>>, %arg16: memref<288x256xbf16, #tpu.memory_space<vmem>>) attributes {dimension_semantics = [#tpu.dimension_semantics<parallel>], iteration_bounds = array<i64: 2>, scalar_prefetch = 0 : i64, scratch_operands = 4 : i64, tpu.core_type = #tpu.core_type<tc>, window_params = [{transform_indices = @transform_0, window_bounds = array<i64: 1, 60, 256>}, {pipeline_mode = #tpu.pipeline_mode<synchronous>, transform_indices = @transform_1, window_bounds = array<i64: 20, 576>}, {pipeline_mode = #tpu.pipeline_mode<synchronous>, transform_indices = @transform_2, window_bounds = array<i64: 20, 1>}, {pipeline_mode = #tpu.pipeline_mode<synchronous>, transform_indices = @transform_3, window_bounds = array<i64: 60, 288>}, {pipeline_mode = #tpu.pipeline_mode<synchronous>, transform_indices = @transform_4, window_bounds = array<i64: 60, 1>}, {pipeline_mode = #tpu.pipeline_mode<synchronous>, transform_indices = @transform_5, window_bounds = array<i64: 60, 2>}, {pipeline_mode = #tpu.pipeline_mode<synchronous>, transform_indices = @transform_6, window_bounds = array<i64: 1, 2>}, {pipeline_mode = #tpu.pipeline_mode<synchronous>, transform_indices = @transform_7, window_bounds = array<i64: 60, 2>}, {pipeline_mode = #tpu.pipeline_mode<synchronous>, transform_indices = @transform_8, window_bounds = array<i64: 60, 1>}, {pipeline_mode = #tpu.pipeline_mode<synchronous>, transform_indices = @transform_9, window_bounds = array<i64: 1, 256>}, {pipeline_mode = #tpu.pipeline_mode<synchronous>, transform_indices = @transform_10, window_bounds = array<i64: 1, 256>}, {transform_indices = @transform_11, window_bounds = array<i64: 1, 60, 256>}]} {
    %c0_i32 = arith.constant 0 : i32
    %0 = arith.cmpi eq, %arg0, %c0_i32 : i32
    %1 = arith.extui %0 : i1 to i32
    %c0_i32_0 = arith.constant 0 : i32
    %2 = arith.cmpi ne, %1, %c0_i32_0 : i32
    scf.if %2 {
      %cst_93 = arith.constant 0.000000e+00 : bf16
      %124 = vector.broadcast %cst_93 : bf16 to vector<60x512xbf16>
      %c0_94 = arith.constant 0 : index
      %c0_95 = arith.constant 0 : index
      %125 = vector.load %arg13[%c0_94, %c0_95] : memref<60x512xbf16, #tpu.memory_space<vmem>>, vector<60x512xbf16>
      tpu.vector_store %arg13[%c0_94, %c0_95], %124 {strides = array<i32>} : memref<60x512xbf16, #tpu.memory_space<vmem>>, vector<60x512xbf16>,
      %cst_96 = arith.constant 0.000000e+00 : bf16
      %126 = vector.broadcast %cst_96 : bf16 to vector<20x512xbf16>
      %c0_97 = arith.constant 0 : index
      %c0_98 = arith.constant 0 : index
      %127 = vector.load %arg14[%c0_97, %c0_98] : memref<20x512xbf16, #tpu.memory_space<vmem>>, vector<20x512xbf16>
      tpu.vector_store %arg14[%c0_97, %c0_98], %126 {strides = array<i32>} : memref<20x512xbf16, #tpu.memory_space<vmem>>, vector<20x512xbf16>,
      %cst_99 = arith.constant 0.000000e+00 : bf16
      %128 = vector.broadcast %cst_99 : bf16 to vector<576x256xbf16>
      %c0_100 = arith.constant 0 : index
      %c0_101 = arith.constant 0 : index
      %129 = vector.load %arg15[%c0_100, %c0_101] : memref<576x256xbf16, #tpu.memory_space<vmem>>, vector<576x256xbf16>
      tpu.vector_store %arg15[%c0_100, %c0_101], %128 {strides = array<i32>} : memref<576x256xbf16, #tpu.memory_space<vmem>>, vector<576x256xbf16>,
      %cst_102 = arith.constant 0.000000e+00 : bf16
      %130 = vector.broadcast %cst_102 : bf16 to vector<288x256xbf16>
      %c0_103 = arith.constant 0 : index
      %c0_104 = arith.constant 0 : index
      %131 = vector.load %arg16[%c0_103, %c0_104] : memref<288x256xbf16, #tpu.memory_space<vmem>>, vector<288x256xbf16>
      tpu.vector_store %arg16[%c0_103, %c0_104], %130 {strides = array<i32>} : memref<288x256xbf16, #tpu.memory_space<vmem>>, vector<288x256xbf16>,
    } else {
    }
    %c0 = arith.constant 0 : index
    %c0_1 = arith.constant 0 : index
    %3 = vector.load %arg10[%c0, %c0_1] : memref<1x256xbf16, #tpu.memory_space<vmem>>, vector<1x256xbf16>
    %c0_2 = arith.constant 0 : index
    %c0_3 = arith.constant 0 : index
    %4 = vector.load %arg11[%c0_2, %c0_3] : memref<1x256xbf16, #tpu.memory_space<vmem>>, vector<1x256xbf16>
    %c0_4 = arith.constant 0 : index
    %c0_5 = arith.constant 0 : index
    %c0_6 = arith.constant 0 : index
    %5 = vector.load %arg1[%c0_4, %c0_5, %c0_6] : memref<1x60x256xf32, #tpu.memory_space<vmem>>, vector<1x60x256xf32>
    %6 = vector.shape_cast %5 : vector<1x60x256xf32> to vector<60x256xf32>
    %7 = arith.truncf %6 : vector<60x256xf32> to vector<60x256xbf16>
    %c0_7 = arith.constant 0 : index
    %c128 = arith.constant 128 : index
    %8 = vector.load %arg13[%c0_7, %c128] : memref<60x512xbf16, #tpu.memory_space<vmem>>, vector<60x256xbf16>
    tpu.vector_store %arg13[%c0_7, %c128], %7 {strides = array<i32>} : memref<60x512xbf16, #tpu.memory_space<vmem>>, vector<60x256xbf16>,
    %c0_8 = arith.constant 0 : index
    %c111 = arith.constant 111 : index
    %9 = vector.load %arg13[%c0_8, %c111] : memref<60x512xbf16, #tpu.memory_space<vmem>>, vector<60x256xbf16>
    %10 = vector.broadcast %3 : vector<1x256xbf16> to vector<60x256xbf16>
    %11 = arith.mulf %9, %10 : vector<60x256xbf16>
    %c0_9 = arith.constant 0 : index
    %c0_10 = arith.constant 0 : index
    %12 = vector.load %arg15[%c0_9, %c0_10] : memref<576x256xbf16, #tpu.memory_space<vmem>>, vector<60x256xbf16>
    tpu.vector_store %arg15[%c0_9, %c0_10], %11 {strides = array<i32>} : memref<576x256xbf16, #tpu.memory_space<vmem>>, vector<60x256xbf16>,
    %c0_11 = arith.constant 0 : index
    %c112 = arith.constant 112 : index
    %13 = vector.load %arg13[%c0_11, %c112] : memref<60x512xbf16, #tpu.memory_space<vmem>>, vector<60x256xbf16>
    %c64 = arith.constant 64 : index
    %c0_12 = arith.constant 0 : index
    %14 = vector.load %arg15[%c64, %c0_12] : memref<576x256xbf16, #tpu.memory_space<vmem>>, vector<60x256xbf16>
    tpu.vector_store %arg15[%c64, %c0_12], %13 {strides = array<i32>} : memref<576x256xbf16, #tpu.memory_space<vmem>>, vector<60x256xbf16>,
    %c0_13 = arith.constant 0 : index
    %c113 = arith.constant 113 : index
    %15 = vector.load %arg13[%c0_13, %c113] : memref<60x512xbf16, #tpu.memory_space<vmem>>, vector<60x256xbf16>
    %16 = vector.broadcast %4 : vector<1x256xbf16> to vector<60x256xbf16>
    %17 = arith.mulf %15, %16 : vector<60x256xbf16>
    %c128_14 = arith.constant 128 : index
    %c0_15 = arith.constant 0 : index
    %18 = vector.load %arg15[%c128_14, %c0_15] : memref<576x256xbf16, #tpu.memory_space<vmem>>, vector<60x256xbf16>
    tpu.vector_store %arg15[%c128_14, %c0_15], %17 {strides = array<i32>} : memref<576x256xbf16, #tpu.memory_space<vmem>>, vector<60x256xbf16>,
    %c0_16 = arith.constant 0 : index
    %c127 = arith.constant 127 : index
    %19 = vector.load %arg13[%c0_16, %c127] : memref<60x512xbf16, #tpu.memory_space<vmem>>, vector<60x256xbf16>
    %20 = vector.broadcast %3 : vector<1x256xbf16> to vector<60x256xbf16>
    %21 = arith.mulf %19, %20 : vector<60x256xbf16>
    %c192 = arith.constant 192 : index
    %c0_17 = arith.constant 0 : index
    %22 = vector.load %arg15[%c192, %c0_17] : memref<576x256xbf16, #tpu.memory_space<vmem>>, vector<60x256xbf16>
    tpu.vector_store %arg15[%c192, %c0_17], %21 {strides = array<i32>} : memref<576x256xbf16, #tpu.memory_space<vmem>>, vector<60x256xbf16>,
    %c256 = arith.constant 256 : index
    %c0_18 = arith.constant 0 : index
    %23 = vector.load %arg15[%c256, %c0_18] : memref<576x256xbf16, #tpu.memory_space<vmem>>, vector<60x256xbf16>
    tpu.vector_store %arg15[%c256, %c0_18], %7 {strides = array<i32>} : memref<576x256xbf16, #tpu.memory_space<vmem>>, vector<60x256xbf16>,
    %c0_19 = arith.constant 0 : index
    %c129 = arith.constant 129 : index
    %24 = vector.load %arg13[%c0_19, %c129] : memref<60x512xbf16, #tpu.memory_space<vmem>>, vector<60x256xbf16>
    %25 = vector.broadcast %4 : vector<1x256xbf16> to vector<60x256xbf16>
    %26 = arith.mulf %24, %25 : vector<60x256xbf16>
    %c320 = arith.constant 320 : index
    %c0_20 = arith.constant 0 : index
    %27 = vector.load %arg15[%c320, %c0_20] : memref<576x256xbf16, #tpu.memory_space<vmem>>, vector<60x256xbf16>
    tpu.vector_store %arg15[%c320, %c0_20], %26 {strides = array<i32>} : memref<576x256xbf16, #tpu.memory_space<vmem>>, vector<60x256xbf16>,
    %c0_21 = arith.constant 0 : index
    %c143 = arith.constant 143 : index
    %28 = vector.load %arg13[%c0_21, %c143] : memref<60x512xbf16, #tpu.memory_space<vmem>>, vector<60x256xbf16>
    %29 = vector.broadcast %3 : vector<1x256xbf16> to vector<60x256xbf16>
    %30 = arith.mulf %28, %29 : vector<60x256xbf16>
    %c384 = arith.constant 384 : index
    %c0_22 = arith.constant 0 : index
    %31 = vector.load %arg15[%c384, %c0_22] : memref<576x256xbf16, #tpu.memory_space<vmem>>, vector<60x256xbf16>
    tpu.vector_store %arg15[%c384, %c0_22], %30 {strides = array<i32>} : memref<576x256xbf16, #tpu.memory_space<vmem>>, vector<60x256xbf16>,
    %c0_23 = arith.constant 0 : index
    %c144 = arith.constant 144 : index
    %32 = vector.load %arg13[%c0_23, %c144] : memref<60x512xbf16, #tpu.memory_space<vmem>>, vector<60x256xbf16>
    %c448 = arith.constant 448 : index
    %c0_24 = arith.constant 0 : index
    %33 = vector.load %arg15[%c448, %c0_24] : memref<576x256xbf16, #tpu.memory_space<vmem>>, vector<60x256xbf16>
    tpu.vector_store %arg15[%c448, %c0_24], %32 {strides = array<i32>} : memref<576x256xbf16, #tpu.memory_space<vmem>>, vector<60x256xbf16>,
    %c0_25 = arith.constant 0 : index
    %c145 = arith.constant 145 : index
    %34 = vector.load %arg13[%c0_25, %c145] : memref<60x512xbf16, #tpu.memory_space<vmem>>, vector<60x256xbf16>
    %35 = vector.broadcast %4 : vector<1x256xbf16> to vector<60x256xbf16>
    %36 = arith.mulf %34, %35 : vector<60x256xbf16>
    %c512 = arith.constant 512 : index
    %c0_26 = arith.constant 0 : index
    %37 = vector.load %arg15[%c512, %c0_26] : memref<576x256xbf16, #tpu.memory_space<vmem>>, vector<60x256xbf16>
    tpu.vector_store %arg15[%c512, %c0_26], %36 {strides = array<i32>} : memref<576x256xbf16, #tpu.memory_space<vmem>>, vector<60x256xbf16>,
    %c0_27 = arith.constant 0 : index
    %c0_28 = arith.constant 0 : index
    %38 = vector.load %arg2[%c0_27, %c0_28] : memref<20x576xbf16, #tpu.memory_space<vmem>>, vector<20x576xbf16>
    %c0_29 = arith.constant 0 : index
    %c0_30 = arith.constant 0 : index
    %39 = vector.load %arg15[%c0_29, %c0_30] : memref<576x256xbf16, #tpu.memory_space<vmem>>, vector<576x256xbf16>
    %cst = arith.constant dense<0.000000e+00> : vector<20x256xf32>
    %40 = tpu.matmul %38, %39, %cst {dimension_numbers = #tpu.dot_dimension_numbers<[1], [0], [0], [1], [0, 0, 1, 1], [], []>} : vector<20x576xbf16>, vector<576x256xbf16>, vector<20x256xf32> -> vector<20x256xf32>
    %c0_31 = arith.constant 0 : index
    %c0_32 = arith.constant 0 : index
    %41 = vector.load %arg3[%c0_31, %c0_32] : memref<20x1xf32, #tpu.memory_space<vmem>>, vector<20x1xf32>
    %42 = vector.broadcast %41 : vector<20x1xf32> to vector<20x256xf32>
    %43 = arith.addf %40, %42 : vector<20x256xf32>
    %44 = arith.mulf %43, %43 : vector<20x256xf32>
    %45 = arith.mulf %43, %44 : vector<20x256xf32>
    %cst_33 = arith.constant 4.471500e-02 : f32
    %46 = vector.broadcast %cst_33 : f32 to vector<20x256xf32>
    %47 = arith.mulf %46, %45 : vector<20x256xf32>
    %48 = arith.addf %43, %47 : vector<20x256xf32>
    %cst_34 = arith.constant 0.797884583 : f32
    %49 = vector.broadcast %cst_34 : f32 to vector<20x256xf32>
    %50 = arith.mulf %49, %48 : vector<20x256xf32>
    %51 = math.tanh %50 : vector<20x256xf32>
    %cst_35 = arith.constant 1.000000e+00 : f32
    %52 = vector.broadcast %cst_35 : f32 to vector<20x256xf32>
    %53 = arith.addf %52, %51 : vector<20x256xf32>
    %cst_36 = arith.constant 5.000000e-01 : f32
    %54 = vector.broadcast %cst_36 : f32 to vector<20x256xf32>
    %55 = arith.mulf %54, %53 : vector<20x256xf32>
    %56 = arith.mulf %43, %55 : vector<20x256xf32>
    %57 = arith.truncf %56 : vector<20x256xf32> to vector<20x256xbf16>
    %c0_37 = arith.constant 0 : index
    %c128_38 = arith.constant 128 : index
    %58 = vector.load %arg14[%c0_37, %c128_38] : memref<20x512xbf16, #tpu.memory_space<vmem>>, vector<20x256xbf16>
    tpu.vector_store %arg14[%c0_37, %c128_38], %57 {strides = array<i32>} : memref<20x512xbf16, #tpu.memory_space<vmem>>, vector<20x256xbf16>,
    %c0_39 = arith.constant 0 : index
    %c111_40 = arith.constant 111 : index
    %59 = vector.load %arg14[%c0_39, %c111_40] : memref<20x512xbf16, #tpu.memory_space<vmem>>, vector<20x256xbf16>
    %60 = vector.broadcast %3 : vector<1x256xbf16> to vector<20x256xbf16>
    %61 = arith.mulf %59, %60 : vector<20x256xbf16>
    %c0_41 = arith.constant 0 : index
    %c0_42 = arith.constant 0 : index
    %62 = vector.load %arg16[%c0_41, %c0_42] : memref<288x256xbf16, #tpu.memory_space<vmem>>, vector<20x256xbf16>
    tpu.vector_store %arg16[%c0_41, %c0_42], %61 {strides = array<i32>} : memref<288x256xbf16, #tpu.memory_space<vmem>>, vector<20x256xbf16>,
    %c0_43 = arith.constant 0 : index
    %c112_44 = arith.constant 112 : index
    %63 = vector.load %arg14[%c0_43, %c112_44] : memref<20x512xbf16, #tpu.memory_space<vmem>>, vector<20x256xbf16>
    %c32 = arith.constant 32 : index
    %c0_45 = arith.constant 0 : index
    %64 = vector.load %arg16[%c32, %c0_45] : memref<288x256xbf16, #tpu.memory_space<vmem>>, vector<20x256xbf16>
    tpu.vector_store %arg16[%c32, %c0_45], %63 {strides = array<i32>} : memref<288x256xbf16, #tpu.memory_space<vmem>>, vector<20x256xbf16>,
    %c0_46 = arith.constant 0 : index
    %c113_47 = arith.constant 113 : index
    %65 = vector.load %arg14[%c0_46, %c113_47] : memref<20x512xbf16, #tpu.memory_space<vmem>>, vector<20x256xbf16>
    %66 = vector.broadcast %4 : vector<1x256xbf16> to vector<20x256xbf16>
    %67 = arith.mulf %65, %66 : vector<20x256xbf16>
    %c64_48 = arith.constant 64 : index
    %c0_49 = arith.constant 0 : index
    %68 = vector.load %arg16[%c64_48, %c0_49] : memref<288x256xbf16, #tpu.memory_space<vmem>>, vector<20x256xbf16>
    tpu.vector_store %arg16[%c64_48, %c0_49], %67 {strides = array<i32>} : memref<288x256xbf16, #tpu.memory_space<vmem>>, vector<20x256xbf16>,
    %c0_50 = arith.constant 0 : index
    %c127_51 = arith.constant 127 : index
    %69 = vector.load %arg14[%c0_50, %c127_51] : memref<20x512xbf16, #tpu.memory_space<vmem>>, vector<20x256xbf16>
    %70 = vector.broadcast %3 : vector<1x256xbf16> to vector<20x256xbf16>
    %71 = arith.mulf %69, %70 : vector<20x256xbf16>
    %c96 = arith.constant 96 : index
    %c0_52 = arith.constant 0 : index
    %72 = vector.load %arg16[%c96, %c0_52] : memref<288x256xbf16, #tpu.memory_space<vmem>>, vector<20x256xbf16>
    tpu.vector_store %arg16[%c96, %c0_52], %71 {strides = array<i32>} : memref<288x256xbf16, #tpu.memory_space<vmem>>, vector<20x256xbf16>,
    %c128_53 = arith.constant 128 : index
    %c0_54 = arith.constant 0 : index
    %73 = vector.load %arg16[%c128_53, %c0_54] : memref<288x256xbf16, #tpu.memory_space<vmem>>, vector<20x256xbf16>
    tpu.vector_store %arg16[%c128_53, %c0_54], %57 {strides = array<i32>} : memref<288x256xbf16, #tpu.memory_space<vmem>>, vector<20x256xbf16>,
    %c0_55 = arith.constant 0 : index
    %c129_56 = arith.constant 129 : index
    %74 = vector.load %arg14[%c0_55, %c129_56] : memref<20x512xbf16, #tpu.memory_space<vmem>>, vector<20x256xbf16>
    %75 = vector.broadcast %4 : vector<1x256xbf16> to vector<20x256xbf16>
    %76 = arith.mulf %74, %75 : vector<20x256xbf16>
    %c160 = arith.constant 160 : index
    %c0_57 = arith.constant 0 : index
    %77 = vector.load %arg16[%c160, %c0_57] : memref<288x256xbf16, #tpu.memory_space<vmem>>, vector<20x256xbf16>
    tpu.vector_store %arg16[%c160, %c0_57], %76 {strides = array<i32>} : memref<288x256xbf16, #tpu.memory_space<vmem>>, vector<20x256xbf16>,
    %c0_58 = arith.constant 0 : index
    %c143_59 = arith.constant 143 : index
    %78 = vector.load %arg14[%c0_58, %c143_59] : memref<20x512xbf16, #tpu.memory_space<vmem>>, vector<20x256xbf16>
    %79 = vector.broadcast %3 : vector<1x256xbf16> to vector<20x256xbf16>
    %80 = arith.mulf %78, %79 : vector<20x256xbf16>
    %c192_60 = arith.constant 192 : index
    %c0_61 = arith.constant 0 : index
    %81 = vector.load %arg16[%c192_60, %c0_61] : memref<288x256xbf16, #tpu.memory_space<vmem>>, vector<20x256xbf16>
    tpu.vector_store %arg16[%c192_60, %c0_61], %80 {strides = array<i32>} : memref<288x256xbf16, #tpu.memory_space<vmem>>, vector<20x256xbf16>,
    %c0_62 = arith.constant 0 : index
    %c144_63 = arith.constant 144 : index
    %82 = vector.load %arg14[%c0_62, %c144_63] : memref<20x512xbf16, #tpu.memory_space<vmem>>, vector<20x256xbf16>
    %c224 = arith.constant 224 : index
    %c0_64 = arith.constant 0 : index
    %83 = vector.load %arg16[%c224, %c0_64] : memref<288x256xbf16, #tpu.memory_space<vmem>>, vector<20x256xbf16>
    tpu.vector_store %arg16[%c224, %c0_64], %82 {strides = array<i32>} : memref<288x256xbf16, #tpu.memory_space<vmem>>, vector<20x256xbf16>,
    %c0_65 = arith.constant 0 : index
    %c145_66 = arith.constant 145 : index
    %84 = vector.load %arg14[%c0_65, %c145_66] : memref<20x512xbf16, #tpu.memory_space<vmem>>, vector<20x256xbf16>
    %85 = vector.broadcast %4 : vector<1x256xbf16> to vector<20x256xbf16>
    %86 = arith.mulf %84, %85 : vector<20x256xbf16>
    %c256_67 = arith.constant 256 : index
    %c0_68 = arith.constant 0 : index
    %87 = vector.load %arg16[%c256_67, %c0_68] : memref<288x256xbf16, #tpu.memory_space<vmem>>, vector<20x256xbf16>
    tpu.vector_store %arg16[%c256_67, %c0_68], %86 {strides = array<i32>} : memref<288x256xbf16, #tpu.memory_space<vmem>>, vector<20x256xbf16>,
    %c0_69 = arith.constant 0 : index
    %c0_70 = arith.constant 0 : index
    %88 = vector.load %arg4[%c0_69, %c0_70] : memref<60x288xbf16, #tpu.memory_space<vmem>>, vector<60x288xbf16>
    %c0_71 = arith.constant 0 : index
    %c0_72 = arith.constant 0 : index
    %89 = vector.load %arg16[%c0_71, %c0_72] : memref<288x256xbf16, #tpu.memory_space<vmem>>, vector<288x256xbf16>
    %cst_73 = arith.constant dense<0.000000e+00> : vector<60x256xf32>
    %90 = tpu.matmul %88, %89, %cst_73 {dimension_numbers = #tpu.dot_dimension_numbers<[1], [0], [0], [1], [0, 0, 1, 1], [], []>} : vector<60x288xbf16>, vector<288x256xbf16>, vector<60x256xf32> -> vector<60x256xf32>
    %c0_74 = arith.constant 0 : index
    %c0_75 = arith.constant 0 : index
    %91 = vector.load %arg5[%c0_74, %c0_75] : memref<60x1xf32, #tpu.memory_space<vmem>>, vector<60x1xf32>
    %92 = vector.broadcast %91 : vector<60x1xf32> to vector<60x256xf32>
    %93 = arith.addf %90, %92 : vector<60x256xf32>
    %cst_76 = arith.constant dense<0.000000e+00> : vector<60xf32>
    %94 = vector.multi_reduction <add>, %93, %cst_76 [1] : vector<60x256xf32> to vector<60xf32>
    %95 = vector.shape_cast %94 : vector<60xf32> to vector<60x1xf32>
    %cst_77 = arith.constant 3.906250e-03 : f32
    %96 = vector.broadcast %cst_77 : f32 to vector<60x1xf32>
    %97 = arith.mulf %95, %96 : vector<60x1xf32>
    %c0_78 = arith.constant 0 : index
    %c0_79 = arith.constant 0 : index
    %98 = vector.load %arg6[%c0_78, %c0_79] : memref<60x2xf32, #tpu.memory_space<vmem>>, vector<60x2xf32>
    %99 = vector.broadcast %97 : vector<60x1xf32> to vector<60x2xf32>
    %100 = arith.mulf %98, %99 : vector<60x2xf32>
    %cst_80 = arith.constant dense<0.000000e+00> : vector<2xf32>
    %101 = vector.multi_reduction <add>, %100, %cst_80 [0] : vector<60x2xf32> to vector<2xf32>
    %102 = vector.shape_cast %101 : vector<2xf32> to vector<1x2xf32>
    %c0_81 = arith.constant 0 : index
    %c0_82 = arith.constant 0 : index
    %103 = vector.load %arg7[%c0_81, %c0_82] : memref<1x2xf32, #tpu.memory_space<vmem>>, vector<1x2xf32>
    %104 = arith.addf %102, %103 : vector<1x2xf32>
    %cst_83 = arith.constant 0.000000e+00 : f32
    %105 = vector.broadcast %cst_83 : f32 to vector<1x2xf32>
    %106 = arith.maximumf %104, %105 : vector<1x2xf32>
    %c0_84 = arith.constant 0 : index
    %c0_85 = arith.constant 0 : index
    %107 = vector.load %arg8[%c0_84, %c0_85] : memref<60x2xf32, #tpu.memory_space<vmem>>, vector<60x2xf32>
    %108 = vector.broadcast %106 : vector<1x2xf32> to vector<60x2xf32>
    %109 = arith.mulf %107, %108 : vector<60x2xf32>
    %cst_86 = arith.constant dense<0.000000e+00> : vector<60xf32>
    %110 = vector.multi_reduction <add>, %109, %cst_86 [1] : vector<60x2xf32> to vector<60xf32>
    %111 = vector.shape_cast %110 : vector<60xf32> to vector<60x1xf32>
    %c0_87 = arith.constant 0 : index
    %c0_88 = arith.constant 0 : index
    %112 = vector.load %arg9[%c0_87, %c0_88] : memref<60x1xf32, #tpu.memory_space<vmem>>, vector<60x1xf32>
    %113 = arith.addf %111, %112 : vector<60x1xf32>
    %114 = arith.negf %113 : vector<60x1xf32>
    %115 = math.exp %114 : vector<60x1xf32>
    %cst_89 = arith.constant 1.000000e+00 : f32
    %116 = vector.broadcast %cst_89 : f32 to vector<60x1xf32>
    %117 = arith.addf %116, %115 : vector<60x1xf32>
    %118 = arith.divf %116, %117 : vector<60x1xf32>
    %119 = vector.broadcast %118 : vector<60x1xf32> to vector<60x256xf32>
    %120 = arith.mulf %93, %119 : vector<60x256xf32>
    %c0_90 = arith.constant 0 : index
    %c0_91 = arith.constant 0 : index
    %c0_92 = arith.constant 0 : index
    %121 = vector.load %arg12[%c0_90, %c0_91, %c0_92] : memref<1x60x256xf32, #tpu.memory_space<vmem>>, vector<1x60x256xf32>
    %122 = vector.shape_cast %121 : vector<1x60x256xf32> to vector<60x256xf32>
    %123 = vector.shape_cast %120 : vector<60x256xf32> to vector<1x60x256xf32>
    tpu.vector_store %arg12[%c0_90, %c0_91, %c0_92], %123 {strides = array<i32>} : memref<1x60x256xf32, #tpu.memory_space<vmem>>, vector<1x60x256xf32>,
    return
  }
  func.func @transform_0(%arg0: i32) -> (i32, i32, i32) {
    %c0_i32 = arith.constant 0 : i32
    %c0_i32_0 = arith.constant 0 : i32
    %c0_i32_1 = arith.constant 0 : i32
    return %arg0, %c0_i32, %c0_i32_0 : i32, i32, i32
  }
  func.func @transform_1(%arg0: i32) -> (i32, i32) {
    %c0_i32 = arith.constant 0 : i32
    %c0_i32_0 = arith.constant 0 : i32
    %c0_i32_1 = arith.constant 0 : i32
    return %c0_i32, %c0_i32_0 : i32, i32
  }
  func.func @transform_2(%arg0: i32) -> (i32, i32) {
    %c0_i32 = arith.constant 0 : i32
    %c0_i32_0 = arith.constant 0 : i32
    %c0_i32_1 = arith.constant 0 : i32
    return %c0_i32, %c0_i32_0 : i32, i32
  }
  func.func @transform_3(%arg0: i32) -> (i32, i32) {
    %c0_i32 = arith.constant 0 : i32
    %c0_i32_0 = arith.constant 0 : i32
    %c0_i32_1 = arith.constant 0 : i32
    return %c0_i32, %c0_i32_0 : i32, i32
  }
  func.func @transform_4(%arg0: i32) -> (i32, i32) {
    %c0_i32 = arith.constant 0 : i32
    %c0_i32_0 = arith.constant 0 : i32
    %c0_i32_1 = arith.constant 0 : i32
    return %c0_i32, %c0_i32_0 : i32, i32
  }
  func.func @transform_5(%arg0: i32) -> (i32, i32) {
    %c0_i32 = arith.constant 0 : i32
    %c0_i32_0 = arith.constant 0 : i32
    %c0_i32_1 = arith.constant 0 : i32
    return %c0_i32, %c0_i32_0 : i32, i32
  }
  func.func @transform_6(%arg0: i32) -> (i32, i32) {
    %c0_i32 = arith.constant 0 : i32
    %c0_i32_0 = arith.constant 0 : i32
    %c0_i32_1 = arith.constant 0 : i32
    return %c0_i32, %c0_i32_0 : i32, i32
  }
  func.func @transform_7(%arg0: i32) -> (i32, i32) {
    %c0_i32 = arith.constant 0 : i32
    %c0_i32_0 = arith.constant 0 : i32
    %c0_i32_1 = arith.constant 0 : i32
    return %c0_i32, %c0_i32_0 : i32, i32
  }
  func.func @transform_8(%arg0: i32) -> (i32, i32) {
    %c0_i32 = arith.constant 0 : i32
    %c0_i32_0 = arith.constant 0 : i32
    %c0_i32_1 = arith.constant 0 : i32
    return %c0_i32, %c0_i32_0 : i32, i32
  }
  func.func @transform_9(%arg0: i32) -> (i32, i32) {
    %c0_i32 = arith.constant 0 : i32
    %c0_i32_0 = arith.constant 0 : i32
    %c0_i32_1 = arith.constant 0 : i32
    return %c0_i32, %c0_i32_0 : i32, i32
  }
  func.func @transform_10(%arg0: i32) -> (i32, i32) {
    %c0_i32 = arith.constant 0 : i32
    %c0_i32_0 = arith.constant 0 : i32
    %c0_i32_1 = arith.constant 0 : i32
    return %c0_i32, %c0_i32_0 : i32, i32
  }
  func.func @transform_11(%arg0: i32) -> (i32, i32, i32) {
    %c0_i32 = arith.constant 0 : i32
    %c0_i32_0 = arith.constant 0 : i32
    %c0_i32_1 = arith.constant 0 : i32
    return %arg0, %c0_i32, %c0_i32_0 : i32, i32, i32
  }
}

</mosaic_0001>

<llo_original>
// kernel: tpu_custom_call.1
$region0: #{tpu_custom_call.1}
  #allocation0 [shape = 'u32[]', space=smem, size = 0x4, offset = 0x4, fixed_abs, tag = 'smem constant byte address 0x4 - core index']
  #allocation1 [shape = 'u32[144,128]{1,0:T(1,128)}', space=vmem, size = 0x12000, scoped, tag = 'internal scratch']
  #allocation2 [shape = 'bf16[60,512]{1,0:T(8,128)(2,1)}', space=vmem, size = 0x10000, scoped, tag = 'scratch operand']
  #allocation3 [shape = 'bf16[20,512]{1,0:T(8,128)(2,1)}', space=vmem, size = 0x6000, scoped, tag = 'scratch operand']
  #allocation4 [shape = 'bf16[576,256]{1,0:T(8,128)(2,1)}', space=vmem, size = 0x48000, scoped, tag = 'scratch operand']
  #allocation5 [shape = 'bf16[288,256]{1,0:T(8,128)(2,1)}', space=vmem, size = 0x24000, scoped, tag = 'scratch operand']
  %s0 = inlined_call_operand.vmem [shape: f32[2,60,256], index: 0, kind: input, shape index: {}]
  %s1 = inlined_call_operand.vmem [shape: bf16[20,576], index: 1, kind: input, shape index: {}]
  %s2 = inlined_call_operand.vmem [shape: f32[20,1], index: 2, kind: input, shape index: {}]
  %s3 = inlined_call_operand.vmem [shape: bf16[60,288], index: 3, kind: input, shape index: {}]
  %s4 = inlined_call_operand.vmem [shape: f32[60,1], index: 4, kind: input, shape index: {}]
  %s5 = inlined_call_operand.vmem [shape: f32[60,2], index: 5, kind: input, shape index: {}]
  %s6 = inlined_call_operand.vmem [shape: f32[1,2], index: 6, kind: input, shape index: {}]
  %s7 = inlined_call_operand.vmem [shape: f32[60,2], index: 7, kind: input, shape index: {}]
  %s8 = inlined_call_operand.vmem [shape: f32[60,1], index: 8, kind: input, shape index: {}]
  %s9 = inlined_call_operand.vmem [shape: bf16[1,256], index: 9, kind: input, shape index: {}]
  %s10 = inlined_call_operand.vmem [shape: bf16[1,256], index: 10, kind: input, shape index: {}]
  %s11 = inlined_call_operand.vmem [shape: f32[2,60,256], index: 11, kind: output, shape index: {}]
  %s12 = sld [smem:[#allocation0]]
  $region81: #{tpu_custom_call.1} parent=0
    _
  %s14 = ssub.s32 1, %s12
  %s15 = scalar_select 0, %s14, %s12
  loop: start=0, step=1, limit=4
  $region2: #{tpu_custom_call.1} parent=0 // loop_pre_header
    _
  $region3: #{tpu_custom_call.1} parent=0 // loop_header
    %s17 = sphi 0, %s21
    %p18 = scmp.ge.s32.totalorder %s17, 4
    %s27 = sphi 0, %s29
    %s30 = sphi 0, %s27
    %s31 = sphi 0, %s30
    %s47 = sphi 0, %s31
    %s51 = sphi 0, %s51
    %s53 = sphi 0, %s51
    %s54 = sphi 0, %s53
    %s68 = sphi 0, %s54
    %s72 = sphi 0, %s72
    %s74 = sphi 0, %s72
    %s75 = sphi 0, %s74
    %s89 = sphi 0, %s75
    %s93 = sphi 0, %s93
    %s95 = sphi 0, %s93
    %s96 = sphi 0, %s95
    %s110 = sphi 0, %s96
    %s114 = sphi 0, %s114
    %s116 = sphi 0, %s114
    %s117 = sphi 0, %s116
    %s131 = sphi 0, %s117
    %s135 = sphi 0, %s135
    %s137 = sphi 0, %s135
    %s138 = sphi 0, %s137
    %s152 = sphi 0, %s138
    %s156 = sphi 0, %s156
    %s158 = sphi 0, %s156
    %s159 = sphi 0, %s158
    %s173 = sphi 0, %s159
    %s177 = sphi 0, %s177
    %s179 = sphi 0, %s177
    %s180 = sphi 0, %s179
    %s194 = sphi 0, %s180
    %s198 = sphi 0, %s198
    %s200 = sphi 0, %s198
    %s201 = sphi 0, %s200
    %s215 = sphi 0, %s201
    %s219 = sphi 0, %s219
    %s221 = sphi 0, %s219
    %s222 = sphi 0, %s221
    %s236 = sphi 0, %s222
    %s240 = sphi 0, %s240
    %s242 = sphi 0, %s240
    %s243 = sphi 0, %s242
    %s257 = sphi 0, %s243
    %s263 = sphi 0, %s265
    %s266 = sphi 0, %s263
    %s267 = sphi 0, %s266
    %s283 = sphi 0, %s267
  $region4: #{tpu_custom_call.1} parent=0 // loop_header_branch
    %20 = sbr.rel (%p18) target = $region8
  $region5: #{tpu_custom_call.1} parent=0 // loop_body
    %s22 = ssub.s32 %s17, 1
    %s23 = ssub.s32 %s17, 2
    %s24 = sadd.s32 %s17, 1
    %s25 = ssub.s32 %s17, %s24
    %p26 = scmp.eq.s32.totalorder %s25, 0
    %s28 = sadd.s32 %s27, 1
    %s29 = scalar_select %p26, %s27, %s28
    %p32 = pneg %p26
    %p33 = scmp.eq.s32.totalorder %s17, 1
    %p34 = por %p32, %p33
    %p35 = scmp.ne.s32.totalorder %s27, %s30
    %p36 = scmp.eq.s32.totalorder %s17, 0
    %p37 = por %p35, %p36
    %p38 = scmp.ne.s32.totalorder %s27, %s30
    %p39 = scmp.eq.s32.totalorder %s22, 1
    %p40 = por %p38, %p39
    %p41 = scmp.ne.s32.totalorder %s30, %s31
    %p42 = scmp.eq.s32.totalorder %s22, 0
    %p43 = por %p41, %p42
    %p44 = scmp.ne.s32.totalorder %s30, %s31
    %p45 = scmp.eq.s32.totalorder %s23, 1
    %p46 = por %p44, %p45
    %p48 = scmp.ne.s32.totalorder %s31, %s47
    %p49 = scmp.eq.s32.totalorder %s23, 0
    %p50 = por %p48, %p49
    %s52 = sadd.s32 %s51, 1
    %p55 = scmp.eq.s32.totalorder %s17, 1
    %p56 = scmp.ne.s32.totalorder %s51, %s53
    %p57 = scmp.eq.s32.totalorder %s17, 0
    %p58 = por %p56, %p57
    %p59 = scmp.ne.s32.totalorder %s51, %s53
    %p60 = scmp.eq.s32.totalorder %s22, 1
    %p61 = por %p59, %p60
    %p62 = scmp.ne.s32.totalorder %s53, %s54
    %p63 = scmp.eq.s32.totalorder %s22, 0
    %p64 = por %p62, %p63
    %p65 = scmp.ne.s32.totalorder %s53, %s54
    %p66 = scmp.eq.s32.totalorder %s23, 1
    %p67 = por %p65, %p66
    %p69 = scmp.ne.s32.totalorder %s54, %s68
    %p70 = scmp.eq.s32.totalorder %s23, 0
    %p71 = por %p69, %p70
    %s73 = sadd.s32 %s72, 1
    %p76 = scmp.eq.s32.totalorder %s17, 1
    %p77 = scmp.ne.s32.totalorder %s72, %s74
    %p78 = scmp.eq.s32.totalorder %s17, 0
    %p79 = por %p77, %p78
    %p80 = scmp.ne.s32.totalorder %s72, %s74
    %p81 = scmp.eq.s32.totalorder %s22, 1
    %p82 = por %p80, %p81
    %p83 = scmp.ne.s32.totalorder %s74, %s75
    %p84 = scmp.eq.s32.totalorder %s22, 0
    %p85 = por %p83, %p84
    %p86 = scmp.ne.s32.totalorder %s74, %s75
    %p87 = scmp.eq.s32.totalorder %s23, 1
    %p88 = por %p86, %p87
    %p90 = scmp.ne.s32.totalorder %s75, %s89
    %p91 = scmp.eq.s32.totalorder %s23, 0
    %p92 = por %p90, %p91
    %s94 = sadd.s32 %s93, 1
    %p97 = scmp.eq.s32.totalorder %s17, 1
    %p98 = scmp.ne.s32.totalorder %s93, %s95
    %p99 = scmp.eq.s32.totalorder %s17, 0
    %p100 = por %p98, %p99
    %p101 = scmp.ne.s32.totalorder %s93, %s95
    %p102 = scmp.eq.s32.totalorder %s22, 1
    %p103 = por %p101, %p102
    %p104 = scmp.ne.s32.totalorder %s95, %s96
    %p105 = scmp.eq.s32.totalorder %s22, 0
    %p106 = por %p104, %p105
    %p107 = scmp.ne.s32.totalorder %s95, %s96
    %p108 = scmp.eq.s32.totalorder %s23, 1
    %p109 = por %p107, %p108
    %p111 = scmp.ne.s32.totalorder %s96, %s110
    %p112 = scmp.eq.s32.totalorder %s23, 0
    %p113 = por %p111, %p112
    %s115 = sadd.s32 %s114, 1
    %p118 = scmp.eq.s32.totalorder %s17, 1
    %p119 = scmp.ne.s32.totalorder %s114, %s116
    %p120 = scmp.eq.s32.totalorder %s17, 0
    %p121 = por %p119, %p120
    %p122 = scmp.ne.s32.totalorder %s114, %s116
    %p123 = scmp.eq.s32.totalorder %s22, 1
    %p124 = por %p122, %p123
    %p125 = scmp.ne.s32.totalorder %s116, %s117
    %p126 = scmp.eq.s32.totalorder %s22, 0
    %p127 = por %p125, %p126
    %p128 = scmp.ne.s32.totalorder %s116, %s117
    %p129 = scmp.eq.s32.totalorder %s23, 1
    %p130 = por %p128, %p129
    %p132 = scmp.ne.s32.totalorder %s117, %s131
    %p133 = scmp.eq.s32.totalorder %s23, 0
    %p134 = por %p132, %p133
    %s136 = sadd.s32 %s135, 1
    %p139 = scmp.eq.s32.totalorder %s17, 1
    %p140 = scmp.ne.s32.totalorder %s135, %s137
    %p141 = scmp.eq.s32.totalorder %s17, 0
    %p142 = por %p140, %p141
    %p143 = scmp.ne.s32.totalorder %s135, %s137
    %p144 = scmp.eq.s32.totalorder %s22, 1
    %p145 = por %p143, %p144
    %p146 = scmp.ne.s32.totalorder %s137, %s138
    %p147 = scmp.eq.s32.totalorder %s22, 0
    %p148 = por %p146, %p147
    %p149 = scmp.ne.s32.totalorder %s137, %s138
    %p150 = scmp.eq.s32.totalorder %s23, 1
    %p151 = por %p149, %p150
    %p153 = scmp.ne.s32.totalorder %s138, %s152
    %p154 = scmp.eq.s32.totalorder %s23, 0
    %p155 = por %p153, %p154
    %s157 = sadd.s32 %s156, 1
    %p160 = scmp.eq.s32.totalorder %s17, 1
    %p161 = scmp.ne.s32.totalorder %s156, %s158
    %p162 = scmp.eq.s32.totalorder %s17, 0
    %p163 = por %p161, %p162
    %p164 = scmp.ne.s32.totalorder %s156, %s158
    %p165 = scmp.eq.s32.totalorder %s22, 1
    %p166 = por %p164, %p165
    %p167 = scmp.ne.s32.totalorder %s158, %s159
    %p168 = scmp.eq.s32.totalorder %s22, 0
    %p169 = por %p167, %p168
    %p170 = scmp.ne.s32.totalorder %s158, %s159
    %p171 = scmp.eq.s32.totalorder %s23, 1
    %p172 = por %p170, %p171
    %p174 = scmp.ne.s32.totalorder %s159, %s173
    %p175 = scmp.eq.s32.totalorder %s23, 0
    %p176 = por %p174, %p175
    %s178 = sadd.s32 %s177, 1
    %p181 = scmp.eq.s32.totalorder %s17, 1
    %p182 = scmp.ne.s32.totalorder %s177, %s179
    %p183 = scmp.eq.s32.totalorder %s17, 0
    %p184 = por %p182, %p183
    %p185 = scmp.ne.s32.totalorder %s177, %s179
    %p186 = scmp.eq.s32.totalorder %s22, 1
    %p187 = por %p185, %p186
    %p188 = scmp.ne.s32.totalorder %s179, %s180
    %p189 = scmp.eq.s32.totalorder %s22, 0
    %p190 = por %p188, %p189
    %p191 = scmp.ne.s32.totalorder %s179, %s180
    %p192 = scmp.eq.s32.totalorder %s23, 1
    %p193 = por %p191, %p192
    %p195 = scmp.ne.s32.totalorder %s180, %s194
    %p196 = scmp.eq.s32.totalorder %s23, 0
    %p197 = por %p195, %p196
    %s199 = sadd.s32 %s198, 1
    %p202 = scmp.eq.s32.totalorder %s17, 1
    %p203 = scmp.ne.s32.totalorder %s198, %s200
    %p204 = scmp.eq.s32.totalorder %s17, 0
    %p205 = por %p203, %p204
    %p206 = scmp.ne.s32.totalorder %s198, %s200
    %p207 = scmp.eq.s32.totalorder %s22, 1
    %p208 = por %p206, %p207
    %p209 = scmp.ne.s32.totalorder %s200, %s201
    %p210 = scmp.eq.s32.totalorder %s22, 0
    %p211 = por %p209, %p210
    %p212 = scmp.ne.s32.totalorder %s200, %s201
    %p213 = scmp.eq.s32.totalorder %s23, 1
    %p214 = por %p212, %p213
    %p216 = scmp.ne.s32.totalorder %s201, %s215
    %p217 = scmp.eq.s32.totalorder %s23, 0
    %p218 = por %p216, %p217
    %s220 = sadd.s32 %s219, 1
    %p223 = scmp.eq.s32.totalorder %s17, 1
    %p224 = scmp.ne.s32.totalorder %s219, %s221
    %p225 = scmp.eq.s32.totalorder %s17, 0
    %p226 = por %p224, %p225
    %p227 = scmp.ne.s32.totalorder %s219, %s221
    %p228 = scmp.eq.s32.totalorder %s22, 1
    %p229 = por %p227, %p228
    %p230 = scmp.ne.s32.totalorder %s221, %s222
    %p231 = scmp.eq.s32.totalorder %s22, 0
    %p232 = por %p230, %p231
    %p233 = scmp.ne.s32.totalorder %s221, %s222
    %p234 = scmp.eq.s32.totalorder %s23, 1
    %p235 = por %p233, %p234
    %p237 = scmp.ne.s32.totalorder %s222, %s236
    %p238 = scmp.eq.s32.totalorder %s23, 0
    %p239 = por %p237, %p238
    %s241 = sadd.s32 %s240, 1
    %p244 = scmp.eq.s32.totalorder %s17, 1
    %p245 = scmp.ne.s32.totalorder %s240, %s242
    %p246 = scmp.eq.s32.totalorder %s17, 0
    %p247 = por %p245, %p246
    %p248 = scmp.ne.s32.totalorder %s240, %s242
    %p249 = scmp.eq.s32.totalorder %s22, 1
    %p250 = por %p248, %p249
    %p251 = scmp.ne.s32.totalorder %s242, %s243
    %p252 = scmp.eq.s32.totalorder %s22, 0
    %p253 = por %p251, %p252
    %p254 = scmp.ne.s32.totalorder %s242, %s243
    %p255 = scmp.eq.s32.totalorder %s23, 1
    %p256 = por %p254, %p255
    %p258 = scmp.ne.s32.totalorder %s243, %s257
    %p259 = scmp.eq.s32.totalorder %s23, 0
    %p260 = por %p258, %p259
    %s261 = ssub.s32 %s17, %s24
    %p262 = scmp.eq.s32.totalorder %s261, 0
    %s264 = sadd.s32 %s263, 1
    %s265 = scalar_select %p262, %s263, %s264
    %p268 = pneg %p262
    %p269 = scmp.eq.s32.totalorder %s17, 1
    %p270 = por %p268, %p269
    %p271 = scmp.ne.s32.totalorder %s263, %s266
    %p272 = scmp.eq.s32.totalorder %s17, 0
    %p273 = por %p271, %p272
    %p274 = scmp.ne.s32.totalorder %s263, %s266
    %p275 = scmp.eq.s32.totalorder %s22, 1
    %p276 = por %p274, %p275
    %p277 = scmp.ne.s32.totalorder %s266, %s267
    %p278 = scmp.eq.s32.totalorder %s22, 0
    %p279 = por %p277, %p278
    %p280 = scmp.ne.s32.totalorder %s266, %s267
    %p281 = scmp.eq.s32.totalorder %s23, 1
    %p282 = por %p280, %p281
    %p284 = scmp.ne.s32.totalorder %s267, %s283
    %p285 = scmp.eq.s32.totalorder %s23, 0
    %p286 = por %p284, %p285
    %p287 = scmp.le.s32.totalorder 1, %s17
    %p288 = scmp.lt.s32.totalorder %s17, 3
    %p289 = pnand %p287, %p288
    %p290 = pneg %p289
    // Predicated region
    $region9: #{tpu_custom_call.1} parent=5 // pred_check
      _
    $region10: #{tpu_custom_call.1} parent=5 // pred_check_branch
      %292 = sbr.rel (%p289) target = $region12
    $region11: #{tpu_custom_call.1} parent=5 // pred_region
      %s293 = ssub.s32 %s17, 1
      // Predicated region
      $region13: #{tpu_custom_call.1} parent=11 // pred_check
        %p294 = pneg %p64
      $region14: #{tpu_custom_call.1} parent=11 // pred_check_branch
        %296 = sbr.rel (%p294) target = $region16
      $region15: #{tpu_custom_call.1} parent=11 // pred_region
        _
      $region16: #{tpu_custom_call.1} parent=11 // pred_fallthru
        _
      // Predicated region
      $region17: #{tpu_custom_call.1} parent=11 // pred_check
        %p297 = pneg %p85
      $region18: #{tpu_custom_call.1} parent=11 // pred_check_branch
        %299 = sbr.rel (%p297) target = $region20
      $region19: #{tpu_custom_call.1} parent=11 // pred_region
        _
      $region20: #{tpu_custom_call.1} parent=11 // pred_fallthru
        _
      // Predicated region
      $region21: #{tpu_custom_call.1} parent=11 // pred_check
        %p300 = pneg %p106
      $region22: #{tpu_custom_call.1} parent=11 // pred_check_branch
        %302 = sbr.rel (%p300) target = $region24
      $region23: #{tpu_custom_call.1} parent=11 // pred_region
        _
      $region24: #{tpu_custom_call.1} parent=11 // pred_fallthru
        _
      // Predicated region
      $region25: #{tpu_custom_call.1} parent=11 // pred_check
        %p303 = pneg %p127
      $region26: #{tpu_custom_call.1} parent=11 // pred_check_branch
        %305 = sbr.rel (%p303) target = $region28
      $region27: #{tpu_custom_call.1} parent=11 // pred_region
        _
      $region28: #{tpu_custom_call.1} parent=11 // pred_fallthru
        _
      // Predicated region
      $region29: #{tpu_custom_call.1} parent=11 // pred_check
        %p306 = pneg %p148
      $region30: #{tpu_custom_call.1} parent=11 // pred_check_branch
        %308 = sbr.rel (%p306) target = $region32
      $region31: #{tpu_custom_call.1} parent=11 // pred_region
        _
      $region32: #{tpu_custom_call.1} parent=11 // pred_fallthru
        _
      // Predicated region
      $region33: #{tpu_custom_call.1} parent=11 // pred_check
        %p309 = pneg %p169
      $region34: #{tpu_custom_call.1} parent=11 // pred_check_branch
        %311 = sbr.rel (%p309) target = $region36
      $region35: #{tpu_custom_call.1} parent=11 // pred_region
        _
      $region36: #{tpu_custom_call.1} parent=11 // pred_fallthru
        _
      // Predicated region
      $region37: #{tpu_custom_call.1} parent=11 // pred_check
        %p312 = pneg %p190
      $region38: #{tpu_custom_call.1} parent=11 // pred_check_branch
        %314 = sbr.rel (%p312) target = $region40
      $region39: #{tpu_custom_call.1} parent=11 // pred_region
        _
      $region40: #{tpu_custom_call.1} parent=11 // pred_fallthru
        _
      // Predicated region
      $region41: #{tpu_custom_call.1} parent=11 // pred_check
        %p315 = pneg %p211
      $region42: #{tpu_custom_call.1} parent=11 // pred_check_branch
        %317 = sbr.rel (%p315) target = $region44
      $region43: #{tpu_custom_call.1} parent=11 // pred_region
        _
      $region44: #{tpu_custom_call.1} parent=11 // pred_fallthru
        _
      // Predicated region
      $region45: #{tpu_custom_call.1} parent=11 // pred_check
        %p318 = pneg %p232
      $region46: #{tpu_custom_call.1} parent=11 // pred_check_branch
        %320 = sbr.rel (%p318) target = $region48
      $region47: #{tpu_custom_call.1} parent=11 // pred_region
        _
      $region48: #{tpu_custom_call.1} parent=11 // pred_fallthru
        _
      // Predicated region
      $region49: #{tpu_custom_call.1} parent=11 // pred_check
        %p321 = pneg %p253
      $region50: #{tpu_custom_call.1} parent=11 // pred_check_branch
        %323 = sbr.rel (%p321) target = $region52
      $region51: #{tpu_custom_call.1} parent=11 // pred_region
        _
      $region52: #{tpu_custom_call.1} parent=11 // pred_fallthru
        _
    $region12: #{tpu_custom_call.1} parent=5 // pred_fallthru
      _
    %p324 = scmp.lt.s32.totalorder %s17, 2
    // Predicated region
    $region53: #{tpu_custom_call.1} parent=5 // pred_check
      %p325 = pneg %p324
    $region54: #{tpu_custom_call.1} parent=5 // pred_check_branch
      %327 = sbr.rel (%p325) target = $region56
    $region55: #{tpu_custom_call.1} parent=5 // pred_region
      // Predicated region
      $region57: #{tpu_custom_call.1} parent=55 // pred_check
        %p328 = pneg %p37
      $region58: #{tpu_custom_call.1} parent=55 // pred_check_branch
        %330 = sbr.rel (%p328) target = $region60
      $region59: #{tpu_custom_call.1} parent=55 // pred_region
        %p331 = scmp.lt.s32.totalorder %s17, 1
        %s332 = scalar_select %p331, %s17, 1
        %s333 = smul.addr %s332, 16
        %s334 = smul.addr %s333, 8
        %s335 = scalar_lea.vmem %s0, %s334
      $region60: #{tpu_custom_call.1} parent=55 // pred_fallthru
        _
    $region56: #{tpu_custom_call.1} parent=5 // pred_fallthru
      _
    %p336 = scmp.le.s32.totalorder 1, %s17
    %p337 = scmp.lt.s32.totalorder %s17, 3
    %p338 = pnand %p336, %p337
    %p339 = pneg %p338
    // Predicated region
    $region61: #{tpu_custom_call.1} parent=5 // pred_check
      _
    $region62: #{tpu_custom_call.1} parent=5 // pred_check_branch
      %341 = sbr.rel (%p338) target = $region64
    $region63: #{tpu_custom_call.1} parent=5 // pred_region
      %s342 = ssub.s32 %s17, 1
      %p343 = scmp.lt.s32.totalorder %s22, 1
      %s344 = scalar_select %p343, %s22, 1
      %s345 = smul.addr %s344, 16
      %s346 = smul.addr %s345, 8
      %s347 = scalar_lea.vmem %s0, %s346
      %p348 = pneg %p43
      %p349 = pneg %p40
      %p350 = pneg %p64
      %p351 = pneg %p61
      %p352 = pneg %p85
      %p353 = pneg %p82
      %p354 = pneg %p106
      %p355 = pneg %p103
      %p356 = pneg %p127
      %p357 = pneg %p124
      %p358 = pneg %p148
      %p359 = pneg %p145
      %p360 = pneg %p169
      %p361 = pneg %p166
      %p362 = pneg %p190
      %p363 = pneg %p187
      %p364 = pneg %p211
      %p365 = pneg %p208
      %p366 = pneg %p232
      %p367 = pneg %p229
      %p368 = pneg %p253
      %p369 = pneg %p250
      %p370 = pneg %p279
      %p371 = pneg %p276
      %p372 = scmp.lt.s32.totalorder %s22, 1
      %s373 = scalar_select %p372, %s22, 1
      %s374 = smul.addr %s373, 16
      %s375 = smul.addr %s374, 8
      %s376 = scalar_lea.vmem %s11, %s375
      %p377 = scmp.lt.s32.totalorder %s22, 1
      %s378 = scalar_select %p377, %s22, 1
      %s379 = smul.addr %s378, 16
      %s380 = smul.addr %s379, 8
      %s381 = scalar_lea.vmem %s0, %s380
      %p382 = scmp.lt.s32.totalorder %s22, 1
      %s383 = scalar_select %p382, %s22, 1
      %s384 = smul.addr %s383, 16
      %s385 = smul.addr %s384, 8
      %s386 = scalar_lea.vmem %s11, %s385
      %p388 = scmp.eq.s32.totalorder %s22, 0
      // Predicated region
      $region65: #{tpu_custom_call.1} parent=63 // pred_check
        %p389 = pneg %p388
      $region66: #{tpu_custom_call.1} parent=63 // pred_check_branch
        %391 = sbr.rel (%p389) target = $region68
      $region67: #{tpu_custom_call.1} parent=63 // pred_region
        %392 = vst [vmem:[#allocation2] sm:$0xff] 0
        %393 = vst [vmem:[#allocation2 + $0x8] sm:$0xff] 0
        %394 = vst [vmem:[#allocation2 + $0x10] sm:$0xff] 0
        %395 = vst [vmem:[#allocation2 + $0x18] sm:$0xff] 0
        %396 = vst [vmem:[#allocation2 + $0x20] sm:$0xff] 0
        %397 = vst [vmem:[#allocation2 + $0x28] sm:$0xff] 0
        %398 = vst [vmem:[#allocation2 + $0x30] sm:$0xff] 0
        %399 = vst [vmem:[#allocation2 + $0x38] sm:$0xff] 0
        %400 = vst [vmem:[#allocation2 + $0x40] sm:$0xff] 0
        %401 = vst [vmem:[#allocation2 + $0x48] sm:$0xff] 0
        %402 = vst [vmem:[#allocation2 + $0x50] sm:$0xff] 0
        %403 = vst [vmem:[#allocation2 + $0x58] sm:$0xff] 0
        %404 = vst [vmem:[#allocation2 + $0x60] sm:$0xff] 0
        %405 = vst [vmem:[#allocation2 + $0x68] sm:$0xff] 0
        %406 = vst [vmem:[#allocation2 + $0x70] sm:$0x33] 0
        %407 = vst [vmem:[#allocation2 + $0x78] sm:$0x33] 0
        %408 = vst [vmem:[#allocation3] sm:$0xff] 0
        %409 = vst [vmem:[#allocation3 + $0x8] sm:$0xff] 0
        %410 = vst [vmem:[#allocation3 + $0x10] sm:$0xff] 0
        %411 = vst [vmem:[#allocation3 + $0x18] sm:$0xff] 0
        %412 = vst [vmem:[#allocation3 + $0x20] sm:$0x33] 0
        %413 = vst [vmem:[#allocation3 + $0x28] sm:$0x33] 0
        %414 = vst [vmem:[#allocation4] sm:$0xff] 0
        %415 = vst [vmem:[#allocation4 + $0x8] sm:$0xff] 0
        %416 = vst [vmem:[#allocation4 + $0x10] sm:$0xff] 0
        %417 = vst [vmem:[#allocation4 + $0x18] sm:$0xff] 0
        %418 = vst [vmem:[#allocation4 + $0x20] sm:$0xff] 0
        %419 = vst [vmem:[#allocation4 + $0x28] sm:$0xff] 0
        %420 = vst [vmem:[#allocation4 + $0x30] sm:$0xff] 0
        %421 = vst [vmem:[#allocation4 + $0x38] sm:$0xff] 0
        %422 = vst [vmem:[#allocation4 + $0x40] sm:$0xff] 0
        %423 = vst [vmem:[#allocation4 + $0x48] sm:$0xff] 0
        %424 = vst [vmem:[#allocation4 + $0x50] sm:$0xff] 0
        %425 = vst [vmem:[#allocation4 + $0x58] sm:$0xff] 0
        %426 = vst [vmem:[#allocation4 + $0x60] sm:$0xff] 0
        %427 = vst [vmem:[#allocation4 + $0x68] sm:$0xff] 0
        %428 = vst [vmem:[#allocation4 + $0x70] sm:$0xff] 0
        %429 = vst [vmem:[#allocation4 + $0x78] sm:$0xff] 0
        %430 = vst [vmem:[#allocation4 + $0x80] sm:$0xff] 0
        %431 = vst [vmem:[#allocation4 + $0x88] sm:$0xff] 0
        %432 = vst [vmem:[#allocation4 + $0x90] sm:$0xff] 0
        %433 = vst [vmem:[#allocation4 + $0x98] sm:$0xff] 0
        %434 = vst [vmem:[#allocation4 + $0xa0] sm:$0xff] 0
        %435 = vst [vmem:[#allocation4 + $0xa8] sm:$0xff] 0
        %436 = vst [vmem:[#allocation4 + $0xb0] sm:$0xff] 0
        %437 = vst [vmem:[#allocation4 + $0xb8] sm:$0xff] 0
        %438 = vst [vmem:[#allocation4 + $0xc0] sm:$0xff] 0
        %439 = vst [vmem:[#allocation4 + $0xc8] sm:$0xff] 0
        %440 = vst [vmem:[#allocation4 + $0xd0] sm:$0xff] 0
        %441 = vst [vmem:[#allocation4 + $0xd8] sm:$0xff] 0
        %442 = vst [vmem:[#allocation4 + $0xe0] sm:$0xff] 0
        %443 = vst [vmem:[#allocation4 + $0xe8] sm:$0xff] 0
        %444 = vst [vmem:[#allocation4 + $0xf0] sm:$0xff] 0
        %445 = vst [vmem:[#allocation4 + $0xf8] sm:$0xff] 0
        %446 = vst [vmem:[#allocation4 + $0x100] sm:$0xff] 0
        %447 = vst [vmem:[#allocation4 + $0x108] sm:$0xff] 0
        %448 = vst [vmem:[#allocation4 + $0x110] sm:$0xff] 0
        %449 = vst [vmem:[#allocation4 + $0x118] sm:$0xff] 0
        %450 = vst [vmem:[#allocation4 + $0x120] sm:$0xff] 0
        %451 = vst [vmem:[#allocation4 + $0x128] sm:$0xff] 0
        %452 = vst [vmem:[#allocation4 + $0x130] sm:$0xff] 0
        %453 = vst [vmem:[#allocation4 + $0x138] sm:$0xff] 0
        %454 = vst [vmem:[#allocation4 + $0x140] sm:$0xff] 0
        %455 = vst [vmem:[#allocation4 + $0x148] sm:$0xff] 0
        %456 = vst [vmem:[#allocation4 + $0x150] sm:$0xff] 0
        %457 = vst [vmem:[#allocation4 + $0x158] sm:$0xff] 0
        %458 = vst [vmem:[#allocation4 + $0x160] sm:$0xff] 0
        %459 = vst [vmem:[#allocation4 + $0x168] sm:$0xff] 0
        %460 = vst [vmem:[#allocation4 + $0x170] sm:$0xff] 0
        %461 = vst [vmem:[#allocation4 + $0x178] sm:$0xff] 0
        %462 = vst [vmem:[#allocation4 + $0x180] sm:$0xff] 0
        %463 = vst [vmem:[#allocation4 + $0x188] sm:$0xff] 0
        %464 = vst [vmem:[#allocation4 + $0x190] sm:$0xff] 0
        %465 = vst [vmem:[#allocation4 + $0x198] sm:$0xff] 0
        %466 = vst [vmem:[#allocation4 + $0x1a0] sm:$0xff] 0
        %467 = vst [vmem:[#allocation4 + $0x1a8] sm:$0xff] 0
        %468 = vst [vmem:[#allocation4 + $0x1b0] sm:$0xff] 0
        %469 = vst [vmem:[#allocation4 + $0x1b8] sm:$0xff] 0
        %470 = vst [vmem:[#allocation4 + $0x1c0] sm:$0xff] 0
        %471 = vst [vmem:[#allocation4 + $0x1c8] sm:$0xff] 0
        %472 = vst [vmem:[#allocation4 + $0x1d0] sm:$0xff] 0
        %473 = vst [vmem:[#allocation4 + $0x1d8] sm:$0xff] 0
        %474 = vst [vmem:[#allocation4 + $0x1e0] sm:$0xff] 0
        %475 = vst [vmem:[#allocation4 + $0x1e8] sm:$0xff] 0
        %476 = vst [vmem:[#allocation4 + $0x1f0] sm:$0xff] 0
        %477 = vst [vmem:[#allocation4 + $0x1f8] sm:$0xff] 0
        %478 = vst [vmem:[#allocation4 + $0x200] sm:$0xff] 0
        %479 = vst [vmem:[#allocation4 + $0x208] sm:$0xff] 0
        %480 = vst [vmem:[#allocation4 + $0x210] sm:$0xff] 0
        %481 = vst [vmem:[#allocation4 + $0x218] sm:$0xff] 0
        %482 = vst [vmem:[#allocation4 + $0x220] sm:$0xff] 0
        %483 = vst [vmem:[#allocation4 + $0x228] sm:$0xff] 0
        %484 = vst [vmem:[#allocation4 + $0x230] sm:$0xff] 0
        %485 = vst [vmem:[#allocation4 + $0x238] sm:$0xff] 0
        %486 = vst [vmem:[#allocation5] sm:$0xff] 0
        %487 = vst [vmem:[#allocation5 + $0x8] sm:$0xff] 0
        %488 = vst [vmem:[#allocation5 + $0x10] sm:$0xff] 0
        %489 = vst [vmem:[#allocation5 + $0x18] sm:$0xff] 0
        %490 = vst [vmem:[#allocation5 + $0x20] sm:$0xff] 0
        %491 = vst [vmem:[#allocation5 + $0x28] sm:$0xff] 0
        %492 = vst [vmem:[#allocation5 + $0x30] sm:$0xff] 0
        %493 = vst [vmem:[#allocation5 + $0x38] sm:$0xff] 0
        %494 = vst [vmem:[#allocation5 + $0x40] sm:$0xff] 0
        %495 = vst [vmem:[#allocation5 + $0x48] sm:$0xff] 0
        %496 = vst [vmem:[#allocation5 + $0x50] sm:$0xff] 0
        %497 = vst [vmem:[#allocation5 + $0x58] sm:$0xff] 0
        %498 = vst [vmem:[#allocation5 + $0x60] sm:$0xff] 0
        %499 = vst [vmem:[#allocation5 + $0x68] sm:$0xff] 0
        %500 = vst [vmem:[#allocation5 + $0x70] sm:$0xff] 0
        %501 = vst [vmem:[#allocation5 + $0x78] sm:$0xff] 0
        %502 = vst [vmem:[#allocation5 + $0x80] sm:$0xff] 0
        %503 = vst [vmem:[#allocation5 + $0x88] sm:$0xff] 0
        %504 = vst [vmem:[#allocation5 + $0x90] sm:$0xff] 0
        %505 = vst [vmem:[#allocation5 + $0x98] sm:$0xff] 0
        %506 = vst [vmem:[#allocation5 + $0xa0] sm:$0xff] 0
        %507 = vst [vmem:[#allocation5 + $0xa8] sm:$0xff] 0
        %508 = vst [vmem:[#allocation5 + $0xb0] sm:$0xff] 0
        %509 = vst [vmem:[#allocation5 + $0xb8] sm:$0xff] 0
        %510 = vst [vmem:[#allocation5 + $0xc0] sm:$0xff] 0
        %511 = vst [vmem:[#allocation5 + $0xc8] sm:$0xff] 0
        %512 = vst [vmem:[#allocation5 + $0xd0] sm:$0xff] 0
        %513 = vst [vmem:[#allocation5 + $0xd8] sm:$0xff] 0
        %514 = vst [vmem:[#allocation5 + $0xe0] sm:$0xff] 0
        %515 = vst [vmem:[#allocation5 + $0xe8] sm:$0xff] 0
        %516 = vst [vmem:[#allocation5 + $0xf0] sm:$0xff] 0
        %517 = vst [vmem:[#allocation5 + $0xf8] sm:$0xff] 0
        %518 = vst [vmem:[#allocation5 + $0x100] sm:$0xff] 0
        %519 = vst [vmem:[#allocation5 + $0x108] sm:$0xff] 0
        %520 = vst [vmem:[#allocation5 + $0x110] sm:$0xff] 0
        %521 = vst [vmem:[#allocation5 + $0x118] sm:$0xff] 0
      $region68: #{tpu_custom_call.1} parent=63 // pred_fallthru
        _
      %v522 = vld [vmem:[%s9] sm:$0x3]
      %v523 = vld [vmem:[%s10] sm:$0x3]
      %v524 = vld [vmem:[%s381] sm:$0xff]
      %v525 = vld [vmem:[%s381 + $0x8] sm:$0xff]
      %v526 = vld [vmem:[%s381 + $0x10] sm:$0xff]
      %v527 = vld [vmem:[%s381 + $0x18] sm:$0xff]
      %v528 = vld [vmem:[%s381 + $0x20] sm:$0xff]
      %v529 = vld [vmem:[%s381 + $0x28] sm:$0xff]
      %v530 = vld [vmem:[%s381 + $0x30] sm:$0xff]
      %v531 = vld [vmem:[%s381 + $0x38] sm:$0xff]
      %v532 = vld [vmem:[%s381 + $0x40] sm:$0xff]
      %v533 = vld [vmem:[%s381 + $0x48] sm:$0xff]
      %v534 = vld [vmem:[%s381 + $0x50] sm:$0xff]
      %v535 = vld [vmem:[%s381 + $0x58] sm:$0xff]
      %v536 = vld [vmem:[%s381 + $0x60] sm:$0xff]
      %v537 = vld [vmem:[%s381 + $0x68] sm:$0xff]
      %v538 = vld [vmem:[%s381 + $0x70] sm:$0xf]
      %v539 = vld [vmem:[%s381 + $0x78] sm:$0xf]
      %v540 = vpack.c.bf16 %v526, %v524
      %v541 = vpack.c.bf16 %v527, %v525
      %v542 = vpack.c.bf16 %v530, %v528
      %v543 = vpack.c.bf16 %v531, %v529
      %v544 = vpack.c.bf16 %v534, %v532
      %v545 = vpack.c.bf16 %v535, %v533
      %v546 = vpack.c.bf16 %v538, %v536
      %v547 = vpack.c.bf16 %v539, %v537
      %v556 = vunpack.c.l.b16 %v540
      %v557 = vunpack.c.l.b16 %v541
      %v558 = vunpack.c.h.b16 %v540
      %v559 = vunpack.c.h.b16 %v541
      %v560 = vunpack.c.l.b16 %v542
      %v561 = vunpack.c.l.b16 %v543
      %v562 = vunpack.c.h.b16 %v542
      %v563 = vunpack.c.h.b16 %v543
      %v564 = vunpack.c.l.b16 %v544
      %v565 = vunpack.c.l.b16 %v545
      %v566 = vunpack.c.h.b16 %v544
      %v567 = vunpack.c.h.b16 %v545
      %v568 = vunpack.c.l.b16 %v546
      %v569 = vunpack.c.l.b16 %v547
      %v570 = vunpack.c.h.b16 %v546
      %v571 = vunpack.c.h.b16 %v547
      %v572 = vpack.c.b16 %v557, %v556
      %v573 = vpack.c.b16 %v559, %v558
      %v574 = vpack.c.b16 %v561, %v560
      %v575 = vpack.c.b16 %v563, %v562
      %v576 = vpack.c.b16 %v565, %v564
      %v577 = vpack.c.b16 %v567, %v566
      %v578 = vpack.c.b16 %v569, %v568
      %v579 = vpack.c.b16 %v571, %v570
      %588 = vst [vmem:[#allocation2 + $0x4] sm:$0xff] %v572
      %589 = vst [vmem:[#allocation2 + $0x14] sm:$0xff] %v573
      %590 = vst [vmem:[#allocation2 + $0x24] sm:$0xff] %v574
      %591 = vst [vmem:[#allocation2 + $0x34] sm:$0xff] %v575
      %592 = vst [vmem:[#allocation2 + $0x44] sm:$0xff] %v576
      %593 = vst [vmem:[#allocation2 + $0x54] sm:$0xff] %v577
      %594 = vst [vmem:[#allocation2 + $0x64] sm:$0xff] %v578
      %595 = vst [vmem:[#allocation2 + $0x74] sm:$0x33] %v579
      %v596 = vld [vmem:[#allocation2] sm:$0xff]
      %v597 = vld [vmem:[#allocation2 + $0x8] sm:$0xf]
      %v598 = vld [vmem:[#allocation2 + $0x10] sm:$0xff]
      %v599 = vld [vmem:[#allocation2 + $0x18] sm:$0xf]
      %v600 = vld [vmem:[#allocation2 + $0x20] sm:$0xff]
      %v601 = vld [vmem:[#allocation2 + $0x28] sm:$0xf]
      %v602 = vld [vmem:[#allocation2 + $0x30] sm:$0xff]
      %v603 = vld [vmem:[#allocation2 + $0x38] sm:$0xf]
      %v604 = vld [vmem:[#allocation2 + $0x40] sm:$0xff]
      %v605 = vld [vmem:[#allocation2 + $0x48] sm:$0xf]
      %v606 = vld [vmem:[#allocation2 + $0x50] sm:$0xff]
      %v607 = vld [vmem:[#allocation2 + $0x58] sm:$0xf]
      %v608 = vld [vmem:[#allocation2 + $0x60] sm:$0xff]
      %v609 = vld [vmem:[#allocation2 + $0x68] sm:$0xf]
      %v610 = vld [vmem:[#allocation2 + $0x70] sm:$0x33]
      %v611 = vld [vmem:[#allocation2 + $0x78] sm:$0x3]
      %v614 = vunpack.c.l.s4 1966171168
      %v615 = vunpack.c.0.s8 %v614
      %v616 = vlaneseq
      %v617 = vshrl.u32 %v616, 7
      %v618 = vsub.s32 %v615, %v617
      %v619 = vrot.slane %v522, %v618
      %v620 = vcombine.high %v619, %v619
      %v622 = vunpack.c.l.s4 1966171168
      %v623 = vunpack.c.0.s8 %v622
      %v624 = vlaneseq
      %v625 = vshrl.u32 %v624, 7
      %v626 = vsub.s32 %v623, %v625
      %v627 = vrot.slane %v619, %v626
      %v629 = vunpack.c.l.s4 1966171168
      %v630 = vunpack.c.0.s8 %v629
      %v631 = vlaneseq
      %v632 = vshrl.u32 %v631, 7
      %v633 = vsub.s32 %v630, %v632
      %v634 = vrot.slane %v620, %v633
      %v636 = vpack.i.b16 %v627, %v627
      %v638 = vlaneseq
      %v639 = vshrl.u32 %v638, 7
      %v640 = vsub.s32 0, %v639
      %v641 = vrot.slane %v636, %v640
      %v643 = vpack.i.b16 %v634, %v634
      %v645 = vlaneseq
      %v646 = vshrl.u32 %v645, 7
      %v647 = vsub.s32 0, %v646
      %v648 = vrot.slane %v643, %v647
      %v651 = vunpack.c.l.b16 %v641
      %v652 = vunpack.c.l.b16 %v648
      %v653 = vpack.c.b16 %v652, %v651
      %654 = vrot.lane.b32.xlu0 %v653, 111
      %v655 = vpop.permute.xlu0 %654
      %v656 = vrot.slane %v655, 4
      %vm657 = vcmask 908288
      %v658 = vsel %vm657, %v656, %v655
      %v661 = vmul.bf16 %v596, %v658
      %v662 = vmul.bf16 %v597, %v656
      %v663 = vmul.bf16 %v598, %v658
      %v664 = vmul.bf16 %v599, %v656
      %v665 = vmul.bf16 %v600, %v658
      %v666 = vmul.bf16 %v601, %v656
      %v667 = vmul.bf16 %v602, %v658
      %v668 = vmul.bf16 %v603, %v656
      %v669 = vmul.bf16 %v604, %v658
      %v670 = vmul.bf16 %v605, %v656
      %v671 = vmul.bf16 %v606, %v658
      %v672 = vmul.bf16 %v607, %v656
      %v673 = vmul.bf16 %v608, %v658
      %v674 = vmul.bf16 %v609, %v656
      %v675 = vmul.bf16 %v610, %v658
      %v676 = vmul.bf16 %v611, %v656
      %693 = vrot.lane.b32.xlu0 %v661, 17
      %v694 = vpop.permute.xlu0 %693
      %695 = vrot.lane.b32.xlu0 %v662, 17
      %v696 = vpop.permute.xlu0 %695
      %697 = vrot.lane.b32.xlu0 %v663, 17
      %v698 = vpop.permute.xlu0 %697
      %699 = vrot.lane.b32.xlu0 %v664, 17
      %v700 = vpop.permute.xlu0 %699
      %701 = vrot.lane.b32.xlu0 %v665, 17
      %v702 = vpop.permute.xlu0 %701
      %703 = vrot.lane.b32.xlu0 %v666, 17
      %v704 = vpop.permute.xlu0 %703
      %705 = vrot.lane.b32.xlu0 %v667, 17
      %v706 = vpop.permute.xlu0 %705
      %707 = vrot.lane.b32.xlu0 %v668, 17
      %v708 = vpop.permute.xlu0 %707
      %709 = vrot.lane.b32.xlu0 %v669, 17
      %v710 = vpop.permute.xlu0 %709
      %711 = vrot.lane.b32.xlu0 %v670, 17
      %v712 = vpop.permute.xlu0 %711
      %713 = vrot.lane.b32.xlu0 %v671, 17
      %v714 = vpop.permute.xlu0 %713
      %715 = vrot.lane.b32.xlu0 %v672, 17
      %v716 = vpop.permute.xlu0 %715
      %717 = vrot.lane.b32.xlu0 %v673, 17
      %v718 = vpop.permute.xlu0 %717
      %719 = vrot.lane.b32.xlu0 %v674, 17
      %v720 = vpop.permute.xlu0 %719
      %721 = vrot.lane.b32.xlu0 %v675, 17
      %v722 = vpop.permute.xlu0 %721
      %723 = vrot.lane.b32.xlu0 %v676, 17
      %v724 = vpop.permute.xlu0 %723
      %v725 = vrot.slane %v694, 4
      %v726 = vrot.slane %v696, 4
      %v727 = vrot.slane %v698, 4
      %v728 = vrot.slane %v700, 4
      %v729 = vrot.slane %v702, 4
      %v730 = vrot.slane %v704, 4
      %v731 = vrot.slane %v706, 4
      %v732 = vrot.slane %v708, 4
      %v733 = vrot.slane %v710, 4
      %v734 = vrot.slane %v712, 4
      %v735 = vrot.slane %v714, 4
      %v736 = vrot.slane %v716, 4
      %v737 = vrot.slane %v718, 4
      %v738 = vrot.slane %v720, 4
      %v739 = vrot.slane %v722, 4
      %v740 = vrot.slane %v724, 4
      %vm741 = vcmask 1043456
      %v742 = vsel %vm741, %v725, %v726
      %vm743 = vcmask 138240
      %v744 = vsel %vm743, %v694, %v742
      %v745 = vsel %vm741, %v727, %v728
      %v746 = vsel %vm743, %v698, %v745
      %v747 = vsel %vm741, %v729, %v730
      %v748 = vsel %vm743, %v702, %v747
      %v749 = vsel %vm741, %v731, %v732
      %v750 = vsel %vm743, %v706, %v749
      %v751 = vsel %vm741, %v733, %v734
      %v752 = vsel %vm743, %v710, %v751
      %v753 = vsel %vm741, %v735, %v736
      %v754 = vsel %vm743, %v714, %v753
      %v755 = vsel %vm741, %v737, %v738
      %v756 = vsel %vm743, %v718, %v755
      %v757 = vsel %vm741, %v739, %v740
      %v758 = vsel %vm743, %v722, %v757
      %767 = vst [vmem:[#allocation4] sm:$0xff] %v744
      %768 = vst [vmem:[#allocation4 + $0x8] sm:$0xff] %v746
      %769 = vst [vmem:[#allocation4 + $0x10] sm:$0xff] %v748
      %770 = vst [vmem:[#allocation4 + $0x18] sm:$0xff] %v750
      %771 = vst [vmem:[#allocation4 + $0x20] sm:$0xff] %v752
      %772 = vst [vmem:[#allocation4 + $0x28] sm:$0xff] %v754
      %773 = vst [vmem:[#allocation4 + $0x30] sm:$0xff] %v756
      %774 = vst [vmem:[#allocation4 + $0x38] sm:$0x33] %v758
      %v775 = vld [vmem:[#allocation2] sm:$0xff]
      %v776 = vld [vmem:[#allocation2 + $0x8] sm:$0xf]
      %v777 = vld [vmem:[#allocation2 + $0x10] sm:$0xff]
      %v778 = vld [vmem:[#allocation2 + $0x18] sm:$0xf]
      %v779 = vld [vmem:[#allocation2 + $0x20] sm:$0xff]
      %v780 = vld [vmem:[#allocation2 + $0x28] sm:$0xf]
      %v781 = vld [vmem:[#allocation2 + $0x30] sm:$0xff]
      %v782 = vld [vmem:[#allocation2 + $0x38] sm:$0xf]
      %v783 = vld [vmem:[#allocation2 + $0x40] sm:$0xff]
      %v784 = vld [vmem:[#allocation2 + $0x48] sm:$0xf]
      %v785 = vld [vmem:[#allocation2 + $0x50] sm:$0xff]
      %v786 = vld [vmem:[#allocation2 + $0x58] sm:$0xf]
      %v787 = vld [vmem:[#allocation2 + $0x60] sm:$0xff]
      %v788 = vld [vmem:[#allocation2 + $0x68] sm:$0xf]
      %v789 = vld [vmem:[#allocation2 + $0x70] sm:$0x33]
      %v790 = vld [vmem:[#allocation2 + $0x78] sm:$0x3]
      %807 = vrot.lane.b32.xlu0 %v775, 16
      %v808 = vpop.permute.xlu0 %807
      %809 = vrot.lane.b32.xlu0 %v776, 16
      %v810 = vpop.permute.xlu0 %809
      %811 = vrot.lane.b32.xlu0 %v777, 16
      %v812 = vpop.permute.xlu0 %811
      %813 = vrot.lane.b32.xlu0 %v778, 16
      %v814 = vpop.permute.xlu0 %813
      %815 = vrot.lane.b32.xlu0 %v779, 16
      %v816 = vpop.permute.xlu0 %815
      %817 = vrot.lane.b32.xlu0 %v780, 16
      %v818 = vpop.permute.xlu0 %817
      %819 = vrot.lane.b32.xlu0 %v781, 16
      %v820 = vpop.permute.xlu0 %819
      %821 = vrot.lane.b32.xlu0 %v782, 16
      %v822 = vpop.permute.xlu0 %821
      %823 = vrot.lane.b32.xlu0 %v783, 16
      %v824 = vpop.permute.xlu0 %823
      %825 = vrot.lane.b32.xlu0 %v784, 16
      %v826 = vpop.permute.xlu0 %825
      %827 = vrot.lane.b32.xlu0 %v785, 16
      %v828 = vpop.permute.xlu0 %827
      %829 = vrot.lane.b32.xlu0 %v786, 16
      %v830 = vpop.permute.xlu0 %829
      %831 = vrot.lane.b32.xlu0 %v787, 16
      %v832 = vpop.permute.xlu0 %831
      %833 = vrot.lane.b32.xlu0 %v788, 16
      %v834 = vpop.permute.xlu0 %833
      %835 = vrot.lane.b32.xlu0 %v789, 16
      %v836 = vpop.permute.xlu0 %835
      %837 = vrot.lane.b32.xlu0 %v790, 16
      %v838 = vpop.permute.xlu0 %837
      %v839 = vrot.slane %v808, 4
      %v840 = vrot.slane %v810, 4
      %v841 = vrot.slane %v812, 4
      %v842 = vrot.slane %v814, 4
      %v843 = vrot.slane %v816, 4
      %v844 = vrot.slane %v818, 4
      %v845 = vrot.slane %v820, 4
      %v846 = vrot.slane %v822, 4
      %v847 = vrot.slane %v824, 4
      %v848 = vrot.slane %v826, 4
      %v849 = vrot.slane %v828, 4
      %v850 = vrot.slane %v830, 4
      %v851 = vrot.slane %v832, 4
      %v852 = vrot.slane %v834, 4
      %v853 = vrot.slane %v836, 4
      %v854 = vrot.slane %v838, 4
      %v855 = vsel %vm741, %v839, %v840
      %vm856 = vcmask 130048
      %v857 = vsel %vm856, %v808, %v855
      %v858 = vsel %vm741, %v841, %v842
      %v859 = vsel %vm856, %v812, %v858
      %v860 = vsel %vm741, %v843, %v844
      %v861 = vsel %vm856, %v816, %v860
      %v862 = vsel %vm741, %v845, %v846
      %v863 = vsel %vm856, %v820, %v862
      %v864 = vsel %vm741, %v847, %v848
      %v865 = vsel %vm856, %v824, %v864
      %v866 = vsel %vm741, %v849, %v850
      %v867 = vsel %vm856, %v828, %v866
      %v868 = vsel %vm741, %v851, %v852
      %v869 = vsel %vm856, %v832, %v868
      %v870 = vsel %vm741, %v853, %v854
      %v871 = vsel %vm856, %v836, %v870
      %880 = vst [vmem:[#allocation4 + $0x40] sm:$0xff] %v857
      %881 = vst [vmem:[#allocation4 + $0x48] sm:$0xff] %v859
      %882 = vst [vmem:[#allocation4 + $0x50] sm:$0xff] %v861
      %883 = vst [vmem:[#allocation4 + $0x58] sm:$0xff] %v863
      %884 = vst [vmem:[#allocation4 + $0x60] sm:$0xff] %v865
      %885 = vst [vmem:[#allocation4 + $0x68] sm:$0xff] %v867
      %886 = vst [vmem:[#allocation4 + $0x70] sm:$0xff] %v869
      %887 = vst [vmem:[#allocation4 + $0x78] sm:$0x33] %v871
      %v888 = vld [vmem:[#allocation2] sm:$0xff]
      %v889 = vld [vmem:[#allocation2 + $0x8] sm:$0xf]
      %v890 = vld [vmem:[#allocation2 + $0x10] sm:$0xff]
      %v891 = vld [vmem:[#allocation2 + $0x18] sm:$0xf]
      %v892 = vld [vmem:[#allocation2 + $0x20] sm:$0xff]
      %v893 = vld [vmem:[#allocation2 + $0x28] sm:$0xf]
      %v894 = vld [vmem:[#allocation2 + $0x30] sm:$0xff]
      %v895 = vld [vmem:[#allocation2 + $0x38] sm:$0xf]
      %v896 = vld [vmem:[#allocation2 + $0x40] sm:$0xff]
      %v897 = vld [vmem:[#allocation2 + $0x48] sm:$0xf]
      %v898 = vld [vmem:[#allocation2 + $0x50] sm:$0xff]
      %v899 = vld [vmem:[#allocation2 + $0x58] sm:$0xf]
      %v900 = vld [vmem:[#allocation2 + $0x60] sm:$0xff]
      %v901 = vld [vmem:[#allocation2 + $0x68] sm:$0xf]
      %v902 = vld [vmem:[#allocation2 + $0x70] sm:$0x33]
      %v903 = vld [vmem:[#allocation2 + $0x78] sm:$0x3]
      %v906 = vunpack.c.l.s4 1966171168
      %v907 = vunpack.c.0.s8 %v906
      %v908 = vlaneseq
      %v909 = vshrl.u32 %v908, 7
      %v910 = vsub.s32 %v907, %v909
      %v911 = vrot.slane %v523, %v910
      %v912 = vcombine.high %v911, %v911
      %v914 = vunpack.c.l.s4 1966171168
      %v915 = vunpack.c.0.s8 %v914
      %v916 = vlaneseq
      %v917 = vshrl.u32 %v916, 7
      %v918 = vsub.s32 %v915, %v917
      %v919 = vrot.slane %v911, %v918
      %v921 = vunpack.c.l.s4 1966171168
      %v922 = vunpack.c.0.s8 %v921
      %v923 = vlaneseq
      %v924 = vshrl.u32 %v923, 7
      %v925 = vsub.s32 %v922, %v924
      %v926 = vrot.slane %v912, %v925
      %v928 = vpack.i.b16 %v919, %v919
      %v930 = vlaneseq
      %v931 = vshrl.u32 %v930, 7
      %v932 = vsub.s32 0, %v931
      %v933 = vrot.slane %v928, %v932
      %v935 = vpack.i.b16 %v926, %v926
      %v937 = vlaneseq
      %v938 = vshrl.u32 %v937, 7
      %v939 = vsub.s32 0, %v938
      %v940 = vrot.slane %v935, %v939
      %v943 = vunpack.c.l.b16 %v933
      %v944 = vunpack.c.l.b16 %v940
      %v945 = vpack.c.b16 %v944, %v943
      %946 = vrot.lane.b32.xlu0 %v945, 113
      %v947 = vpop.permute.xlu0 %946
      %v948 = vrot.slane %v947, 4
      %vm949 = vcmask 924672
      %v950 = vsel %vm949, %v948, %v947
      %v953 = vmul.bf16 %v888, %v950
      %v954 = vmul.bf16 %v889, %v948
      %v955 = vmul.bf16 %v890, %v950
      %v956 = vmul.bf16 %v891, %v948
      %v957 = vmul.bf16 %v892, %v950
      %v958 = vmul.bf16 %v893, %v948
      %v959 = vmul.bf16 %v894, %v950
      %v960 = vmul.bf16 %v895, %v948
      %v961 = vmul.bf16 %v896, %v950
      %v962 = vmul.bf16 %v897, %v948
      %v963 = vmul.bf16 %v898, %v950
      %v964 = vmul.bf16 %v899, %v948
      %v965 = vmul.bf16 %v900, %v950
      %v966 = vmul.bf16 %v901, %v948
      %v967 = vmul.bf16 %v902, %v950
      %v968 = vmul.bf16 %v903, %v948
      %985 = vrot.lane.b32.xlu0 %v953, 15
      %v986 = vpop.permute.xlu0 %985
      %987 = vrot.lane.b32.xlu0 %v954, 15
      %v988 = vpop.permute.xlu0 %987
      %989 = vrot.lane.b32.xlu0 %v955, 15
      %v990 = vpop.permute.xlu0 %989
      %991 = vrot.lane.b32.xlu0 %v956, 15
      %v992 = vpop.permute.xlu0 %991
      %993 = vrot.lane.b32.xlu0 %v957, 15
      %v994 = vpop.permute.xlu0 %993
      %995 = vrot.lane.b32.xlu0 %v958, 15
      %v996 = vpop.permute.xlu0 %995
      %997 = vrot.lane.b32.xlu0 %v959, 15
      %v998 = vpop.permute.xlu0 %997
      %999 = vrot.lane.b32.xlu0 %v960, 15
      %v1000 = vpop.permute.xlu0 %999
      %1001 = vrot.lane.b32.xlu0 %v961, 15
      %v1002 = vpop.permute.xlu0 %1001
      %1003 = vrot.lane.b32.xlu0 %v962, 15
      %v1004 = vpop.permute.xlu0 %1003
      %1005 = vrot.lane.b32.xlu0 %v963, 15
      %v1006 = vpop.permute.xlu0 %1005
      %1007 = vrot.lane.b32.xlu0 %v964, 15
      %v1008 = vpop.permute.xlu0 %1007
      %1009 = vrot.lane.b32.xlu0 %v965, 15
      %v1010 = vpop.permute.xlu0 %1009
      %1011 = vrot.lane.b32.xlu0 %v966, 15
      %v1012 = vpop.permute.xlu0 %1011
      %1013 = vrot.lane.b32.xlu0 %v967, 15
      %v1014 = vpop.permute.xlu0 %1013
      %1015 = vrot.lane.b32.xlu0 %v968, 15
      %v1016 = vpop.permute.xlu0 %1015
      %v1017 = vrot.slane %v986, 4
      %v1018 = vrot.slane %v988, 4
      %v1019 = vrot.slane %v990, 4
      %v1020 = vrot.slane %v992, 4
      %v1021 = vrot.slane %v994, 4
      %v1022 = vrot.slane %v996, 4
      %v1023 = vrot.slane %v998, 4
      %v1024 = vrot.slane %v1000, 4
      %v1025 = vrot.slane %v1002, 4
      %v1026 = vrot.slane %v1004, 4
      %v1027 = vrot.slane %v1006, 4
      %v1028 = vrot.slane %v1008, 4
      %v1029 = vrot.slane %v1010, 4
      %v1030 = vrot.slane %v1012, 4
      %v1031 = vrot.slane %v1014, 4
      %v1032 = vrot.slane %v1016, 4
      %v1033 = vsel %vm741, %v1017, %v1018
      %vm1034 = vcmask 121856
      %v1035 = vsel %vm1034, %v986, %v1033
      %v1036 = vsel %vm741, %v1019, %v1020
      %v1037 = vsel %vm1034, %v990, %v1036
      %v1038 = vsel %vm741, %v1021, %v1022
      %v1039 = vsel %vm1034, %v994, %v1038
      %v1040 = vsel %vm741, %v1023, %v1024
      %v1041 = vsel %vm1034, %v998, %v1040
      %v1042 = vsel %vm741, %v1025, %v1026
      %v1043 = vsel %vm1034, %v1002, %v1042
      %v1044 = vsel %vm741, %v1027, %v1028
      %v1045 = vsel %vm1034, %v1006, %v1044
      %v1046 = vsel %vm741, %v1029, %v1030
      %v1047 = vsel %vm1034, %v1010, %v1046
      %v1048 = vsel %vm741, %v1031, %v1032
      %v1049 = vsel %vm1034, %v1014, %v1048
      %1058 = vst [vmem:[#allocation4 + $0x80] sm:$0xff] %v1035
      %1059 = vst [vmem:[#allocation4 + $0x88] sm:$0xff] %v1037
      %1060 = vst [vmem:[#allocation4 + $0x90] sm:$0xff] %v1039
      %1061 = vst [vmem:[#allocation4 + $0x98] sm:$0xff] %v1041
      %1062 = vst [vmem:[#allocation4 + $0xa0] sm:$0xff] %v1043
      %1063 = vst [vmem:[#allocation4 + $0xa8] sm:$0xff] %v1045
      %1064 = vst [vmem:[#allocation4 + $0xb0] sm:$0xff] %v1047
      %1065 = vst [vmem:[#allocation4 + $0xb8] sm:$0x33] %v1049
      %v1066 = vld [vmem:[#allocation2] sm:$0xff]
      %v1067 = vld [vmem:[#allocation2 + $0x8] sm:$0xf]
      %v1068 = vld [vmem:[#allocation2 + $0x10] sm:$0xff]
      %v1069 = vld [vmem:[#allocation2 + $0x18] sm:$0xf]
      %v1070 = vld [vmem:[#allocation2 + $0x20] sm:$0xff]
      %v1071 = vld [vmem:[#allocation2 + $0x28] sm:$0xf]
      %v1072 = vld [vmem:[#allocation2 + $0x30] sm:$0xff]
      %v1073 = vld [vmem:[#allocation2 + $0x38] sm:$0xf]
      %v1074 = vld [vmem:[#allocation2 + $0x40] sm:$0xff]
      %v1075 = vld [vmem:[#allocation2 + $0x48] sm:$0xf]
      %v1076 = vld [vmem:[#allocation2 + $0x50] sm:$0xff]
      %v1077 = vld [vmem:[#allocation2 + $0x58] sm:$0xf]
      %v1078 = vld [vmem:[#allocation2 + $0x60] sm:$0xff]
      %v1079 = vld [vmem:[#allocation2 + $0x68] sm:$0xf]
      %v1080 = vld [vmem:[#allocation2 + $0x70] sm:$0x33]
      %v1081 = vld [vmem:[#allocation2 + $0x78] sm:$0x3]
      %1082 = vrot.lane.b32.xlu0 %v653, 127
      %v1083 = vpop.permute.xlu0 %1082
      %v1084 = vrot.slane %v1083, 4
      %vm1085 = vcmask 1039360
      %v1086 = vsel %vm1085, %v1084, %v1083
      %v1089 = vmul.bf16 %v1066, %v1086
      %v1090 = vmul.bf16 %v1067, %v1084
      %v1091 = vmul.bf16 %v1068, %v1086
      %v1092 = vmul.bf16 %v1069, %v1084
      %v1093 = vmul.bf16 %v1070, %v1086
      %v1094 = vmul.bf16 %v1071, %v1084
      %v1095 = vmul.bf16 %v1072, %v1086
      %v1096 = vmul.bf16 %v1073, %v1084
      %v1097 = vmul.bf16 %v1074, %v1086
      %v1098 = vmul.bf16 %v1075, %v1084
      %v1099 = vmul.bf16 %v1076, %v1086
      %v1100 = vmul.bf16 %v1077, %v1084
      %v1101 = vmul.bf16 %v1078, %v1086
      %v1102 = vmul.bf16 %v1079, %v1084
      %v1103 = vmul.bf16 %v1080, %v1086
      %v1104 = vmul.bf16 %v1081, %v1084
      %1121 = vrot.lane.b32.xlu0 %v1089, 1
      %v1122 = vpop.permute.xlu0 %1121
      %1123 = vrot.lane.b32.xlu0 %v1090, 1
      %v1124 = vpop.permute.xlu0 %1123
      %1125 = vrot.lane.b32.xlu0 %v1091, 1
      %v1126 = vpop.permute.xlu0 %1125
      %1127 = vrot.lane.b32.xlu0 %v1092, 1
      %v1128 = vpop.permute.xlu0 %1127
      %1129 = vrot.lane.b32.xlu0 %v1093, 1
      %v1130 = vpop.permute.xlu0 %1129
      %1131 = vrot.lane.b32.xlu0 %v1094, 1
      %v1132 = vpop.permute.xlu0 %1131
      %1133 = vrot.lane.b32.xlu0 %v1095, 1
      %v1134 = vpop.permute.xlu0 %1133
      %1135 = vrot.lane.b32.xlu0 %v1096, 1
      %v1136 = vpop.permute.xlu0 %1135
      %1137 = vrot.lane.b32.xlu0 %v1097, 1
      %v1138 = vpop.permute.xlu0 %1137
      %1139 = vrot.lane.b32.xlu0 %v1098, 1
      %v1140 = vpop.permute.xlu0 %1139
      %1141 = vrot.lane.b32.xlu0 %v1099, 1
      %v1142 = vpop.permute.xlu0 %1141
      %1143 = vrot.lane.b32.xlu0 %v1100, 1
      %v1144 = vpop.permute.xlu0 %1143
      %1145 = vrot.lane.b32.xlu0 %v1101, 1
      %v1146 = vpop.permute.xlu0 %1145
      %1147 = vrot.lane.b32.xlu0 %v1102, 1
      %v1148 = vpop.permute.xlu0 %1147
      %1149 = vrot.lane.b32.xlu0 %v1103, 1
      %v1150 = vpop.permute.xlu0 %1149
      %1151 = vrot.lane.b32.xlu0 %v1104, 1
      %v1152 = vpop.permute.xlu0 %1151
      %v1153 = vrot.slane %v1122, 4
      %v1154 = vrot.slane %v1124, 4
      %v1155 = vrot.slane %v1126, 4
      %v1156 = vrot.slane %v1128, 4
      %v1157 = vrot.slane %v1130, 4
      %v1158 = vrot.slane %v1132, 4
      %v1159 = vrot.slane %v1134, 4
      %v1160 = vrot.slane %v1136, 4
      %v1161 = vrot.slane %v1138, 4
      %v1162 = vrot.slane %v1140, 4
      %v1163 = vrot.slane %v1142, 4
      %v1164 = vrot.slane %v1144, 4
      %v1165 = vrot.slane %v1146, 4
      %v1166 = vrot.slane %v1148, 4
      %v1167 = vrot.slane %v1150, 4
      %v1168 = vrot.slane %v1152, 4
      %v1169 = vsel %vm741, %v1153, %v1154
      %vm1170 = vcmask 7168
      %v1171 = vsel %vm1170, %v1122, %v1169
      %v1172 = vsel %vm741, %v1155, %v1156
      %v1173 = vsel %vm1170, %v1126, %v1172
      %v1174 = vsel %vm741, %v1157, %v1158
      %v1175 = vsel %vm1170, %v1130, %v1174
      %v1176 = vsel %vm741, %v1159, %v1160
      %v1177 = vsel %vm1170, %v1134, %v1176
      %v1178 = vsel %vm741, %v1161, %v1162
      %v1179 = vsel %vm1170, %v1138, %v1178
      %v1180 = vsel %vm741, %v1163, %v1164
      %v1181 = vsel %vm1170, %v1142, %v1180
      %v1182 = vsel %vm741, %v1165, %v1166
      %v1183 = vsel %vm1170, %v1146, %v1182
      %v1184 = vsel %vm741, %v1167, %v1168
      %v1185 = vsel %vm1170, %v1150, %v1184
      %1194 = vst [vmem:[#allocation4 + $0xc0] sm:$0xff] %v1171
      %1195 = vst [vmem:[#allocation4 + $0xc8] sm:$0xff] %v1173
      %1196 = vst [vmem:[#allocation4 + $0xd0] sm:$0xff] %v1175
      %1197 = vst [vmem:[#allocation4 + $0xd8] sm:$0xff] %v1177
      %1198 = vst [vmem:[#allocation4 + $0xe0] sm:$0xff] %v1179
      %1199 = vst [vmem:[#allocation4 + $0xe8] sm:$0xff] %v1181
      %1200 = vst [vmem:[#allocation4 + $0xf0] sm:$0xff] %v1183
      %1201 = vst [vmem:[#allocation4 + $0xf8] sm:$0x33] %v1185
      %1202 = vst [vmem:[#allocation4 + $0x100] sm:$0xff] %v572
      %1203 = vst [vmem:[#allocation4 + $0x108] sm:$0xff] %v573
      %1204 = vst [vmem:[#allocation4 + $0x110] sm:$0xff] %v574
      %1205 = vst [vmem:[#allocation4 + $0x118] sm:$0xff] %v575
      %1206 = vst [vmem:[#allocation4 + $0x120] sm:$0xff] %v576
      %1207 = vst [vmem:[#allocation4 + $0x128] sm:$0xff] %v577
      %1208 = vst [vmem:[#allocation4 + $0x130] sm:$0xff] %v578
      %1209 = vst [vmem:[#allocation4 + $0x138] sm:$0x33] %v579
      %v1210 = vld [vmem:[#allocation2 + $0x4] sm:$0xff]
      %v1211 = vld [vmem:[#allocation2 + $0xc] sm:$0xf]
      %v1212 = vld [vmem:[#allocation2 + $0x14] sm:$0xff]
      %v1213 = vld [vmem:[#allocation2 + $0x1c] sm:$0xf]
      %v1214 = vld [vmem:[#allocation2 + $0x24] sm:$0xff]
      %v1215 = vld [vmem:[#allocation2 + $0x2c] sm:$0xf]
      %v1216 = vld [vmem:[#allocation2 + $0x34] sm:$0xff]
      %v1217 = vld [vmem:[#allocation2 + $0x3c] sm:$0xf]
      %v1218 = vld [vmem:[#allocation2 + $0x44] sm:$0xff]
      %v1219 = vld [vmem:[#allocation2 + $0x4c] sm:$0xf]
      %v1220 = vld [vmem:[#allocation2 + $0x54] sm:$0xff]
      %v1221 = vld [vmem:[#allocation2 + $0x5c] sm:$0xf]
      %v1222 = vld [vmem:[#allocation2 + $0x64] sm:$0xff]
      %v1223 = vld [vmem:[#allocation2 + $0x6c] sm:$0xf]
      %v1224 = vld [vmem:[#allocation2 + $0x74] sm:$0x33]
      %v1225 = vld [vmem:[#allocation2 + $0x7c] sm:$0x3]
      %1226 = vrot.lane.b32.xlu0 %v945, 1
      %v1227 = vpop.permute.xlu0 %1226
      %v1228 = vrot.slane %v1227, 4
      %v1229 = vsel %vm1170, %v1228, %v1227
      %v1232 = vmul.bf16 %v1210, %v1229
      %v1233 = vmul.bf16 %v1211, %v1228
      %v1234 = vmul.bf16 %v1212, %v1229
      %v1235 = vmul.bf16 %v1213, %v1228
      %v1236 = vmul.bf16 %v1214, %v1229
      %v1237 = vmul.bf16 %v1215, %v1228
      %v1238 = vmul.bf16 %v1216, %v1229
      %v1239 = vmul.bf16 %v1217, %v1228
      %v1240 = vmul.bf16 %v1218, %v1229
      %v1241 = vmul.bf16 %v1219, %v1228
      %v1242 = vmul.bf16 %v1220, %v1229
      %v1243 = vmul.bf16 %v1221, %v1228
      %v1244 = vmul.bf16 %v1222, %v1229
      %v1245 = vmul.bf16 %v1223, %v1228
      %v1246 = vmul.bf16 %v1224, %v1229
      %v1247 = vmul.bf16 %v1225, %v1228
      %1264 = vrot.lane.b32.xlu0 %v1232, 127
      %v1265 = vpop.permute.xlu0 %1264
      %1266 = vrot.lane.b32.xlu0 %v1233, 127
      %v1267 = vpop.permute.xlu0 %1266
      %1268 = vrot.lane.b32.xlu0 %v1234, 127
      %v1269 = vpop.permute.xlu0 %1268
      %1270 = vrot.lane.b32.xlu0 %v1235, 127
      %v1271 = vpop.permute.xlu0 %1270
      %1272 = vrot.lane.b32.xlu0 %v1236, 127
      %v1273 = vpop.permute.xlu0 %1272
      %1274 = vrot.lane.b32.xlu0 %v1237, 127
      %v1275 = vpop.permute.xlu0 %1274
      %1276 = vrot.lane.b32.xlu0 %v1238, 127
      %v1277 = vpop.permute.xlu0 %1276
      %1278 = vrot.lane.b32.xlu0 %v1239, 127
      %v1279 = vpop.permute.xlu0 %1278
      %1280 = vrot.lane.b32.xlu0 %v1240, 127
      %v1281 = vpop.permute.xlu0 %1280
      %1282 = vrot.lane.b32.xlu0 %v1241, 127
      %v1283 = vpop.permute.xlu0 %1282
      %1284 = vrot.lane.b32.xlu0 %v1242, 127
      %v1285 = vpop.permute.xlu0 %1284
      %1286 = vrot.lane.b32.xlu0 %v1243, 127
      %v1287 = vpop.permute.xlu0 %1286
      %1288 = vrot.lane.b32.xlu0 %v1244, 127
      %v1289 = vpop.permute.xlu0 %1288
      %1290 = vrot.lane.b32.xlu0 %v1245, 127
      %v1291 = vpop.permute.xlu0 %1290
      %1292 = vrot.lane.b32.xlu0 %v1246, 127
      %v1293 = vpop.permute.xlu0 %1292
      %1294 = vrot.lane.b32.xlu0 %v1247, 127
      %v1295 = vpop.permute.xlu0 %1294
      %v1296 = vrot.slane %v1265, 4
      %v1297 = vrot.slane %v1267, 4
      %v1298 = vrot.slane %v1269, 4
      %v1299 = vrot.slane %v1271, 4
      %v1300 = vrot.slane %v1273, 4
      %v1301 = vrot.slane %v1275, 4
      %v1302 = vrot.slane %v1277, 4
      %v1303 = vrot.slane %v1279, 4
      %v1304 = vrot.slane %v1281, 4
      %v1305 = vrot.slane %v1283, 4
      %v1306 = vrot.slane %v1285, 4
      %v1307 = vrot.slane %v1287, 4
      %v1308 = vrot.slane %v1289, 4
      %v1309 = vrot.slane %v1291, 4
      %v1310 = vrot.slane %v1293, 4
      %v1311 = vrot.slane %v1295, 4
      %v1312 = vsel %vm741, %v1296, %v1297
      %v1313 = vsel %vm1085, %v1265, %v1312
      %v1314 = vsel %vm741, %v1298, %v1299
      %v1315 = vsel %vm1085, %v1269, %v1314
      %v1316 = vsel %vm741, %v1300, %v1301
      %v1317 = vsel %vm1085, %v1273, %v1316
      %v1318 = vsel %vm741, %v1302, %v1303
      %v1319 = vsel %vm1085, %v1277, %v1318
      %v1320 = vsel %vm741, %v1304, %v1305
      %v1321 = vsel %vm1085, %v1281, %v1320
      %v1322 = vsel %vm741, %v1306, %v1307
      %v1323 = vsel %vm1085, %v1285, %v1322
      %v1324 = vsel %vm741, %v1308, %v1309
      %v1325 = vsel %vm1085, %v1289, %v1324
      %v1326 = vsel %vm741, %v1310, %v1311
      %v1327 = vsel %vm1085, %v1293, %v1326
      %1336 = vst [vmem:[#allocation4 + $0x140] sm:$0xff] %v1313
      %1337 = vst [vmem:[#allocation4 + $0x148] sm:$0xff] %v1315
      %1338 = vst [vmem:[#allocation4 + $0x150] sm:$0xff] %v1317
      %1339 = vst [vmem:[#allocation4 + $0x158] sm:$0xff] %v1319
      %1340 = vst [vmem:[#allocation4 + $0x160] sm:$0xff] %v1321
      %1341 = vst [vmem:[#allocation4 + $0x168] sm:$0xff] %v1323
      %1342 = vst [vmem:[#allocation4 + $0x170] sm:$0xff] %v1325
      %1343 = vst [vmem:[#allocation4 + $0x178] sm:$0x33] %v1327
      %v1344 = vld [vmem:[#allocation2 + $0x4] sm:$0xff]
      %v1345 = vld [vmem:[#allocation2 + $0xc] sm:$0xf]
      %v1346 = vld [vmem:[#allocation2 + $0x14] sm:$0xff]
      %v1347 = vld [vmem:[#allocation2 + $0x1c] sm:$0xf]
      %v1348 = vld [vmem:[#allocation2 + $0x24] sm:$0xff]
      %v1349 = vld [vmem:[#allocation2 + $0x2c] sm:$0xf]
      %v1350 = vld [vmem:[#allocation2 + $0x34] sm:$0xff]
      %v1351 = vld [vmem:[#allocation2 + $0x3c] sm:$0xf]
      %v1352 = vld [vmem:[#allocation2 + $0x44] sm:$0xff]
      %v1353 = vld [vmem:[#allocation2 + $0x4c] sm:$0xf]
      %v1354 = vld [vmem:[#allocation2 + $0x54] sm:$0xff]
      %v1355 = vld [vmem:[#allocation2 + $0x5c] sm:$0xf]
      %v1356 = vld [vmem:[#allocation2 + $0x64] sm:$0xff]
      %v1357 = vld [vmem:[#allocation2 + $0x6c] sm:$0xf]
      %v1358 = vld [vmem:[#allocation2 + $0x74] sm:$0x33]
      %v1359 = vld [vmem:[#allocation2 + $0x7c] sm:$0x3]
      %1360 = vrot.lane.b32.xlu0 %v653, 15
      %v1361 = vpop.permute.xlu0 %1360
      %v1362 = vrot.slane %v1361, 4
      %v1363 = vsel %vm1034, %v1362, %v1361
      %v1366 = vmul.bf16 %v1344, %v1363
      %v1367 = vmul.bf16 %v1345, %v1362
      %v1368 = vmul.bf16 %v1346, %v1363
      %v1369 = vmul.bf16 %v1347, %v1362
      %v1370 = vmul.bf16 %v1348, %v1363
      %v1371 = vmul.bf16 %v1349, %v1362
      %v1372 = vmul.bf16 %v1350, %v1363
      %v1373 = vmul.bf16 %v1351, %v1362
      %v1374 = vmul.bf16 %v1352, %v1363
      %v1375 = vmul.bf16 %v1353, %v1362
      %v1376 = vmul.bf16 %v1354, %v1363
      %v1377 = vmul.bf16 %v1355, %v1362
      %v1378 = vmul.bf16 %v1356, %v1363
      %v1379 = vmul.bf16 %v1357, %v1362
      %v1380 = vmul.bf16 %v1358, %v1363
      %v1381 = vmul.bf16 %v1359, %v1362
      %1398 = vrot.lane.b32.xlu0 %v1366, 113
      %v1399 = vpop.permute.xlu0 %1398
      %1400 = vrot.lane.b32.xlu0 %v1367, 113
      %v1401 = vpop.permute.xlu0 %1400
      %1402 = vrot.lane.b32.xlu0 %v1368, 113
      %v1403 = vpop.permute.xlu0 %1402
      %1404 = vrot.lane.b32.xlu0 %v1369, 113
      %v1405 = vpop.permute.xlu0 %1404
      %1406 = vrot.lane.b32.xlu0 %v1370, 113
      %v1407 = vpop.permute.xlu0 %1406
      %1408 = vrot.lane.b32.xlu0 %v1371, 113
      %v1409 = vpop.permute.xlu0 %1408
      %1410 = vrot.lane.b32.xlu0 %v1372, 113
      %v1411 = vpop.permute.xlu0 %1410
      %1412 = vrot.lane.b32.xlu0 %v1373, 113
      %v1413 = vpop.permute.xlu0 %1412
      %1414 = vrot.lane.b32.xlu0 %v1374, 113
      %v1415 = vpop.permute.xlu0 %1414
      %1416 = vrot.lane.b32.xlu0 %v1375, 113
      %v1417 = vpop.permute.xlu0 %1416
      %1418 = vrot.lane.b32.xlu0 %v1376, 113
      %v1419 = vpop.permute.xlu0 %1418
      %1420 = vrot.lane.b32.xlu0 %v1377, 113
      %v1421 = vpop.permute.xlu0 %1420
      %1422 = vrot.lane.b32.xlu0 %v1378, 113
      %v1423 = vpop.permute.xlu0 %1422
      %1424 = vrot.lane.b32.xlu0 %v1379, 113
      %v1425 = vpop.permute.xlu0 %1424
      %1426 = vrot.lane.b32.xlu0 %v1380, 113
      %v1427 = vpop.permute.xlu0 %1426
      %1428 = vrot.lane.b32.xlu0 %v1381, 113
      %v1429 = vpop.permute.xlu0 %1428
      %v1430 = vrot.slane %v1399, 4
      %v1431 = vrot.slane %v1401, 4
      %v1432 = vrot.slane %v1403, 4
      %v1433 = vrot.slane %v1405, 4
      %v1434 = vrot.slane %v1407, 4
      %v1435 = vrot.slane %v1409, 4
      %v1436 = vrot.slane %v1411, 4
      %v1437 = vrot.slane %v1413, 4
      %v1438 = vrot.slane %v1415, 4
      %v1439 = vrot.slane %v1417, 4
      %v1440 = vrot.slane %v1419, 4
      %v1441 = vrot.slane %v1421, 4
      %v1442 = vrot.slane %v1423, 4
      %v1443 = vrot.slane %v1425, 4
      %v1444 = vrot.slane %v1427, 4
      %v1445 = vrot.slane %v1429, 4
      %v1446 = vsel %vm741, %v1430, %v1431
      %v1447 = vsel %vm949, %v1399, %v1446
      %v1448 = vsel %vm741, %v1432, %v1433
      %v1449 = vsel %vm949, %v1403, %v1448
      %v1450 = vsel %vm741, %v1434, %v1435
      %v1451 = vsel %vm949, %v1407, %v1450
      %v1452 = vsel %vm741, %v1436, %v1437
      %v1453 = vsel %vm949, %v1411, %v1452
      %v1454 = vsel %vm741, %v1438, %v1439
      %v1455 = vsel %vm949, %v1415, %v1454
      %v1456 = vsel %vm741, %v1440, %v1441
      %v1457 = vsel %vm949, %v1419, %v1456
      %v1458 = vsel %vm741, %v1442, %v1443
      %v1459 = vsel %vm949, %v1423, %v1458
      %v1460 = vsel %vm741, %v1444, %v1445
      %v1461 = vsel %vm949, %v1427, %v1460
      %1470 = vst [vmem:[#allocation4 + $0x180] sm:$0xff] %v1447
      %1471 = vst [vmem:[#allocation4 + $0x188] sm:$0xff] %v1449
      %1472 = vst [vmem:[#allocation4 + $0x190] sm:$0xff] %v1451
      %1473 = vst [vmem:[#allocation4 + $0x198] sm:$0xff] %v1453
      %1474 = vst [vmem:[#allocation4 + $0x1a0] sm:$0xff] %v1455
      %1475 = vst [vmem:[#allocation4 + $0x1a8] sm:$0xff] %v1457
      %1476 = vst [vmem:[#allocation4 + $0x1b0] sm:$0xff] %v1459
      %1477 = vst [vmem:[#allocation4 + $0x1b8] sm:$0x33] %v1461
      %v1478 = vld [vmem:[#allocation2 + $0x4] sm:$0xff]
      %v1479 = vld [vmem:[#allocation2 + $0xc] sm:$0xf]
      %v1480 = vld [vmem:[#allocation2 + $0x14] sm:$0xff]
      %v1481 = vld [vmem:[#allocation2 + $0x1c] sm:$0xf]
      %v1482 = vld [vmem:[#allocation2 + $0x24] sm:$0xff]
      %v1483 = vld [vmem:[#allocation2 + $0x2c] sm:$0xf]
      %v1484 = vld [vmem:[#allocation2 + $0x34] sm:$0xff]
      %v1485 = vld [vmem:[#allocation2 + $0x3c] sm:$0xf]
      %v1486 = vld [vmem:[#allocation2 + $0x44] sm:$0xff]
      %v1487 = vld [vmem:[#allocation2 + $0x4c] sm:$0xf]
      %v1488 = vld [vmem:[#allocation2 + $0x54] sm:$0xff]
      %v1489 = vld [vmem:[#allocation2 + $0x5c] sm:$0xf]
      %v1490 = vld [vmem:[#allocation2 + $0x64] sm:$0xff]
      %v1491 = vld [vmem:[#allocation2 + $0x6c] sm:$0xf]
      %v1492 = vld [vmem:[#allocation2 + $0x74] sm:$0x33]
      %v1493 = vld [vmem:[#allocation2 + $0x7c] sm:$0x3]
      %1510 = vrot.lane.b32.xlu0 %v1478, 112
      %v1511 = vpop.permute.xlu0 %1510
      %1512 = vrot.lane.b32.xlu0 %v1479, 112
      %v1513 = vpop.permute.xlu0 %1512
      %1514 = vrot.lane.b32.xlu0 %v1480, 112
      %v1515 = vpop.permute.xlu0 %1514
      %1516 = vrot.lane.b32.xlu0 %v1481, 112
      %v1517 = vpop.permute.xlu0 %1516
      %1518 = vrot.lane.b32.xlu0 %v1482, 112
      %v1519 = vpop.permute.xlu0 %1518
      %1520 = vrot.lane.b32.xlu0 %v1483, 112
      %v1521 = vpop.permute.xlu0 %1520
      %1522 = vrot.lane.b32.xlu0 %v1484, 112
      %v1523 = vpop.permute.xlu0 %1522
      %1524 = vrot.lane.b32.xlu0 %v1485, 112
      %v1525 = vpop.permute.xlu0 %1524
      %1526 = vrot.lane.b32.xlu0 %v1486, 112
      %v1527 = vpop.permute.xlu0 %1526
      %1528 = vrot.lane.b32.xlu0 %v1487, 112
      %v1529 = vpop.permute.xlu0 %1528
      %1530 = vrot.lane.b32.xlu0 %v1488, 112
      %v1531 = vpop.permute.xlu0 %1530
      %1532 = vrot.lane.b32.xlu0 %v1489, 112
      %v1533 = vpop.permute.xlu0 %1532
      %1534 = vrot.lane.b32.xlu0 %v1490, 112
      %v1535 = vpop.permute.xlu0 %1534
      %1536 = vrot.lane.b32.xlu0 %v1491, 112
      %v1537 = vpop.permute.xlu0 %1536
      %1538 = vrot.lane.b32.xlu0 %v1492, 112
      %v1539 = vpop.permute.xlu0 %1538
      %1540 = vrot.lane.b32.xlu0 %v1493, 112
      %v1541 = vpop.permute.xlu0 %1540
      %v1542 = vrot.slane %v1511, 4
      %v1543 = vrot.slane %v1513, 4
      %v1544 = vrot.slane %v1515, 4
      %v1545 = vrot.slane %v1517, 4
      %v1546 = vrot.slane %v1519, 4
      %v1547 = vrot.slane %v1521, 4
      %v1548 = vrot.slane %v1523, 4
      %v1549 = vrot.slane %v1525, 4
      %v1550 = vrot.slane %v1527, 4
      %v1551 = vrot.slane %v1529, 4
      %v1552 = vrot.slane %v1531, 4
      %v1553 = vrot.slane %v1533, 4
      %v1554 = vrot.slane %v1535, 4
      %v1555 = vrot.slane %v1537, 4
      %v1556 = vrot.slane %v1539, 4
      %v1557 = vrot.slane %v1541, 4
      %v1558 = vsel %vm741, %v1542, %v1543
      %vm1559 = vcmask 916480
      %v1560 = vsel %vm1559, %v1511, %v1558
      %v1561 = vsel %vm741, %v1544, %v1545
      %v1562 = vsel %vm1559, %v1515, %v1561
      %v1563 = vsel %vm741, %v1546, %v1547
      %v1564 = vsel %vm1559, %v1519, %v1563
      %v1565 = vsel %vm741, %v1548, %v1549
      %v1566 = vsel %vm1559, %v1523, %v1565
      %v1567 = vsel %vm741, %v1550, %v1551
      %v1568 = vsel %vm1559, %v1527, %v1567
      %v1569 = vsel %vm741, %v1552, %v1553
      %v1570 = vsel %vm1559, %v1531, %v1569
      %v1571 = vsel %vm741, %v1554, %v1555
      %v1572 = vsel %vm1559, %v1535, %v1571
      %v1573 = vsel %vm741, %v1556, %v1557
      %v1574 = vsel %vm1559, %v1539, %v1573
      %1583 = vst [vmem:[#allocation4 + $0x1c0] sm:$0xff] %v1560
      %1584 = vst [vmem:[#allocation4 + $0x1c8] sm:$0xff] %v1562
      %1585 = vst [vmem:[#allocation4 + $0x1d0] sm:$0xff] %v1564
      %1586 = vst [vmem:[#allocation4 + $0x1d8] sm:$0xff] %v1566
      %1587 = vst [vmem:[#allocation4 + $0x1e0] sm:$0xff] %v1568
      %1588 = vst [vmem:[#allocation4 + $0x1e8] sm:$0xff] %v1570
      %1589 = vst [vmem:[#allocation4 + $0x1f0] sm:$0xff] %v1572
      %1590 = vst [vmem:[#allocation4 + $0x1f8] sm:$0x33] %v1574
      %v1591 = vld [vmem:[#allocation2 + $0x4] sm:$0xff]
      %v1592 = vld [vmem:[#allocation2 + $0xc] sm:$0xf]
      %v1593 = vld [vmem:[#allocation2 + $0x14] sm:$0xff]
      %v1594 = vld [vmem:[#allocation2 + $0x1c] sm:$0xf]
      %v1595 = vld [vmem:[#allocation2 + $0x24] sm:$0xff]
      %v1596 = vld [vmem:[#allocation2 + $0x2c] sm:$0xf]
      %v1597 = vld [vmem:[#allocation2 + $0x34] sm:$0xff]
      %v1598 = vld [vmem:[#allocation2 + $0x3c] sm:$0xf]
      %v1599 = vld [vmem:[#allocation2 + $0x44] sm:$0xff]
      %v1600 = vld [vmem:[#allocation2 + $0x4c] sm:$0xf]
      %v1601 = vld [vmem:[#allocation2 + $0x54] sm:$0xff]
      %v1602 = vld [vmem:[#allocation2 + $0x5c] sm:$0xf]
      %v1603 = vld [vmem:[#allocation2 + $0x64] sm:$0xff]
      %v1604 = vld [vmem:[#allocation2 + $0x6c] sm:$0xf]
      %v1605 = vld [vmem:[#allocation2 + $0x74] sm:$0x33]
      %v1606 = vld [vmem:[#allocation2 + $0x7c] sm:$0x3]
      %1607 = vrot.lane.b32.xlu0 %v945, 17
      %v1608 = vpop.permute.xlu0 %1607
      %v1609 = vrot.slane %v1608, 4
      %v1610 = vsel %vm743, %v1609, %v1608
      %v1613 = vmul.bf16 %v1591, %v1610
      %v1614 = vmul.bf16 %v1592, %v1609
      %v1615 = vmul.bf16 %v1593, %v1610
      %v1616 = vmul.bf16 %v1594, %v1609
      %v1617 = vmul.bf16 %v1595, %v1610
      %v1618 = vmul.bf16 %v1596, %v1609
      %v1619 = vmul.bf16 %v1597, %v1610
      %v1620 = vmul.bf16 %v1598, %v1609
      %v1621 = vmul.bf16 %v1599, %v1610
      %v1622 = vmul.bf16 %v1600, %v1609
      %v1623 = vmul.bf16 %v1601, %v1610
      %v1624 = vmul.bf16 %v1602, %v1609
      %v1625 = vmul.bf16 %v1603, %v1610
      %v1626 = vmul.bf16 %v1604, %v1609
      %v1627 = vmul.bf16 %v1605, %v1610
      %v1628 = vmul.bf16 %v1606, %v1609
      %1645 = vrot.lane.b32.xlu0 %v1613, 111
      %v1646 = vpop.permute.xlu0 %1645
      %1647 = vrot.lane.b32.xlu0 %v1614, 111
      %v1648 = vpop.permute.xlu0 %1647
      %1649 = vrot.lane.b32.xlu0 %v1615, 111
      %v1650 = vpop.permute.xlu0 %1649
      %1651 = vrot.lane.b32.xlu0 %v1616, 111
      %v1652 = vpop.permute.xlu0 %1651
      %1653 = vrot.lane.b32.xlu0 %v1617, 111
      %v1654 = vpop.permute.xlu0 %1653
      %1655 = vrot.lane.b32.xlu0 %v1618, 111
      %v1656 = vpop.permute.xlu0 %1655
      %1657 = vrot.lane.b32.xlu0 %v1619, 111
      %v1658 = vpop.permute.xlu0 %1657
      %1659 = vrot.lane.b32.xlu0 %v1620, 111
      %v1660 = vpop.permute.xlu0 %1659
      %1661 = vrot.lane.b32.xlu0 %v1621, 111
      %v1662 = vpop.permute.xlu0 %1661
      %1663 = vrot.lane.b32.xlu0 %v1622, 111
      %v1664 = vpop.permute.xlu0 %1663
      %1665 = vrot.lane.b32.xlu0 %v1623, 111
      %v1666 = vpop.permute.xlu0 %1665
      %1667 = vrot.lane.b32.xlu0 %v1624, 111
      %v1668 = vpop.permute.xlu0 %1667
      %1669 = vrot.lane.b32.xlu0 %v1625, 111
      %v1670 = vpop.permute.xlu0 %1669
      %1671 = vrot.lane.b32.xlu0 %v1626, 111
      %v1672 = vpop.permute.xlu0 %1671
      %1673 = vrot.lane.b32.xlu0 %v1627, 111
      %v1674 = vpop.permute.xlu0 %1673
      %1675 = vrot.lane.b32.xlu0 %v1628, 111
      %v1676 = vpop.permute.xlu0 %1675
      %v1677 = vrot.slane %v1646, 4
      %v1678 = vrot.slane %v1648, 4
      %v1679 = vrot.slane %v1650, 4
      %v1680 = vrot.slane %v1652, 4
      %v1681 = vrot.slane %v1654, 4
      %v1682 = vrot.slane %v1656, 4
      %v1683 = vrot.slane %v1658, 4
      %v1684 = vrot.slane %v1660, 4
      %v1685 = vrot.slane %v1662, 4
      %v1686 = vrot.slane %v1664, 4
      %v1687 = vrot.slane %v1666, 4
      %v1688 = vrot.slane %v1668, 4
      %v1689 = vrot.slane %v1670, 4
      %v1690 = vrot.slane %v1672, 4
      %v1691 = vrot.slane %v1674, 4
      %v1692 = vrot.slane %v1676, 4
      %v1693 = vsel %vm741, %v1677, %v1678
      %v1694 = vsel %vm657, %v1646, %v1693
      %v1695 = vsel %vm741, %v1679, %v1680
      %v1696 = vsel %vm657, %v1650, %v1695
      %v1697 = vsel %vm741, %v1681, %v1682
      %v1698 = vsel %vm657, %v1654, %v1697
      %v1699 = vsel %vm741, %v1683, %v1684
      %v1700 = vsel %vm657, %v1658, %v1699
      %v1701 = vsel %vm741, %v1685, %v1686
      %v1702 = vsel %vm657, %v1662, %v1701
      %v1703 = vsel %vm741, %v1687, %v1688
      %v1704 = vsel %vm657, %v1666, %v1703
      %v1705 = vsel %vm741, %v1689, %v1690
      %v1706 = vsel %vm657, %v1670, %v1705
      %v1707 = vsel %vm741, %v1691, %v1692
      %v1708 = vsel %vm657, %v1674, %v1707
      %1717 = vst [vmem:[#allocation4 + $0x200] sm:$0xff] %v1694
      %1718 = vst [vmem:[#allocation4 + $0x208] sm:$0xff] %v1696
      %1719 = vst [vmem:[#allocation4 + $0x210] sm:$0xff] %v1698
      %1720 = vst [vmem:[#allocation4 + $0x218] sm:$0xff] %v1700
      %1721 = vst [vmem:[#allocation4 + $0x220] sm:$0xff] %v1702
      %1722 = vst [vmem:[#allocation4 + $0x228] sm:$0xff] %v1704
      %1723 = vst [vmem:[#allocation4 + $0x230] sm:$0xff] %v1706
      %1724 = vst [vmem:[#allocation4 + $0x238] sm:$0x33] %v1708
      %v1725 = vld [vmem:[%s1] sm:$0xff]
      %v1726 = vld [vmem:[%s1 + $0x8] sm:$0xff]
      %v1727 = vld [vmem:[%s1 + $0x10] sm:$0xf]
      %v1728 = vld [vmem:[%s1 + $0x14] sm:$0xff]
      %v1729 = vld [vmem:[%s1 + $0x1c] sm:$0xff]
      %v1730 = vld [vmem:[%s1 + $0x24] sm:$0xf]
      %v1731 = vld [vmem:[%s1 + $0x28] sm:$0x33]
      %v1732 = vld [vmem:[%s1 + $0x30] sm:$0x33]
      %v1733 = vld [vmem:[%s1 + $0x38] sm:$0x3]
      %v1734 = vld [vmem:[#allocation4] sm:$0xff]
      %v1735 = vld [vmem:[#allocation4 + $0x8] sm:$0xff]
      %v1736 = vld [vmem:[#allocation4 + $0x10] sm:$0xff]
      %v1737 = vld [vmem:[#allocation4 + $0x18] sm:$0xff]
      %v1738 = vld [vmem:[#allocation4 + $0x20] sm:$0xff]
      %v1739 = vld [vmem:[#allocation4 + $0x28] sm:$0xff]
      %v1740 = vld [vmem:[#allocation4 + $0x30] sm:$0xff]
      %v1741 = vld [vmem:[#allocation4 + $0x38] sm:$0xff]
      %v1742 = vld [vmem:[#allocation4 + $0x40] sm:$0xff]
      %v1743 = vld [vmem:[#allocation4 + $0x48] sm:$0xff]
      %v1744 = vld [vmem:[#allocation4 + $0x50] sm:$0xff]
      %v1745 = vld [vmem:[#allocation4 + $0x58] sm:$0xff]
      %v1746 = vld [vmem:[#allocation4 + $0x60] sm:$0xff]
      %v1747 = vld [vmem:[#allocation4 + $0x68] sm:$0xff]
      %v1748 = vld [vmem:[#allocation4 + $0x70] sm:$0xff]
      %v1749 = vld [vmem:[#allocation4 + $0x78] sm:$0xff]
      %v1750 = vld [vmem:[#allocation4 + $0x80] sm:$0xff]
      %v1751 = vld [vmem:[#allocation4 + $0x88] sm:$0xff]
      %v1752 = vld [vmem:[#allocation4 + $0x90] sm:$0xff]
      %v1753 = vld [vmem:[#allocation4 + $0x98] sm:$0xff]
      %v1754 = vld [vmem:[#allocation4 + $0xa0] sm:$0xff]
      %v1755 = vld [vmem:[#allocation4 + $0xa8] sm:$0xff]
      %v1756 = vld [vmem:[#allocation4 + $0xb0] sm:$0xff]
      %v1757 = vld [vmem:[#allocation4 + $0xb8] sm:$0xff]
      %v1758 = vld [vmem:[#allocation4 + $0xc0] sm:$0xff]
      %v1759 = vld [vmem:[#allocation4 + $0xc8] sm:$0xff]
      %v1760 = vld [vmem:[#allocation4 + $0xd0] sm:$0xff]
      %v1761 = vld [vmem:[#allocation4 + $0xd8] sm:$0xff]
      %v1762 = vld [vmem:[#allocation4 + $0xe0] sm:$0xff]
      %v1763 = vld [vmem:[#allocation4 + $0xe8] sm:$0xff]
      %v1764 = vld [vmem:[#allocation4 + $0xf0] sm:$0xff]
      %v1765 = vld [vmem:[#allocation4 + $0xf8] sm:$0xff]
      %v1766 = vld [vmem:[#allocation4 + $0x100] sm:$0xff]
      %v1767 = vld [vmem:[#allocation4 + $0x108] sm:$0xff]
      %v1768 = vld [vmem:[#allocation4 + $0x110] sm:$0xff]
      %v1769 = vld [vmem:[#allocation4 + $0x118] sm:$0xff]
      %v1770 = vld [vmem:[#allocation4 + $0x120] sm:$0xff]
      %v1771 = vld [vmem:[#allocation4 + $0x128] sm:$0xff]
      %v1772 = vld [vmem:[#allocation4 + $0x130] sm:$0xff]
      %v1773 = vld [vmem:[#allocation4 + $0x138] sm:$0xff]
      %v1774 = vld [vmem:[#allocation4 + $0x140] sm:$0xff]
      %v1775 = vld [vmem:[#allocation4 + $0x148] sm:$0xff]
      %v1776 = vld [vmem:[#allocation4 + $0x150] sm:$0xff]
      %v1777 = vld [vmem:[#allocation4 + $0x158] sm:$0xff]
      %v1778 = vld [vmem:[#allocation4 + $0x160] sm:$0xff]
      %v1779 = vld [vmem:[#allocation4 + $0x168] sm:$0xff]
      %v1780 = vld [vmem:[#allocation4 + $0x170] sm:$0xff]
      %v1781 = vld [vmem:[#allocation4 + $0x178] sm:$0xff]
      %v1782 = vld [vmem:[#allocation4 + $0x180] sm:$0xff]
      %v1783 = vld [vmem:[#allocation4 + $0x188] sm:$0xff]
      %v1784 = vld [vmem:[#allocation4 + $0x190] sm:$0xff]
      %v1785 = vld [vmem:[#allocation4 + $0x198] sm:$0xff]
      %v1786 = vld [vmem:[#allocation4 + $0x1a0] sm:$0xff]
      %v1787 = vld [vmem:[#allocation4 + $0x1a8] sm:$0xff]
      %v1788 = vld [vmem:[#allocation4 + $0x1b0] sm:$0xff]
      %v1789 = vld [vmem:[#allocation4 + $0x1b8] sm:$0xff]
      %v1790 = vld [vmem:[#allocation4 + $0x1c0] sm:$0xff]
      %v1791 = vld [vmem:[#allocation4 + $0x1c8] sm:$0xff]
      %v1792 = vld [vmem:[#allocation4 + $0x1d0] sm:$0xff]
      %v1793 = vld [vmem:[#allocation4 + $0x1d8] sm:$0xff]
      %v1794 = vld [vmem:[#allocation4 + $0x1e0] sm:$0xff]
      %v1795 = vld [vmem:[#allocation4 + $0x1e8] sm:$0xff]
      %v1796 = vld [vmem:[#allocation4 + $0x1f0] sm:$0xff]
      %v1797 = vld [vmem:[#allocation4 + $0x1f8] sm:$0xff]
      %v1798 = vld [vmem:[#allocation4 + $0x200] sm:$0xff]
      %v1799 = vld [vmem:[#allocation4 + $0x208] sm:$0xff]
      %v1800 = vld [vmem:[#allocation4 + $0x210] sm:$0xff]
      %v1801 = vld [vmem:[#allocation4 + $0x218] sm:$0xff]
      %v1802 = vld [vmem:[#allocation4 + $0x220] sm:$0xff]
      %v1803 = vld [vmem:[#allocation4 + $0x228] sm:$0xff]
      %v1804 = vld [vmem:[#allocation4 + $0x230] sm:$0xff]
      %v1805 = vld [vmem:[#allocation4 + $0x238] sm:$0xff]
      %v1806 = vld [vmem:[%s2] sm:$0xff]
      %v1807 = vld [vmem:[%s2 + $0x8] sm:$0xff]
      %v1808 = vld [vmem:[%s2 + $0x10] sm:$0xf]
      %1810 = vset.pattern.permute.xlu0 0
      %1811 = vperm.xlu0 %1810, %v1806
      %v1812 = vpop.permute.xlu0 %1811
      %1815 = vset.pattern.permute.xlu0 0
      %1816 = vperm.xlu0 %1815, %v1807
      %v1817 = vpop.permute.xlu0 %1816
      %1820 = vset.pattern.permute.xlu0 0
      %1821 = vperm.xlu0 %1820, %v1808
      %v1822 = vpop.permute.xlu0 %1821
      %v1833 = vunpack.c.l.b16 %v1725
      %v1834 = vunpack.c.h.b16 %v1725
      %v1835 = vunpack.c.l.b16 %v1726
      %v1836 = vunpack.c.h.b16 %v1726
      %v1837 = vunpack.c.l.b16 %v1727
      %v1838 = vunpack.c.l.b16 %v1728
      %v1839 = vunpack.c.h.b16 %v1728
      %v1840 = vunpack.c.l.b16 %v1729
      %v1841 = vunpack.c.h.b16 %v1729
      %v1842 = vunpack.c.l.b16 %v1730
      %v1843 = vunpack.c.l.b16 %v1731
      %v1844 = vunpack.c.h.b16 %v1731
      %v1845 = vunpack.c.l.b16 %v1732
      %v1846 = vunpack.c.h.b16 %v1732
      %v1847 = vunpack.c.l.b16 %v1733
      %v1848 = vpack.c.b16 %v1838, %v1833
      %v1849 = vpack.c.b16 %v1839, %v1834
      %v1850 = vpack.c.b16 %v1840, %v1835
      %v1851 = vpack.c.b16 %v1841, %v1836
      %v1852 = vpack.c.b16 %v1842, %v1837
      %v1853 = vpack.c.b16 %v1843, %v1843
      %v1854 = vpack.c.b16 %v1844, %v1844
      %v1855 = vpack.c.b16 %v1845, %v1845
      %v1856 = vpack.c.b16 %v1846, %v1846
      %v1857 = vpack.c.b16 %v1847, %v1847
      %v1938 = vunpack.c.l.b16 %v1734
      %v1939 = vunpack.c.h.b16 %v1734
      %v1940 = vunpack.c.l.b16 %v1735
      %v1941 = vunpack.c.h.b16 %v1735
      %v1942 = vunpack.c.l.b16 %v1736
      %v1943 = vunpack.c.h.b16 %v1736
      %v1944 = vunpack.c.l.b16 %v1737
      %v1945 = vunpack.c.h.b16 %v1737
      %v1946 = vunpack.c.l.b16 %v1738
      %v1947 = vunpack.c.h.b16 %v1738
      %v1948 = vunpack.c.l.b16 %v1739
      %v1949 = vunpack.c.h.b16 %v1739
      %v1950 = vunpack.c.l.b16 %v1740
      %v1951 = vunpack.c.h.b16 %v1740
      %v1952 = vunpack.c.l.b16 %v1741
      %v1953 = vunpack.c.h.b16 %v1741
      %v1954 = vunpack.c.l.b16 %v1742
      %v1955 = vunpack.c.h.b16 %v1742
      %v1956 = vunpack.c.l.b16 %v1743
      %v1957 = vunpack.c.h.b16 %v1743
      %v1958 = vunpack.c.l.b16 %v1744
      %v1959 = vunpack.c.h.b16 %v1744
      %v1960 = vunpack.c.l.b16 %v1745
      %v1961 = vunpack.c.h.b16 %v1745
      %v1962 = vunpack.c.l.b16 %v1746
      %v1963 = vunpack.c.h.b16 %v1746
      %v1964 = vunpack.c.l.b16 %v1747
      %v1965 = vunpack.c.h.b16 %v1747
      %v1966 = vunpack.c.l.b16 %v1748
      %v1967 = vunpack.c.h.b16 %v1748
      %v1968 = vunpack.c.l.b16 %v1749
      %v1969 = vunpack.c.h.b16 %v1749
      %v1970 = vunpack.c.l.b16 %v1750
      %v1971 = vunpack.c.h.b16 %v1750
      %v1972 = vunpack.c.l.b16 %v1751
      %v1973 = vunpack.c.h.b16 %v1751
      %v1974 = vunpack.c.l.b16 %v1752
      %v1975 = vunpack.c.h.b16 %v1752
      %v1976 = vunpack.c.l.b16 %v1753
      %v1977 = vunpack.c.h.b16 %v1753
      %v1978 = vunpack.c.l.b16 %v1754
      %v1979 = vunpack.c.h.b16 %v1754
      %v1980 = vunpack.c.l.b16 %v1755
      %v1981 = vunpack.c.h.b16 %v1755
      %v1982 = vunpack.c.l.b16 %v1756
      %v1983 = vunpack.c.h.b16 %v1756
      %v1984 = vunpack.c.l.b16 %v1757
      %v1985 = vunpack.c.h.b16 %v1757
      %v1986 = vunpack.c.l.b16 %v1758
      %v1987 = vunpack.c.h.b16 %v1758
      %v1988 = vunpack.c.l.b16 %v1759
      %v1989 = vunpack.c.h.b16 %v1759
      %v1990 = vunpack.c.l.b16 %v1760
      %v1991 = vunpack.c.h.b16 %v1760
      %v1992 = vunpack.c.l.b16 %v1761
      %v1993 = vunpack.c.h.b16 %v1761
      %v1994 = vunpack.c.l.b16 %v1762
      %v1995 = vunpack.c.h.b16 %v1762
      %v1996 = vunpack.c.l.b16 %v1763
      %v1997 = vunpack.c.h.b16 %v1763
      %v1998 = vunpack.c.l.b16 %v1764
      %v1999 = vunpack.c.h.b16 %v1764
      %v2000 = vunpack.c.l.b16 %v1765
      %v2001 = vunpack.c.h.b16 %v1765
      %v2002 = vunpack.c.l.b16 %v1766
      %v2003 = vunpack.c.h.b16 %v1766
      %v2004 = vunpack.c.l.b16 %v1767
      %v2005 = vunpack.c.h.b16 %v1767
      %v2006 = vunpack.c.l.b16 %v1768
      %v2007 = vunpack.c.h.b16 %v1768
      %v2008 = vunpack.c.l.b16 %v1769
      %v2009 = vunpack.c.h.b16 %v1769
      %v2010 = vunpack.c.l.b16 %v1770
      %v2011 = vunpack.c.h.b16 %v1770
      %v2012 = vunpack.c.l.b16 %v1771
      %v2013 = vunpack.c.h.b16 %v1771
      %v2014 = vunpack.c.l.b16 %v1772
      %v2015 = vunpack.c.h.b16 %v1772
      %v2016 = vunpack.c.l.b16 %v1773
      %v2017 = vunpack.c.h.b16 %v1773
      %v2018 = vunpack.c.l.b16 %v1774
      %v2019 = vunpack.c.h.b16 %v1774
      %v2020 = vunpack.c.l.b16 %v1775
      %v2021 = vunpack.c.h.b16 %v1775
      %v2022 = vunpack.c.l.b16 %v1776
      %v2023 = vunpack.c.h.b16 %v1776
      %v2024 = vunpack.c.l.b16 %v1777
      %v2025 = vunpack.c.h.b16 %v1777
      %v2026 = vunpack.c.l.b16 %v1778
      %v2027 = vunpack.c.h.b16 %v1778
      %v2028 = vunpack.c.l.b16 %v1779
      %v2029 = vunpack.c.h.b16 %v1779
      %v2030 = vunpack.c.l.b16 %v1780
      %v2031 = vunpack.c.h.b16 %v1780
      %v2032 = vunpack.c.l.b16 %v1781
      %v2033 = vunpack.c.h.b16 %v1781
      %v2034 = vunpack.c.l.b16 %v1782
      %v2035 = vunpack.c.h.b16 %v1782
      %v2036 = vunpack.c.l.b16 %v1783
      %v2037 = vunpack.c.h.b16 %v1783
      %v2038 = vunpack.c.l.b16 %v1784
      %v2039 = vunpack.c.h.b16 %v1784
      %v2040 = vunpack.c.l.b16 %v1785
      %v2041 = vunpack.c.h.b16 %v1785
      %v2042 = vunpack.c.l.b16 %v1786
      %v2043 = vunpack.c.h.b16 %v1786
      %v2044 = vunpack.c.l.b16 %v1787
      %v2045 = vunpack.c.h.b16 %v1787
      %v2046 = vunpack.c.l.b16 %v1788
      %v2047 = vunpack.c.h.b16 %v1788
      %v2048 = vunpack.c.l.b16 %v1789
      %v2049 = vunpack.c.h.b16 %v1789
      %v2050 = vunpack.c.l.b16 %v1790
      %v2051 = vunpack.c.h.b16 %v1790
      %v2052 = vunpack.c.l.b16 %v1791
      %v2053 = vunpack.c.h.b16 %v1791
      %v2054 = vunpack.c.l.b16 %v1792
      %v2055 = vunpack.c.h.b16 %v1792
      %v2056 = vunpack.c.l.b16 %v1793
      %v2057 = vunpack.c.h.b16 %v1793
      %v2058 = vunpack.c.l.b16 %v1794
      %v2059 = vunpack.c.h.b16 %v1794
      %v2060 = vunpack.c.l.b16 %v1795
      %v2061 = vunpack.c.h.b16 %v1795
      %v2062 = vunpack.c.l.b16 %v1796
      %v2063 = vunpack.c.h.b16 %v1796
      %v2064 = vunpack.c.l.b16 %v1797
      %v2065 = vunpack.c.h.b16 %v1797
      %v2066 = vunpack.c.l.b16 %v1798
      %v2067 = vunpack.c.h.b16 %v1798
      %v2068 = vunpack.c.l.b16 %v1799
      %v2069 = vunpack.c.h.b16 %v1799
      %v2070 = vunpack.c.l.b16 %v1800
      %v2071 = vunpack.c.h.b16 %v1800
      %v2072 = vunpack.c.l.b16 %v1801
      %v2073 = vunpack.c.h.b16 %v1801
      %v2074 = vunpack.c.l.b16 %v1802
      %v2075 = vunpack.c.h.b16 %v1802
      %v2076 = vunpack.c.l.b16 %v1803
      %v2077 = vunpack.c.h.b16 %v1803
      %v2078 = vunpack.c.l.b16 %v1804
      %v2079 = vunpack.c.h.b16 %v1804
      %v2080 = vunpack.c.l.b16 %v1805
      %v2081 = vunpack.c.h.b16 %v1805
      %v2082 = vpack.c.b16 %v1940, %v1938
      %v2083 = vpack.c.b16 %v1941, %v1939
      %v2084 = vpack.c.b16 %v1944, %v1942
      %v2085 = vpack.c.b16 %v1945, %v1943
      %v2086 = vpack.c.b16 %v1948, %v1946
      %v2087 = vpack.c.b16 %v1949, %v1947
      %v2088 = vpack.c.b16 %v1952, %v1950
      %v2089 = vpack.c.b16 %v1953, %v1951
      %v2090 = vpack.c.b16 %v1956, %v1954
      %v2091 = vpack.c.b16 %v1957, %v1955
      %v2092 = vpack.c.b16 %v1960, %v1958
      %v2093 = vpack.c.b16 %v1961, %v1959
      %v2094 = vpack.c.b16 %v1964, %v1962
      %v2095 = vpack.c.b16 %v1965, %v1963
      %v2096 = vpack.c.b16 %v1968, %v1966
      %v2097 = vpack.c.b16 %v1969, %v1967
      %v2098 = vpack.c.b16 %v1972, %v1970
      %v2099 = vpack.c.b16 %v1973, %v1971
      %v2100 = vpack.c.b16 %v1976, %v1974
      %v2101 = vpack.c.b16 %v1977, %v1975
      %v2102 = vpack.c.b16 %v1980, %v1978
      %v2103 = vpack.c.b16 %v1981, %v1979
      %v2104 = vpack.c.b16 %v1984, %v1982
      %v2105 = vpack.c.b16 %v1985, %v1983
      %v2106 = vpack.c.b16 %v1988, %v1986
      %v2107 = vpack.c.b16 %v1989, %v1987
      %v2108 = vpack.c.b16 %v1992, %v1990
      %v2109 = vpack.c.b16 %v1993, %v1991
      %v2110 = vpack.c.b16 %v1996, %v1994
      %v2111 = vpack.c.b16 %v1997, %v1995
      %v2112 = vpack.c.b16 %v2000, %v1998
      %v2113 = vpack.c.b16 %v2001, %v1999
      %v2114 = vpack.c.b16 %v2004, %v2002
      %v2115 = vpack.c.b16 %v2005, %v2003
      %v2116 = vpack.c.b16 %v2008, %v2006
      %v2117 = vpack.c.b16 %v2009, %v2007
      %v2118 = vpack.c.b16 %v2012, %v2010
      %v2119 = vpack.c.b16 %v2013, %v2011
      %v2120 = vpack.c.b16 %v2016, %v2014
      %v2121 = vpack.c.b16 %v2017, %v2015
      %v2122 = vpack.c.b16 %v2020, %v2018
      %v2123 = vpack.c.b16 %v2021, %v2019
      %v2124 = vpack.c.b16 %v2024, %v2022
      %v2125 = vpack.c.b16 %v2025, %v2023
      %v2126 = vpack.c.b16 %v2028, %v2026
      %v2127 = vpack.c.b16 %v2029, %v2027
      %v2128 = vpack.c.b16 %v2032, %v2030
      %v2129 = vpack.c.b16 %v2033, %v2031
      %v2130 = vpack.c.b16 %v2036, %v2034
      %v2131 = vpack.c.b16 %v2037, %v2035
      %v2132 = vpack.c.b16 %v2040, %v2038
      %v2133 = vpack.c.b16 %v2041, %v2039
      %v2134 = vpack.c.b16 %v2044, %v2042
      %v2135 = vpack.c.b16 %v2045, %v2043
      %v2136 = vpack.c.b16 %v2048, %v2046
      %v2137 = vpack.c.b16 %v2049, %v2047
      %v2138 = vpack.c.b16 %v2052, %v2050
      %v2139 = vpack.c.b16 %v2053, %v2051
      %v2140 = vpack.c.b16 %v2056, %v2054
      %v2141 = vpack.c.b16 %v2057, %v2055
      %v2142 = vpack.c.b16 %v2060, %v2058
      %v2143 = vpack.c.b16 %v2061, %v2059
      %v2144 = vpack.c.b16 %v2064, %v2062
      %v2145 = vpack.c.b16 %v2065, %v2063
      %v2146 = vpack.c.b16 %v2068, %v2066
      %v2147 = vpack.c.b16 %v2069, %v2067
      %v2148 = vpack.c.b16 %v2072, %v2070
      %v2149 = vpack.c.b16 %v2073, %v2071
      %v2150 = vpack.c.b16 %v2076, %v2074
      %v2151 = vpack.c.b16 %v2077, %v2075
      %v2152 = vpack.c.b16 %v2080, %v2078
      %v2153 = vpack.c.b16 %v2081, %v2079
      %vm2226 = vcmask 523264
      %v2228 = vsel %vm2226, %v1852, 0
      %v2231 = vsel %vm2226, %v1857, 0
      %2233 = vmatprep.subr.bf16.mxu0 %v2097
      %2234 = vmatpush1.bf16.msra.mxu0 %v2096
      %2235 = vmatprep.subr.bf16.mxu0 %v2095
      %2236 = vmatpush1.bf16.msra.mxu0 %v2094
      %2237 = vmatprep.subr.bf16.mxu0 %v2093
      %2238 = vmatpush1.bf16.msra.mxu0 %v2092
      %2239 = vmatprep.subr.bf16.mxu0 %v2091
      %2240 = vmatpush1.bf16.msra.mxu0 %v2090
      %2241 = vmatprep.subr.bf16.mxu0 %v2089
      %2242 = vmatpush1.bf16.msra.mxu0 %v2088
      %2243 = vmatprep.subr.bf16.mxu0 %v2087
      %2244 = vmatpush1.bf16.msra.mxu0 %v2086
      %2245 = vmatprep.subr.bf16.mxu0 %v2085
      %2246 = vmatpush1.bf16.msra.mxu0 %v2084
      %2247 = vmatprep.subr.bf16.mxu0 %v2083
      %2248 = vmatpush1.bf16.msra.mxu0 %v2082
      %2249 = vmatprep.subr.bf16.mxu0 %v2113
      %2250 = vmatpush2.bf16.msra.mxu0 %v2112
      %2251 = vmatprep.subr.bf16.mxu0 %v2111
      %2252 = vmatpush2.bf16.msra.mxu0 %v2110
      %2253 = vmatprep.subr.bf16.mxu0 %v2109
      %2254 = vmatpush2.bf16.msra.mxu0 %v2108
      %2255 = vmatprep.subr.bf16.mxu0 %v2107
      %2256 = vmatpush2.bf16.msra.mxu0 %v2106
      %2257 = vmatprep.subr.bf16.mxu0 %v2105
      %2258 = vmatpush2.bf16.msra.mxu0 %v2104
      %2259 = vmatprep.subr.bf16.mxu0 %v2103
      %2260 = vmatpush2.bf16.msra.mxu0 %v2102
      %2261 = vmatprep.subr.bf16.mxu0 %v2101
      %2262 = vmatpush2.bf16.msra.mxu0 %v2100
      %2263 = vmatprep.subr.bf16.mxu0 %v2099
      %2264 = vmatpush2.bf16.msra.mxu0 %v2098
      %2265 = vmatprep.mubr.bf16.mxu0 %v1849
      %2266 = vmatmul.mubr.bf16.gmra.mxu0 %v1848
      %v2267 = vpop.f32.mrf.mxu0
      %v2268 = vadd.f32 %v1812, %v2267
      %v2269 = vpop.f32.mrf.mxu0
      %v2270 = vadd.f32 %v1812, %v2269
      %v2271 = vpop.f32.mrf.mxu0
      %v2272 = vadd.f32 %v1817, %v2271
      %v2273 = vpop.f32.mrf.mxu0
      %v2274 = vadd.f32 %v1817, %v2273
      %2275 = vmatprep.mubr.bf16.mxu0 %v1854
      %2276 = vmatmul.mubr.bf16.gmra.mxu0 %v1853
      %v2277 = vpop.f32.mrf.mxu0
      %v2278 = vadd.f32 %v1822, %v2277
      %v2279 = vpop.f32.mrf.mxu0
      %v2280 = vadd.f32 %v1822, %v2279
      %v2281 = vpop.f32.mrf.mxu0
      %v2282 = vpop.f32.mrf.mxu0
      %2283 = vdwg.mxu0
      %2284 = vmatprep.subr.bf16.mxu0 %v2129
      %2285 = vmatpush1.bf16.msra.mxu0 %v2128
      %2286 = vmatprep.subr.bf16.mxu0 %v2127
      %2287 = vmatpush1.bf16.msra.mxu0 %v2126
      %2288 = vmatprep.subr.bf16.mxu0 %v2125
      %2289 = vmatpush1.bf16.msra.mxu0 %v2124
      %2290 = vmatprep.subr.bf16.mxu0 %v2123
      %2291 = vmatpush1.bf16.msra.mxu0 %v2122
      %2292 = vmatprep.subr.bf16.mxu0 %v2121
      %2293 = vmatpush1.bf16.msra.mxu0 %v2120
      %2294 = vmatprep.subr.bf16.mxu0 %v2119
      %2295 = vmatpush1.bf16.msra.mxu0 %v2118
      %2296 = vmatprep.subr.bf16.mxu0 %v2117
      %2297 = vmatpush1.bf16.msra.mxu0 %v2116
      %2298 = vmatprep.subr.bf16.mxu0 %v2115
      %2299 = vmatpush1.bf16.msra.mxu0 %v2114
      %2300 = vmatprep.subr.bf16.mxu0 %v2145
      %2301 = vmatpush2.bf16.msra.mxu0 %v2144
      %2302 = vmatprep.subr.bf16.mxu0 %v2143
      %2303 = vmatpush2.bf16.msra.mxu0 %v2142
      %2304 = vmatprep.subr.bf16.mxu0 %v2141
      %2305 = vmatpush2.bf16.msra.mxu0 %v2140
      %2306 = vmatprep.subr.bf16.mxu0 %v2139
      %2307 = vmatpush2.bf16.msra.mxu0 %v2138
      %2308 = vmatprep.subr.bf16.mxu0 %v2137
      %2309 = vmatpush2.bf16.msra.mxu0 %v2136
      %2310 = vmatprep.subr.bf16.mxu0 %v2135
      %2311 = vmatpush2.bf16.msra.mxu0 %v2134
      %2312 = vmatprep.subr.bf16.mxu0 %v2133
      %2313 = vmatpush2.bf16.msra.mxu0 %v2132
      %2314 = vmatprep.subr.bf16.mxu0 %v2131
      %2315 = vmatpush2.bf16.msra.mxu0 %v2130
      %2316 = vmatprep.mubr.bf16.mxu0 %v1851
      %2317 = vmatmul.mubr.bf16.gmra.mxu0 %v1850
      %v2318 = vpop.f32.mrf.mxu0
      %v2319 = vadd.f32 %v2268, %v2318
      %v2320 = vpop.f32.mrf.mxu0
      %v2321 = vadd.f32 %v2270, %v2320
      %v2322 = vpop.f32.mrf.mxu0
      %v2323 = vadd.f32 %v2272, %v2322
      %v2324 = vpop.f32.mrf.mxu0
      %v2325 = vadd.f32 %v2274, %v2324
      %2326 = vmatprep.mubr.bf16.mxu0 %v1856
      %2327 = vmatmul.mubr.bf16.gmra.mxu0 %v1855
      %v2328 = vpop.f32.mrf.mxu0
      %v2329 = vadd.f32 %v2278, %v2328
      %v2330 = vpop.f32.mrf.mxu0
      %v2331 = vadd.f32 %v2280, %v2330
      %v2332 = vpop.f32.mrf.mxu0
      %v2333 = vpop.f32.mrf.mxu0
      %2334 = vdwg.mxu0
      %2335 = vmatprep.subr.bf16.mxu0 0
      %2336 = vmatpush1.bf16.msra.mxu0 0
      %2337 = vmatprep.subr.bf16.mxu0 0
      %2338 = vmatpush1.bf16.msra.mxu0 0
      %2339 = vmatprep.subr.bf16.mxu0 0
      %2340 = vmatpush1.bf16.msra.mxu0 0
      %2341 = vmatprep.subr.bf16.mxu0 0
      %2342 = vmatpush1.bf16.msra.mxu0 0
      %2343 = vmatprep.subr.bf16.mxu0 %v2153
      %2344 = vmatpush1.bf16.msra.mxu0 %v2152
      %2345 = vmatprep.subr.bf16.mxu0 %v2151
      %2346 = vmatpush1.bf16.msra.mxu0 %v2150
      %2347 = vmatprep.subr.bf16.mxu0 %v2149
      %2348 = vmatpush1.bf16.msra.mxu0 %v2148
      %2349 = vmatprep.subr.bf16.mxu0 %v2147
      %2350 = vmatpush1.bf16.msra.mxu0 %v2146
      %2351 = vmatprep.subr.bf16.mxu0 0
      %2352 = vmatpush2.bf16.msra.mxu0 0
      %2353 = vmatprep.subr.bf16.mxu0 0
      %2354 = vmatpush2.bf16.msra.mxu0 0
      %2355 = vmatprep.subr.bf16.mxu0 0
      %2356 = vmatpush2.bf16.msra.mxu0 0
      %2357 = vmatprep.subr.bf16.mxu0 0
      %2358 = vmatpush2.bf16.msra.mxu0 0
      %2359 = vmatprep.subr.bf16.mxu0 0
      %2360 = vmatpush2.bf16.msra.mxu0 0
      %2361 = vmatprep.subr.bf16.mxu0 0
      %2362 = vmatpush2.bf16.msra.mxu0 0
      %2363 = vmatprep.subr.bf16.mxu0 0
      %2364 = vmatpush2.bf16.msra.mxu0 0
      %2365 = vmatprep.subr.bf16.mxu0 0
      %2366 = vmatpush2.bf16.msra.mxu0 0
      %2367 = vmatprep.mubr.bf16.mxu0 0
      %2368 = vmatmul.mubr.bf16.gmra.mxu0 %v2228
      %v2369 = vpop.f32.mrf.mxu0
      %v2370 = vadd.f32 %v2319, %v2369
      %v2371 = vpop.f32.mrf.mxu0
      %v2372 = vadd.f32 %v2321, %v2371
      %v2373 = vpop.f32.mrf.mxu0
      %v2374 = vadd.f32 %v2323, %v2373
      %v2375 = vpop.f32.mrf.mxu0
      %v2376 = vadd.f32 %v2325, %v2375
      %2377 = vmatprep.mubr.bf16.mxu0 0
      %2378 = vmatmul.mubr.bf16.gmra.mxu0 %v2231
      %v2379 = vpop.f32.mrf.mxu0
      %v2380 = vadd.f32 %v2329, %v2379
      %v2381 = vpop.f32.mrf.mxu0
      %v2382 = vadd.f32 %v2331, %v2381
      %v2383 = vpop.f32.mrf.mxu0
      %v2384 = vpop.f32.mrf.mxu0
      %2385 = vdwg.mxu0
      %v2386 = vmul.f32 %v2370, %v2370
      %v2387 = vmul.f32 %v2372, %v2372
      %v2388 = vmul.f32 %v2374, %v2374
      %v2389 = vmul.f32 %v2376, %v2376
      %v2390 = vmul.f32 %v2380, %v2380
      %v2391 = vmul.f32 %v2382, %v2382
      %v2392 = vmul.f32 %v2370, %v2386
      %v2393 = vmul.f32 %v2372, %v2387
      %v2394 = vmul.f32 %v2374, %v2388
      %v2395 = vmul.f32 %v2376, %v2389
      %v2396 = vmul.f32 %v2380, %v2390
      %v2397 = vmul.f32 %v2382, %v2391
      %v2398 = vmul.f32 %v2392, 0.044715
      %v2399 = vmul.f32 %v2393, 0.044715
      %v2400 = vmul.f32 %v2394, 0.044715
      %v2401 = vmul.f32 %v2395, 0.044715
      %v2402 = vmul.f32 %v2396, 0.044715
      %v2403 = vmul.f32 %v2397, 0.044715
      %v2404 = vadd.f32 %v2370, %v2398
      %v2405 = vadd.f32 %v2372, %v2399
      %v2406 = vadd.f32 %v2374, %v2400
      %v2407 = vadd.f32 %v2376, %v2401
      %v2408 = vadd.f32 %v2380, %v2402
      %v2409 = vadd.f32 %v2382, %v2403
      %v2410 = vmul.f32 %v2404, 0.7978846
      %v2411 = vmul.f32 %v2405, 0.7978846
      %v2412 = vmul.f32 %v2406, 0.7978846
      %v2413 = vmul.f32 %v2407, 0.7978846
      %v2414 = vmul.f32 %v2408, 0.7978846
      %v2415 = vmul.f32 %v2409, 0.7978846
      %v2416 = vtanh.pop %v2410
      %v2417 = vtanh.pop %v2411
      %v2418 = vtanh.pop %v2412
      %v2419 = vtanh.pop %v2413
      %v2420 = vtanh.pop %v2414
      %v2421 = vtanh.pop %v2415
      %v2422 = vadd.f32 %v2416, 1.0
      %v2423 = vadd.f32 %v2417, 1.0
      %v2424 = vadd.f32 %v2418, 1.0
      %v2425 = vadd.f32 %v2419, 1.0
      %v2426 = vadd.f32 %v2420, 1.0
      %v2427 = vadd.f32 %v2421, 1.0
      %v2428 = vmul.f32 %v2422, 0.5
      %v2429 = vmul.f32 %v2423, 0.5
      %v2430 = vmul.f32 %v2424, 0.5
      %v2431 = vmul.f32 %v2425, 0.5
      %v2432 = vmul.f32 %v2426, 0.5
      %v2433 = vmul.f32 %v2427, 0.5
      %v2434 = vmul.f32 %v2370, %v2428
      %v2435 = vmul.f32 %v2372, %v2429
      %v2436 = vmul.f32 %v2374, %v2430
      %v2437 = vmul.f32 %v2376, %v2431
      %v2438 = vmul.f32 %v2380, %v2432
      %v2439 = vmul.f32 %v2382, %v2433
      %v2440 = vpack.c.bf16 %v2436, %v2434
      %v2441 = vpack.c.bf16 %v2437, %v2435
      %v2442 = vpack.c.bf16 %v2438, %v2438
      %v2443 = vpack.c.bf16 %v2439, %v2439
      %v2448 = vunpack.c.l.b16 %v2440
      %v2449 = vunpack.c.l.b16 %v2441
      %v2450 = vunpack.c.h.b16 %v2440
      %v2451 = vunpack.c.h.b16 %v2441
      %v2452 = vunpack.c.l.b16 %v2442
      %v2453 = vunpack.c.l.b16 %v2443
      %v2454 = vpack.c.b16 %v2449, %v2448
      %v2455 = vpack.c.b16 %v2451, %v2450
      %v2456 = vpack.c.b16 %v2453, %v2452
      %2460 = vst [vmem:[#allocation3 + $0x4] sm:$0xff] %v2454
      %2461 = vst [vmem:[#allocation3 + $0x14] sm:$0xff] %v2455
      %2462 = vst [vmem:[#allocation3 + $0x24] sm:$0x33] %v2456
      %v2463 = vld [vmem:[#allocation3] sm:$0xff]
      %v2464 = vld [vmem:[#allocation3 + $0x8] sm:$0xf]
      %v2465 = vld [vmem:[#allocation3 + $0x10] sm:$0xff]
      %v2466 = vld [vmem:[#allocation3 + $0x18] sm:$0xf]
      %v2467 = vld [vmem:[#allocation3 + $0x20] sm:$0x33]
      %v2468 = vld [vmem:[#allocation3 + $0x28] sm:$0x3]
      %v2469 = vmul.bf16 %v2463, %v658
      %v2470 = vmul.bf16 %v2464, %v656
      %v2471 = vmul.bf16 %v2465, %v658
      %v2472 = vmul.bf16 %v2466, %v656
      %v2473 = vmul.bf16 %v2467, %v658
      %v2474 = vmul.bf16 %v2468, %v656
      %2481 = vrot.lane.b32.xlu0 %v2469, 17
      %v2482 = vpop.permute.xlu0 %2481
      %2483 = vrot.lane.b32.xlu0 %v2470, 17
      %v2484 = vpop.permute.xlu0 %2483
      %2485 = vrot.lane.b32.xlu0 %v2471, 17
      %v2486 = vpop.permute.xlu0 %2485
      %2487 = vrot.lane.b32.xlu0 %v2472, 17
      %v2488 = vpop.permute.xlu0 %2487
      %2489 = vrot.lane.b32.xlu0 %v2473, 17
      %v2490 = vpop.permute.xlu0 %2489
      %2491 = vrot.lane.b32.xlu0 %v2474, 17
      %v2492 = vpop.permute.xlu0 %2491
      %v2493 = vrot.slane %v2482, 4
      %v2494 = vrot.slane %v2484, 4
      %v2495 = vrot.slane %v2486, 4
      %v2496 = vrot.slane %v2488, 4
      %v2497 = vrot.slane %v2490, 4
      %v2498 = vrot.slane %v2492, 4
      %v2499 = vsel %vm741, %v2493, %v2494
      %v2500 = vsel %vm743, %v2482, %v2499
      %v2501 = vsel %vm741, %v2495, %v2496
      %v2502 = vsel %vm743, %v2486, %v2501
      %v2503 = vsel %vm741, %v2497, %v2498
      %v2504 = vsel %vm743, %v2490, %v2503
      %2508 = vst [vmem:[#allocation5] sm:$0xff] %v2500
      %2509 = vst [vmem:[#allocation5 + $0x8] sm:$0xff] %v2502
      %2510 = vst [vmem:[#allocation5 + $0x10] sm:$0x33] %v2504
      %v2511 = vld [vmem:[#allocation3] sm:$0xff]
      %v2512 = vld [vmem:[#allocation3 + $0x8] sm:$0xf]
      %v2513 = vld [vmem:[#allocation3 + $0x10] sm:$0xff]
      %v2514 = vld [vmem:[#allocation3 + $0x18] sm:$0xf]
      %v2515 = vld [vmem:[#allocation3 + $0x20] sm:$0x33]
      %v2516 = vld [vmem:[#allocation3 + $0x28] sm:$0x3]
      %2523 = vrot.lane.b32.xlu0 %v2511, 16
      %v2524 = vpop.permute.xlu0 %2523
      %2525 = vrot.lane.b32.xlu0 %v2512, 16
      %v2526 = vpop.permute.xlu0 %2525
      %2527 = vrot.lane.b32.xlu0 %v2513, 16
      %v2528 = vpop.permute.xlu0 %2527
      %2529 = vrot.lane.b32.xlu0 %v2514, 16
      %v2530 = vpop.permute.xlu0 %2529
      %2531 = vrot.lane.b32.xlu0 %v2515, 16
      %v2532 = vpop.permute.xlu0 %2531
      %2533 = vrot.lane.b32.xlu0 %v2516, 16
      %v2534 = vpop.permute.xlu0 %2533
      %v2535 = vrot.slane %v2524, 4
      %v2536 = vrot.slane %v2526, 4
      %v2537 = vrot.slane %v2528, 4
      %v2538 = vrot.slane %v2530, 4
      %v2539 = vrot.slane %v2532, 4
      %v2540 = vrot.slane %v2534, 4
      %v2541 = vsel %vm741, %v2535, %v2536
      %v2542 = vsel %vm856, %v2524, %v2541
      %v2543 = vsel %vm741, %v2537, %v2538
      %v2544 = vsel %vm856, %v2528, %v2543
      %v2545 = vsel %vm741, %v2539, %v2540
      %v2546 = vsel %vm856, %v2532, %v2545
      %2550 = vst [vmem:[#allocation5 + $0x20] sm:$0xff] %v2542
      %2551 = vst [vmem:[#allocation5 + $0x28] sm:$0xff] %v2544
      %2552 = vst [vmem:[#allocation5 + $0x30] sm:$0x33] %v2546
      %v2553 = vld [vmem:[#allocation3] sm:$0xff]
      %v2554 = vld [vmem:[#allocation3 + $0x8] sm:$0xf]
      %v2555 = vld [vmem:[#allocation3 + $0x10] sm:$0xff]
      %v2556 = vld [vmem:[#allocation3 + $0x18] sm:$0xf]
      %v2557 = vld [vmem:[#allocation3 + $0x20] sm:$0x33]
      %v2558 = vld [vmem:[#allocation3 + $0x28] sm:$0x3]
      %v2559 = vmul.bf16 %v2553, %v950
      %v2560 = vmul.bf16 %v2554, %v948
      %v2561 = vmul.bf16 %v2555, %v950
      %v2562 = vmul.bf16 %v2556, %v948
      %v2563 = vmul.bf16 %v2557, %v950
      %v2564 = vmul.bf16 %v2558, %v948
      %2571 = vrot.lane.b32.xlu0 %v2559, 15
      %v2572 = vpop.permute.xlu0 %2571
      %2573 = vrot.lane.b32.xlu0 %v2560, 15
      %v2574 = vpop.permute.xlu0 %2573
      %2575 = vrot.lane.b32.xlu0 %v2561, 15
      %v2576 = vpop.permute.xlu0 %2575
      %2577 = vrot.lane.b32.xlu0 %v2562, 15
      %v2578 = vpop.permute.xlu0 %2577
      %2579 = vrot.lane.b32.xlu0 %v2563, 15
      %v2580 = vpop.permute.xlu0 %2579
      %2581 = vrot.lane.b32.xlu0 %v2564, 15
      %v2582 = vpop.permute.xlu0 %2581
      %v2583 = vrot.slane %v2572, 4
      %v2584 = vrot.slane %v2574, 4
      %v2585 = vrot.slane %v2576, 4
      %v2586 = vrot.slane %v2578, 4
      %v2587 = vrot.slane %v2580, 4
      %v2588 = vrot.slane %v2582, 4
      %v2589 = vsel %vm741, %v2583, %v2584
      %v2590 = vsel %vm1034, %v2572, %v2589
      %v2591 = vsel %vm741, %v2585, %v2586
      %v2592 = vsel %vm1034, %v2576, %v2591
      %v2593 = vsel %vm741, %v2587, %v2588
      %v2594 = vsel %vm1034, %v2580, %v2593
      %2598 = vst [vmem:[#allocation5 + $0x40] sm:$0xff] %v2590
      %2599 = vst [vmem:[#allocation5 + $0x48] sm:$0xff] %v2592
      %2600 = vst [vmem:[#allocation5 + $0x50] sm:$0x33] %v2594
      %v2601 = vld [vmem:[#allocation3] sm:$0xff]
      %v2602 = vld [vmem:[#allocation3 + $0x8] sm:$0xf]
      %v2603 = vld [vmem:[#allocation3 + $0x10] sm:$0xff]
      %v2604 = vld [vmem:[#allocation3 + $0x18] sm:$0xf]
      %v2605 = vld [vmem:[#allocation3 + $0x20] sm:$0x33]
      %v2606 = vld [vmem:[#allocation3 + $0x28] sm:$0x3]
      %v2607 = vmul.bf16 %v2601, %v1086
      %v2608 = vmul.bf16 %v2602, %v1084
      %v2609 = vmul.bf16 %v2603, %v1086
      %v2610 = vmul.bf16 %v2604, %v1084
      %v2611 = vmul.bf16 %v2605, %v1086
      %v2612 = vmul.bf16 %v2606, %v1084
      %2619 = vrot.lane.b32.xlu0 %v2607, 1
      %v2620 = vpop.permute.xlu0 %2619
      %2621 = vrot.lane.b32.xlu0 %v2608, 1
      %v2622 = vpop.permute.xlu0 %2621
      %2623 = vrot.lane.b32.xlu0 %v2609, 1
      %v2624 = vpop.permute.xlu0 %2623
      %2625 = vrot.lane.b32.xlu0 %v2610, 1
      %v2626 = vpop.permute.xlu0 %2625
      %2627 = vrot.lane.b32.xlu0 %v2611, 1
      %v2628 = vpop.permute.xlu0 %2627
      %2629 = vrot.lane.b32.xlu0 %v2612, 1
      %v2630 = vpop.permute.xlu0 %2629
      %v2631 = vrot.slane %v2620, 4
      %v2632 = vrot.slane %v2622, 4
      %v2633 = vrot.slane %v2624, 4
      %v2634 = vrot.slane %v2626, 4
      %v2635 = vrot.slane %v2628, 4
      %v2636 = vrot.slane %v2630, 4
      %v2637 = vsel %vm741, %v2631, %v2632
      %v2638 = vsel %vm1170, %v2620, %v2637
      %v2639 = vsel %vm741, %v2633, %v2634
      %v2640 = vsel %vm1170, %v2624, %v2639
      %v2641 = vsel %vm741, %v2635, %v2636
      %v2642 = vsel %vm1170, %v2628, %v2641
      %2646 = vst [vmem:[#allocation5 + $0x60] sm:$0xff] %v2638
      %2647 = vst [vmem:[#allocation5 + $0x68] sm:$0xff] %v2640
      %2648 = vst [vmem:[#allocation5 + $0x70] sm:$0x33] %v2642
      %2649 = vst [vmem:[#allocation5 + $0x80] sm:$0xff] %v2454
      %2650 = vst [vmem:[#allocation5 + $0x88] sm:$0xff] %v2455
      %2651 = vst [vmem:[#allocation5 + $0x90] sm:$0x33] %v2456
      %v2652 = vld [vmem:[#allocation3 + $0x4] sm:$0xff]
      %v2653 = vld [vmem:[#allocation3 + $0xc] sm:$0xf]
      %v2654 = vld [vmem:[#allocation3 + $0x14] sm:$0xff]
      %v2655 = vld [vmem:[#allocation3 + $0x1c] sm:$0xf]
      %v2656 = vld [vmem:[#allocation3 + $0x24] sm:$0x33]
      %v2657 = vld [vmem:[#allocation3 + $0x2c] sm:$0x3]
      %v2658 = vmul.bf16 %v2652, %v1229
      %v2659 = vmul.bf16 %v2653, %v1228
      %v2660 = vmul.bf16 %v2654, %v1229
      %v2661 = vmul.bf16 %v2655, %v1228
      %v2662 = vmul.bf16 %v2656, %v1229
      %v2663 = vmul.bf16 %v2657, %v1228
      %2670 = vrot.lane.b32.xlu0 %v2658, 127
      %v2671 = vpop.permute.xlu0 %2670
      %2672 = vrot.lane.b32.xlu0 %v2659, 127
      %v2673 = vpop.permute.xlu0 %2672
      %2674 = vrot.lane.b32.xlu0 %v2660, 127
      %v2675 = vpop.permute.xlu0 %2674
      %2676 = vrot.lane.b32.xlu0 %v2661, 127
      %v2677 = vpop.permute.xlu0 %2676
      %2678 = vrot.lane.b32.xlu0 %v2662, 127
      %v2679 = vpop.permute.xlu0 %2678
      %2680 = vrot.lane.b32.xlu0 %v2663, 127
      %v2681 = vpop.permute.xlu0 %2680
      %v2682 = vrot.slane %v2671, 4
      %v2683 = vrot.slane %v2673, 4
      %v2684 = vrot.slane %v2675, 4
      %v2685 = vrot.slane %v2677, 4
      %v2686 = vrot.slane %v2679, 4
      %v2687 = vrot.slane %v2681, 4
      %v2688 = vsel %vm741, %v2682, %v2683
      %v2689 = vsel %vm1085, %v2671, %v2688
      %v2690 = vsel %vm741, %v2684, %v2685
      %v2691 = vsel %vm1085, %v2675, %v2690
      %v2692 = vsel %vm741, %v2686, %v2687
      %v2693 = vsel %vm1085, %v2679, %v2692
      %2697 = vst [vmem:[#allocation5 + $0xa0] sm:$0xff] %v2689
      %2698 = vst [vmem:[#allocation5 + $0xa8] sm:$0xff] %v2691
      %2699 = vst [vmem:[#allocation5 + $0xb0] sm:$0x33] %v2693
      %v2700 = vld [vmem:[#allocation3 + $0x4] sm:$0xff]
      %v2701 = vld [vmem:[#allocation3 + $0xc] sm:$0xf]
      %v2702 = vld [vmem:[#allocation3 + $0x14] sm:$0xff]
      %v2703 = vld [vmem:[#allocation3 + $0x1c] sm:$0xf]
      %v2704 = vld [vmem:[#allocation3 + $0x24] sm:$0x33]
      %v2705 = vld [vmem:[#allocation3 + $0x2c] sm:$0x3]
      %v2706 = vmul.bf16 %v2700, %v1363
      %v2707 = vmul.bf16 %v2701, %v1362
      %v2708 = vmul.bf16 %v2702, %v1363
      %v2709 = vmul.bf16 %v2703, %v1362
      %v2710 = vmul.bf16 %v2704, %v1363
      %v2711 = vmul.bf16 %v2705, %v1362
      %2718 = vrot.lane.b32.xlu0 %v2706, 113
      %v2719 = vpop.permute.xlu0 %2718
      %2720 = vrot.lane.b32.xlu0 %v2707, 113
      %v2721 = vpop.permute.xlu0 %2720
      %2722 = vrot.lane.b32.xlu0 %v2708, 113
      %v2723 = vpop.permute.xlu0 %2722
      %2724 = vrot.lane.b32.xlu0 %v2709, 113
      %v2725 = vpop.permute.xlu0 %2724
      %2726 = vrot.lane.b32.xlu0 %v2710, 113
      %v2727 = vpop.permute.xlu0 %2726
      %2728 = vrot.lane.b32.xlu0 %v2711, 113
      %v2729 = vpop.permute.xlu0 %2728
      %v2730 = vrot.slane %v2719, 4
      %v2731 = vrot.slane %v2721, 4
      %v2732 = vrot.slane %v2723, 4
      %v2733 = vrot.slane %v2725, 4
      %v2734 = vrot.slane %v2727, 4
      %v2735 = vrot.slane %v2729, 4
      %v2736 = vsel %vm741, %v2730, %v2731
      %v2737 = vsel %vm949, %v2719, %v2736
      %v2738 = vsel %vm741, %v2732, %v2733
      %v2739 = vsel %vm949, %v2723, %v2738
      %v2740 = vsel %vm741, %v2734, %v2735
      %v2741 = vsel %vm949, %v2727, %v2740
      %2745 = vst [vmem:[#allocation5 + $0xc0] sm:$0xff] %v2737
      %2746 = vst [vmem:[#allocation5 + $0xc8] sm:$0xff] %v2739
      %2747 = vst [vmem:[#allocation5 + $0xd0] sm:$0x33] %v2741
      %v2748 = vld [vmem:[#allocation3 + $0x4] sm:$0xff]
      %v2749 = vld [vmem:[#allocation3 + $0xc] sm:$0xf]
      %v2750 = vld [vmem:[#allocation3 + $0x14] sm:$0xff]
      %v2751 = vld [vmem:[#allocation3 + $0x1c] sm:$0xf]
      %v2752 = vld [vmem:[#allocation3 + $0x24] sm:$0x33]
      %v2753 = vld [vmem:[#allocation3 + $0x2c] sm:$0x3]
      %2760 = vrot.lane.b32.xlu0 %v2748, 112
      %v2761 = vpop.permute.xlu0 %2760
      %2762 = vrot.lane.b32.xlu0 %v2749, 112
      %v2763 = vpop.permute.xlu0 %2762
      %2764 = vrot.lane.b32.xlu0 %v2750, 112
      %v2765 = vpop.permute.xlu0 %2764
      %2766 = vrot.lane.b32.xlu0 %v2751, 112
      %v2767 = vpop.permute.xlu0 %2766
      %2768 = vrot.lane.b32.xlu0 %v2752, 112
      %v2769 = vpop.permute.xlu0 %2768
      %2770 = vrot.lane.b32.xlu0 %v2753, 112
      %v2771 = vpop.permute.xlu0 %2770
      %v2772 = vrot.slane %v2761, 4
      %v2773 = vrot.slane %v2763, 4
      %v2774 = vrot.slane %v2765, 4
      %v2775 = vrot.slane %v2767, 4
      %v2776 = vrot.slane %v2769, 4
      %v2777 = vrot.slane %v2771, 4
      %v2778 = vsel %vm741, %v2772, %v2773
      %v2779 = vsel %vm1559, %v2761, %v2778
      %v2780 = vsel %vm741, %v2774, %v2775
      %v2781 = vsel %vm1559, %v2765, %v2780
      %v2782 = vsel %vm741, %v2776, %v2777
      %v2783 = vsel %vm1559, %v2769, %v2782
      %2787 = vst [vmem:[#allocation5 + $0xe0] sm:$0xff] %v2779
      %2788 = vst [vmem:[#allocation5 + $0xe8] sm:$0xff] %v2781
      %2789 = vst [vmem:[#allocation5 + $0xf0] sm:$0x33] %v2783
      %v2790 = vld [vmem:[#allocation3 + $0x4] sm:$0xff]
      %v2791 = vld [vmem:[#allocation3 + $0xc] sm:$0xf]
      %v2792 = vld [vmem:[#allocation3 + $0x14] sm:$0xff]
      %v2793 = vld [vmem:[#allocation3 + $0x1c] sm:$0xf]
      %v2794 = vld [vmem:[#allocation3 + $0x24] sm:$0x33]
      %v2795 = vld [vmem:[#allocation3 + $0x2c] sm:$0x3]
      %v2796 = vmul.bf16 %v2790, %v1610
      %v2797 = vmul.bf16 %v2791, %v1609
      %v2798 = vmul.bf16 %v2792, %v1610
      %v2799 = vmul.bf16 %v2793, %v1609
      %v2800 = vmul.bf16 %v2794, %v1610
      %v2801 = vmul.bf16 %v2795, %v1609
      %2808 = vrot.lane.b32.xlu0 %v2796, 111
      %v2809 = vpop.permute.xlu0 %2808
      %2810 = vrot.lane.b32.xlu0 %v2797, 111
      %v2811 = vpop.permute.xlu0 %2810
      %2812 = vrot.lane.b32.xlu0 %v2798, 111
      %v2813 = vpop.permute.xlu0 %2812
      %2814 = vrot.lane.b32.xlu0 %v2799, 111
      %v2815 = vpop.permute.xlu0 %2814
      %2816 = vrot.lane.b32.xlu0 %v2800, 111
      %v2817 = vpop.permute.xlu0 %2816
      %2818 = vrot.lane.b32.xlu0 %v2801, 111
      %v2819 = vpop.permute.xlu0 %2818
      %v2820 = vrot.slane %v2809, 4
      %v2821 = vrot.slane %v2811, 4
      %v2822 = vrot.slane %v2813, 4
      %v2823 = vrot.slane %v2815, 4
      %v2824 = vrot.slane %v2817, 4
      %v2825 = vrot.slane %v2819, 4
      %v2826 = vsel %vm741, %v2820, %v2821
      %v2827 = vsel %vm657, %v2809, %v2826
      %v2828 = vsel %vm741, %v2822, %v2823
      %v2829 = vsel %vm657, %v2813, %v2828
      %v2830 = vsel %vm741, %v2824, %v2825
      %v2831 = vsel %vm657, %v2817, %v2830
      %2835 = vst [vmem:[#allocation5 + $0x100] sm:$0xff] %v2827
      %2836 = vst [vmem:[#allocation5 + $0x108] sm:$0xff] %v2829
      %2837 = vst [vmem:[#allocation5 + $0x110] sm:$0x33] %v2831
      %v2838 = vld [vmem:[%s3] sm:$0xff]
      %v2839 = vld [vmem:[%s3 + $0x8] sm:$0xf]
      %v2840 = vld [vmem:[%s3 + $0xc] sm:$0xff]
      %v2841 = vld [vmem:[%s3 + $0x14] sm:$0xf]
      %v2842 = vld [vmem:[%s3 + $0x18] sm:$0xff]
      %v2843 = vld [vmem:[%s3 + $0x20] sm:$0xf]
      %v2844 = vld [vmem:[%s3 + $0x24] sm:$0xff]
      %v2845 = vld [vmem:[%s3 + $0x2c] sm:$0xf]
      %v2846 = vld [vmem:[%s3 + $0x30] sm:$0xff]
      %v2847 = vld [vmem:[%s3 + $0x38] sm:$0xf]
      %v2848 = vld [vmem:[%s3 + $0x3c] sm:$0xff]
      %v2849 = vld [vmem:[%s3 + $0x44] sm:$0xf]
      %v2850 = vld [vmem:[%s3 + $0x48] sm:$0xff]
      %v2851 = vld [vmem:[%s3 + $0x50] sm:$0xf]
      %v2852 = vld [vmem:[%s3 + $0x54] sm:$0x33]
      %v2853 = vld [vmem:[%s3 + $0x5c] sm:$0x3]
      %v2854 = vld [vmem:[#allocation5] sm:$0xff]
      %v2855 = vld [vmem:[#allocation5 + $0x8] sm:$0xff]
      %v2856 = vld [vmem:[#allocation5 + $0x10] sm:$0xff]
      %v2857 = vld [vmem:[#allocation5 + $0x18] sm:$0xff]
      %v2858 = vld [vmem:[#allocation5 + $0x20] sm:$0xff]
      %v2859 = vld [vmem:[#allocation5 + $0x28] sm:$0xff]
      %v2860 = vld [vmem:[#allocation5 + $0x30] sm:$0xff]
      %v2861 = vld [vmem:[#allocation5 + $0x38] sm:$0xff]
      %v2862 = vld [vmem:[#allocation5 + $0x40] sm:$0xff]
      %v2863 = vld [vmem:[#allocation5 + $0x48] sm:$0xff]
      %v2864 = vld [vmem:[#allocation5 + $0x50] sm:$0xff]
      %v2865 = vld [vmem:[#allocation5 + $0x58] sm:$0xff]
      %v2866 = vld [vmem:[#allocation5 + $0x60] sm:$0xff]
      %v2867 = vld [vmem:[#allocation5 + $0x68] sm:$0xff]
      %v2868 = vld [vmem:[#allocation5 + $0x70] sm:$0xff]
      %v2869 = vld [vmem:[#allocation5 + $0x78] sm:$0xff]
      %v2870 = vld [vmem:[#allocation5 + $0x80] sm:$0xff]
      %v2871 = vld [vmem:[#allocation5 + $0x88] sm:$0xff]
      %v2872 = vld [vmem:[#allocation5 + $0x90] sm:$0xff]
      %v2873 = vld [vmem:[#allocation5 + $0x98] sm:$0xff]
      %v2874 = vld [vmem:[#allocation5 + $0xa0] sm:$0xff]
      %v2875 = vld [vmem:[#allocation5 + $0xa8] sm:$0xff]
      %v2876 = vld [vmem:[#allocation5 + $0xb0] sm:$0xff]
      %v2877 = vld [vmem:[#allocation5 + $0xb8] sm:$0xff]
      %v2878 = vld [vmem:[#allocation5 + $0xc0] sm:$0xff]
      %v2879 = vld [vmem:[#allocation5 + $0xc8] sm:$0xff]
      %v2880 = vld [vmem:[#allocation5 + $0xd0] sm:$0xff]
      %v2881 = vld [vmem:[#allocation5 + $0xd8] sm:$0xff]
      %v2882 = vld [vmem:[#allocation5 + $0xe0] sm:$0xff]
      %v2883 = vld [vmem:[#allocation5 + $0xe8] sm:$0xff]
      %v2884 = vld [vmem:[#allocation5 + $0xf0] sm:$0xff]
      %v2885 = vld [vmem:[#allocation5 + $0xf8] sm:$0xff]
      %v2886 = vld [vmem:[#allocation5 + $0x100] sm:$0xff]
      %v2887 = vld [vmem:[#allocation5 + $0x108] sm:$0xff]
      %v2888 = vld [vmem:[#allocation5 + $0x110] sm:$0xff]
      %v2889 = vld [vmem:[#allocation5 + $0x118] sm:$0xff]
      %v2890 = vld [vmem:[%s4] sm:$0xff]
      %v2891 = vld [vmem:[%s4 + $0x8] sm:$0xff]
      %v2892 = vld [vmem:[%s4 + $0x10] sm:$0xff]
      %v2893 = vld [vmem:[%s4 + $0x18] sm:$0xff]
      %v2894 = vld [vmem:[%s4 + $0x20] sm:$0xff]
      %v2895 = vld [vmem:[%s4 + $0x28] sm:$0xff]
      %v2896 = vld [vmem:[%s4 + $0x30] sm:$0xff]
      %v2897 = vld [vmem:[%s4 + $0x38] sm:$0xf]
      %2899 = vset.pattern.permute.xlu0 0
      %2900 = vperm.xlu0 %2899, %v2890
      %v2901 = vpop.permute.xlu0 %2900
      %2904 = vset.pattern.permute.xlu0 0
      %2905 = vperm.xlu0 %2904, %v2891
      %v2906 = vpop.permute.xlu0 %2905
      %2909 = vset.pattern.permute.xlu0 0
      %2910 = vperm.xlu0 %2909, %v2892
      %v2911 = vpop.permute.xlu0 %2910
      %2914 = vset.pattern.permute.xlu0 0
      %2915 = vperm.xlu0 %2914, %v2893
      %v2916 = vpop.permute.xlu0 %2915
      %2919 = vset.pattern.permute.xlu0 0
      %2920 = vperm.xlu0 %2919, %v2894
      %v2921 = vpop.permute.xlu0 %2920
      %2924 = vset.pattern.permute.xlu0 0
      %2925 = vperm.xlu0 %2924, %v2895
      %v2926 = vpop.permute.xlu0 %2925
      %2929 = vset.pattern.permute.xlu0 0
      %2930 = vperm.xlu0 %2929, %v2896
      %v2931 = vpop.permute.xlu0 %2930
      %2934 = vset.pattern.permute.xlu0 0
      %2935 = vperm.xlu0 %2934, %v2897
      %v2936 = vpop.permute.xlu0 %2935
      %v2954 = vunpack.c.l.b16 %v2838
      %v2955 = vunpack.c.h.b16 %v2838
      %v2956 = vunpack.c.l.b16 %v2839
      %v2957 = vunpack.c.l.b16 %v2840
      %v2958 = vunpack.c.h.b16 %v2840
      %v2959 = vunpack.c.l.b16 %v2841
      %v2960 = vunpack.c.l.b16 %v2842
      %v2961 = vunpack.c.h.b16 %v2842
      %v2962 = vunpack.c.l.b16 %v2843
      %v2963 = vunpack.c.l.b16 %v2844
      %v2964 = vunpack.c.h.b16 %v2844
      %v2965 = vunpack.c.l.b16 %v2845
      %v2966 = vunpack.c.l.b16 %v2846
      %v2967 = vunpack.c.h.b16 %v2846
      %v2968 = vunpack.c.l.b16 %v2847
      %v2969 = vunpack.c.l.b16 %v2848
      %v2970 = vunpack.c.h.b16 %v2848
      %v2971 = vunpack.c.l.b16 %v2849
      %v2972 = vunpack.c.l.b16 %v2850
      %v2973 = vunpack.c.h.b16 %v2850
      %v2974 = vunpack.c.l.b16 %v2851
      %v2975 = vunpack.c.l.b16 %v2852
      %v2976 = vunpack.c.h.b16 %v2852
      %v2977 = vunpack.c.l.b16 %v2853
      %v2978 = vpack.c.b16 %v2957, %v2954
      %v2979 = vpack.c.b16 %v2958, %v2955
      %v2980 = vpack.c.b16 %v2959, %v2956
      %v2981 = vpack.c.b16 %v2963, %v2960
      %v2982 = vpack.c.b16 %v2964, %v2961
      %v2983 = vpack.c.b16 %v2965, %v2962
      %v2984 = vpack.c.b16 %v2969, %v2966
      %v2985 = vpack.c.b16 %v2970, %v2967
      %v2986 = vpack.c.b16 %v2971, %v2968
      %v2987 = vpack.c.b16 %v2975, %v2972
      %v2988 = vpack.c.b16 %v2976, %v2973
      %v2989 = vpack.c.b16 %v2977, %v2974
      %v3034 = vunpack.c.l.b16 %v2854
      %v3035 = vunpack.c.h.b16 %v2854
      %v3036 = vunpack.c.l.b16 %v2855
      %v3037 = vunpack.c.h.b16 %v2855
      %v3038 = vunpack.c.l.b16 %v2856
      %v3039 = vunpack.c.h.b16 %v2856
      %v3040 = vunpack.c.l.b16 %v2857
      %v3041 = vunpack.c.h.b16 %v2857
      %v3042 = vunpack.c.l.b16 %v2858
      %v3043 = vunpack.c.h.b16 %v2858
      %v3044 = vunpack.c.l.b16 %v2859
      %v3045 = vunpack.c.h.b16 %v2859
      %v3046 = vunpack.c.l.b16 %v2860
      %v3047 = vunpack.c.h.b16 %v2860
      %v3048 = vunpack.c.l.b16 %v2861
      %v3049 = vunpack.c.h.b16 %v2861
      %v3050 = vunpack.c.l.b16 %v2862
      %v3051 = vunpack.c.h.b16 %v2862
      %v3052 = vunpack.c.l.b16 %v2863
      %v3053 = vunpack.c.h.b16 %v2863
      %v3054 = vunpack.c.l.b16 %v2864
      %v3055 = vunpack.c.h.b16 %v2864
      %v3056 = vunpack.c.l.b16 %v2865
      %v3057 = vunpack.c.h.b16 %v2865
      %v3058 = vunpack.c.l.b16 %v2866
      %v3059 = vunpack.c.h.b16 %v2866
      %v3060 = vunpack.c.l.b16 %v2867
      %v3061 = vunpack.c.h.b16 %v2867
      %v3062 = vunpack.c.l.b16 %v2868
      %v3063 = vunpack.c.h.b16 %v2868
      %v3064 = vunpack.c.l.b16 %v2869
      %v3065 = vunpack.c.h.b16 %v2869
      %v3066 = vunpack.c.l.b16 %v2870
      %v3067 = vunpack.c.h.b16 %v2870
      %v3068 = vunpack.c.l.b16 %v2871
      %v3069 = vunpack.c.h.b16 %v2871
      %v3070 = vunpack.c.l.b16 %v2872
      %v3071 = vunpack.c.h.b16 %v2872
      %v3072 = vunpack.c.l.b16 %v2873
      %v3073 = vunpack.c.h.b16 %v2873
      %v3074 = vunpack.c.l.b16 %v2874
      %v3075 = vunpack.c.h.b16 %v2874
      %v3076 = vunpack.c.l.b16 %v2875
      %v3077 = vunpack.c.h.b16 %v2875
      %v3078 = vunpack.c.l.b16 %v2876
      %v3079 = vunpack.c.h.b16 %v2876
      %v3080 = vunpack.c.l.b16 %v2877
      %v3081 = vunpack.c.h.b16 %v2877
      %v3082 = vunpack.c.l.b16 %v2878
      %v3083 = vunpack.c.h.b16 %v2878
      %v3084 = vunpack.c.l.b16 %v2879
      %v3085 = vunpack.c.h.b16 %v2879
      %v3086 = vunpack.c.l.b16 %v2880
      %v3087 = vunpack.c.h.b16 %v2880
      %v3088 = vunpack.c.l.b16 %v2881
      %v3089 = vunpack.c.h.b16 %v2881
      %v3090 = vunpack.c.l.b16 %v2882
      %v3091 = vunpack.c.h.b16 %v2882
      %v3092 = vunpack.c.l.b16 %v2883
      %v3093 = vunpack.c.h.b16 %v2883
      %v3094 = vunpack.c.l.b16 %v2884
      %v3095 = vunpack.c.h.b16 %v2884
      %v3096 = vunpack.c.l.b16 %v2885
      %v3097 = vunpack.c.h.b16 %v2885
      %v3098 = vunpack.c.l.b16 %v2886
      %v3099 = vunpack.c.h.b16 %v2886
      %v3100 = vunpack.c.l.b16 %v2887
      %v3101 = vunpack.c.h.b16 %v2887
      %v3102 = vunpack.c.l.b16 %v2888
      %v3103 = vunpack.c.h.b16 %v2888
      %v3104 = vunpack.c.l.b16 %v2889
      %v3105 = vunpack.c.h.b16 %v2889
      %v3106 = vpack.c.b16 %v3036, %v3034
      %v3107 = vpack.c.b16 %v3037, %v3035
      %v3108 = vpack.c.b16 %v3040, %v3038
      %v3109 = vpack.c.b16 %v3041, %v3039
      %v3110 = vpack.c.b16 %v3044, %v3042
      %v3111 = vpack.c.b16 %v3045, %v3043
      %v3112 = vpack.c.b16 %v3048, %v3046
      %v3113 = vpack.c.b16 %v3049, %v3047
      %v3114 = vpack.c.b16 %v3052, %v3050
      %v3115 = vpack.c.b16 %v3053, %v3051
      %v3116 = vpack.c.b16 %v3056, %v3054
      %v3117 = vpack.c.b16 %v3057, %v3055
      %v3118 = vpack.c.b16 %v3060, %v3058
      %v3119 = vpack.c.b16 %v3061, %v3059
      %v3120 = vpack.c.b16 %v3064, %v3062
      %v3121 = vpack.c.b16 %v3065, %v3063
      %v3122 = vpack.c.b16 %v3068, %v3066
      %v3123 = vpack.c.b16 %v3069, %v3067
      %v3124 = vpack.c.b16 %v3072, %v3070
      %v3125 = vpack.c.b16 %v3073, %v3071
      %v3126 = vpack.c.b16 %v3076, %v3074
      %v3127 = vpack.c.b16 %v3077, %v3075
      %v3128 = vpack.c.b16 %v3080, %v3078
      %v3129 = vpack.c.b16 %v3081, %v3079
      %v3130 = vpack.c.b16 %v3084, %v3082
      %v3131 = vpack.c.b16 %v3085, %v3083
      %v3132 = vpack.c.b16 %v3088, %v3086
      %v3133 = vpack.c.b16 %v3089, %v3087
      %v3134 = vpack.c.b16 %v3092, %v3090
      %v3135 = vpack.c.b16 %v3093, %v3091
      %v3136 = vpack.c.b16 %v3096, %v3094
      %v3137 = vpack.c.b16 %v3097, %v3095
      %v3138 = vpack.c.b16 %v3100, %v3098
      %v3139 = vpack.c.b16 %v3101, %v3099
      %v3140 = vpack.c.b16 %v3104, %v3102
      %v3141 = vpack.c.b16 %v3105, %v3103
      %vm3178 = vcmask 261120
      %v3180 = vsel %vm3178, %v2980, 0
      %v3183 = vsel %vm3178, %v2983, 0
      %v3186 = vsel %vm3178, %v2986, 0
      %v3189 = vsel %vm3178, %v2989, 0
      %3191 = vmatprep.subr.bf16.mxu0 %v3121
      %3192 = vmatpush1.bf16.msra.mxu0 %v3120
      %3193 = vmatprep.subr.bf16.mxu0 %v3119
      %3194 = vmatpush1.bf16.msra.mxu0 %v3118
      %3195 = vmatprep.subr.bf16.mxu0 %v3117
      %3196 = vmatpush1.bf16.msra.mxu0 %v3116
      %3197 = vmatprep.subr.bf16.mxu0 %v3115
      %3198 = vmatpush1.bf16.msra.mxu0 %v3114
      %3199 = vmatprep.subr.bf16.mxu0 %v3113
      %3200 = vmatpush1.bf16.msra.mxu0 %v3112
      %3201 = vmatprep.subr.bf16.mxu0 %v3111
      %3202 = vmatpush1.bf16.msra.mxu0 %v3110
      %3203 = vmatprep.subr.bf16.mxu0 %v3109
      %3204 = vmatpush1.bf16.msra.mxu0 %v3108
      %3205 = vmatprep.subr.bf16.mxu0 %v3107
      %3206 = vmatpush1.bf16.msra.mxu0 %v3106
      %3207 = vmatprep.subr.bf16.mxu0 %v3137
      %3208 = vmatpush2.bf16.msra.mxu0 %v3136
      %3209 = vmatprep.subr.bf16.mxu0 %v3135
      %3210 = vmatpush2.bf16.msra.mxu0 %v3134
      %3211 = vmatprep.subr.bf16.mxu0 %v3133
      %3212 = vmatpush2.bf16.msra.mxu0 %v3132
      %3213 = vmatprep.subr.bf16.mxu0 %v3131
      %3214 = vmatpush2.bf16.msra.mxu0 %v3130
      %3215 = vmatprep.subr.bf16.mxu0 %v3129
      %3216 = vmatpush2.bf16.msra.mxu0 %v3128
      %3217 = vmatprep.subr.bf16.mxu0 %v3127
      %3218 = vmatpush2.bf16.msra.mxu0 %v3126
      %3219 = vmatprep.subr.bf16.mxu0 %v3125
      %3220 = vmatpush2.bf16.msra.mxu0 %v3124
      %3221 = vmatprep.subr.bf16.mxu0 %v3123
      %3222 = vmatpush2.bf16.msra.mxu0 %v3122
      %3223 = vmatprep.mubr.bf16.mxu0 %v2979
      %3224 = vmatmul.mubr.bf16.gmra.mxu0 %v2978
      %v3225 = vpop.f32.mrf.mxu0
      %v3226 = vadd.f32 %v2901, %v3225
      %v3227 = vpop.f32.mrf.mxu0
      %v3228 = vadd.f32 %v2901, %v3227
      %v3229 = vpop.f32.mrf.mxu0
      %v3230 = vadd.f32 %v2906, %v3229
      %v3231 = vpop.f32.mrf.mxu0
      %v3232 = vadd.f32 %v2906, %v3231
      %3233 = vmatprep.mubr.bf16.mxu0 %v2982
      %3234 = vmatmul.mubr.bf16.gmra.mxu0 %v2981
      %v3235 = vpop.f32.mrf.mxu0
      %v3236 = vadd.f32 %v2911, %v3235
      %v3237 = vpop.f32.mrf.mxu0
      %v3238 = vadd.f32 %v2911, %v3237
      %v3239 = vpop.f32.mrf.mxu0
      %v3240 = vadd.f32 %v2916, %v3239
      %v3241 = vpop.f32.mrf.mxu0
      %v3242 = vadd.f32 %v2916, %v3241
      %3243 = vmatprep.mubr.bf16.mxu0 %v2985
      %3244 = vmatmul.mubr.bf16.gmra.mxu0 %v2984
      %v3245 = vpop.f32.mrf.mxu0
      %v3246 = vadd.f32 %v2921, %v3245
      %v3247 = vpop.f32.mrf.mxu0
      %v3248 = vadd.f32 %v2921, %v3247
      %v3249 = vpop.f32.mrf.mxu0
      %v3250 = vadd.f32 %v2926, %v3249
      %v3251 = vpop.f32.mrf.mxu0
      %v3252 = vadd.f32 %v2926, %v3251
      %3253 = vmatprep.mubr.bf16.mxu0 %v2988
      %3254 = vmatmul.mubr.bf16.gmra.mxu0 %v2987
      %v3255 = vpop.f32.mrf.mxu0
      %v3256 = vadd.f32 %v2931, %v3255
      %v3257 = vpop.f32.mrf.mxu0
      %v3258 = vadd.f32 %v2931, %v3257
      %v3259 = vpop.f32.mrf.mxu0
      %v3260 = vadd.f32 %v2936, %v3259
      %v3261 = vpop.f32.mrf.mxu0
      %v3262 = vadd.f32 %v2936, %v3261
      %3263 = vdwg.mxu0
      %3264 = vmatprep.subr.bf16.mxu0 0
      %3265 = vmatpush1.bf16.msra.mxu0 0
      %3266 = vmatprep.subr.bf16.mxu0 0
      %3267 = vmatpush1.bf16.msra.mxu0 0
      %3268 = vmatprep.subr.bf16.mxu0 0
      %3269 = vmatpush1.bf16.msra.mxu0 0
      %3270 = vmatprep.subr.bf16.mxu0 0
      %3271 = vmatpush1.bf16.msra.mxu0 0
      %3272 = vmatprep.subr.bf16.mxu0 0
      %3273 = vmatpush1.bf16.msra.mxu0 0
      %3274 = vmatprep.subr.bf16.mxu0 0
      %3275 = vmatpush1.bf16.msra.mxu0 0
      %3276 = vmatprep.subr.bf16.mxu0 %v3141
      %3277 = vmatpush1.bf16.msra.mxu0 %v3140
      %3278 = vmatprep.subr.bf16.mxu0 %v3139
      %3279 = vmatpush1.bf16.msra.mxu0 %v3138
      %3280 = vmatprep.subr.bf16.mxu0 0
      %3281 = vmatpush2.bf16.msra.mxu0 0
      %3282 = vmatprep.subr.bf16.mxu0 0
      %3283 = vmatpush2.bf16.msra.mxu0 0
      %3284 = vmatprep.subr.bf16.mxu0 0
      %3285 = vmatpush2.bf16.msra.mxu0 0
      %3286 = vmatprep.subr.bf16.mxu0 0
      %3287 = vmatpush2.bf16.msra.mxu0 0
      %3288 = vmatprep.subr.bf16.mxu0 0
      %3289 = vmatpush2.bf16.msra.mxu0 0
      %3290 = vmatprep.subr.bf16.mxu0 0
      %3291 = vmatpush2.bf16.msra.mxu0 0
      %3292 = vmatprep.subr.bf16.mxu0 0
      %3293 = vmatpush2.bf16.msra.mxu0 0
      %3294 = vmatprep.subr.bf16.mxu0 0
      %3295 = vmatpush2.bf16.msra.mxu0 0
      %3296 = vmatprep.mubr.bf16.mxu0 0
      %3297 = vmatmul.mubr.bf16.gmra.mxu0 %v3180
      %v3298 = vpop.f32.mrf.mxu0
      %v3299 = vadd.f32 %v3226, %v3298
      %v3300 = vpop.f32.mrf.mxu0
      %v3301 = vadd.f32 %v3228, %v3300
      %v3302 = vpop.f32.mrf.mxu0
      %v3303 = vadd.f32 %v3230, %v3302
      %v3304 = vpop.f32.mrf.mxu0
      %v3305 = vadd.f32 %v3232, %v3304
      %3306 = vmatprep.mubr.bf16.mxu0 0
      %3307 = vmatmul.mubr.bf16.gmra.mxu0 %v3183
      %v3308 = vpop.f32.mrf.mxu0
      %v3309 = vadd.f32 %v3236, %v3308
      %v3310 = vpop.f32.mrf.mxu0
      %v3311 = vadd.f32 %v3238, %v3310
      %v3312 = vpop.f32.mrf.mxu0
      %v3313 = vadd.f32 %v3240, %v3312
      %v3314 = vpop.f32.mrf.mxu0
      %v3315 = vadd.f32 %v3242, %v3314
      %3316 = vmatprep.mubr.bf16.mxu0 0
      %3317 = vmatmul.mubr.bf16.gmra.mxu0 %v3186
      %v3318 = vpop.f32.mrf.mxu0
      %v3319 = vadd.f32 %v3246, %v3318
      %v3320 = vpop.f32.mrf.mxu0
      %v3321 = vadd.f32 %v3248, %v3320
      %v3322 = vpop.f32.mrf.mxu0
      %v3323 = vadd.f32 %v3250, %v3322
      %v3324 = vpop.f32.mrf.mxu0
      %v3325 = vadd.f32 %v3252, %v3324
      %3326 = vmatprep.mubr.bf16.mxu0 0
      %3327 = vmatmul.mubr.bf16.gmra.mxu0 %v3189
      %v3328 = vpop.f32.mrf.mxu0
      %v3329 = vadd.f32 %v3256, %v3328
      %v3330 = vpop.f32.mrf.mxu0
      %v3331 = vadd.f32 %v3258, %v3330
      %v3332 = vpop.f32.mrf.mxu0
      %v3333 = vadd.f32 %v3260, %v3332
      %v3334 = vpop.f32.mrf.mxu0
      %v3335 = vadd.f32 %v3262, %v3334
      %3336 = vdwg.mxu0
      %v3337 = vadd.f32 %v3299, %v3301
      %3338 = vadd.xlane.f32.xlu0 %v3337
      %v3339 = vpop.xlane.xlu0 %3338
      %v3340 = vadd.f32 %v3303, %v3305
      %3341 = vadd.xlane.f32.xlu0 %v3340
      %v3342 = vpop.xlane.xlu0 %3341
      %v3343 = vadd.f32 %v3309, %v3311
      %3344 = vadd.xlane.f32.xlu0 %v3343
      %v3345 = vpop.xlane.xlu0 %3344
      %v3346 = vadd.f32 %v3313, %v3315
      %3347 = vadd.xlane.f32.xlu0 %v3346
      %v3348 = vpop.xlane.xlu0 %3347
      %v3349 = vadd.f32 %v3319, %v3321
      %3350 = vadd.xlane.f32.xlu0 %v3349
      %v3351 = vpop.xlane.xlu0 %3350
      %v3352 = vadd.f32 %v3323, %v3325
      %3353 = vadd.xlane.f32.xlu0 %v3352
      %v3354 = vpop.xlane.xlu0 %3353
      %v3355 = vadd.f32 %v3329, %v3331
      %3356 = vadd.xlane.f32.xlu0 %v3355
      %v3357 = vpop.xlane.xlu0 %3356
      %vm3358 = vcmask 1043456
      %v3359 = vsel %vm3358, %v3333, 0.0
      %v3360 = vsel %vm3358, %v3335, 0.0
      %v3361 = vadd.f32 %v3359, %v3360
      %3362 = vadd.xlane.f32.xlu0 %v3361
      %v3363 = vpop.xlane.xlu0 %3362
      %v3364 = vmul.f32 %v3339, 0.00390625
      %v3365 = vmul.f32 %v3342, 0.00390625
      %v3366 = vmul.f32 %v3345, 0.00390625
      %v3367 = vmul.f32 %v3348, 0.00390625
      %v3368 = vmul.f32 %v3351, 0.00390625
      %v3369 = vmul.f32 %v3354, 0.00390625
      %v3370 = vmul.f32 %v3357, 0.00390625
      %v3371 = vmul.f32 %v3363, 0.00390625
      %v3372 = vld [vmem:[%s5] sm:$0xff]
      %v3373 = vld [vmem:[%s5 + $0x8] sm:$0xff]
      %v3374 = vld [vmem:[%s5 + $0x10] sm:$0xff]
      %v3375 = vld [vmem:[%s5 + $0x18] sm:$0xff]
      %v3376 = vld [vmem:[%s5 + $0x20] sm:$0xff]
      %v3377 = vld [vmem:[%s5 + $0x28] sm:$0xff]
      %v3378 = vld [vmem:[%s5 + $0x30] sm:$0xff]
      %v3379 = vld [vmem:[%s5 + $0x38] sm:$0xf]
      %v3380 = vmul.f32 %v3372, %v3364
      %v3381 = vmul.f32 %v3373, %v3365
      %v3382 = vmul.f32 %v3374, %v3366
      %v3383 = vmul.f32 %v3375, %v3367
      %v3384 = vmul.f32 %v3376, %v3368
      %v3385 = vmul.f32 %v3377, %v3369
      %v3386 = vmul.f32 %v3378, %v3370
      %v3387 = vmul.f32 %v3379, %v3371
      %vm3388 = vcmask 15360
      %v3389 = vsel %vm3388, %v3380, 0.0
      %v3390 = vsel %vm3388, %v3381, 0.0
      %v3391 = vadd.f32 %v3389, %v3390
      %v3392 = vsel %vm3388, %v3382, 0.0
      %v3393 = vadd.f32 %v3391, %v3392
      %v3394 = vsel %vm3388, %v3383, 0.0
      %v3395 = vadd.f32 %v3393, %v3394
      %v3396 = vsel %vm3388, %v3384, 0.0
      %v3397 = vadd.f32 %v3395, %v3396
      %v3398 = vsel %vm3388, %v3385, 0.0
      %v3399 = vadd.f32 %v3397, %v3398
      %v3400 = vsel %vm3388, %v3386, 0.0
      %v3401 = vadd.f32 %v3399, %v3400
      %vm3402 = vcmask 11264
      %v3403 = vsel %vm3402, %v3387, 0.0
      %v3404 = vadd.f32 %v3401, %v3403
      %v3405 = vrot.slane %v3404, 4
      %v3406 = vadd.f32 %v3404, %v3405
      %v3407 = vrot.slane %v3406, 2
      %v3408 = vadd.f32 %v3406, %v3407
      %v3409 = vrot.slane %v3408, 1
      %v3410 = vadd.f32 %v3408, %v3409
      %v3411 = vld [vmem:[%s6] sm:$0x1]
      %v3412 = vadd.f32 %v3410, %v3411
      %v3413 = vmax.f32 %v3412, 0.0
      %v3414 = vld [vmem:[%s7] sm:$0xff]
      %v3415 = vld [vmem:[%s7 + $0x8] sm:$0xff]
      %v3416 = vld [vmem:[%s7 + $0x10] sm:$0xff]
      %v3417 = vld [vmem:[%s7 + $0x18] sm:$0xff]
      %v3418 = vld [vmem:[%s7 + $0x20] sm:$0xff]
      %v3419 = vld [vmem:[%s7 + $0x28] sm:$0xff]
      %v3420 = vld [vmem:[%s7 + $0x30] sm:$0xff]
      %v3421 = vld [vmem:[%s7 + $0x38] sm:$0xf]
      %v3422 = vlaneseq
      %v3423 = vshrl.u32 %v3422, 7
      %v3424 = vsub.s32 0, %v3423
      %v3425 = vrot.slane %v3413, %v3424
      %v3426 = vmul.f32 %v3414, %v3425
      %v3427 = vmul.f32 %v3415, %v3425
      %v3428 = vmul.f32 %v3416, %v3425
      %v3429 = vmul.f32 %v3417, %v3425
      %v3430 = vmul.f32 %v3418, %v3425
      %v3431 = vmul.f32 %v3419, %v3425
      %v3432 = vmul.f32 %v3420, %v3425
      %v3433 = vmul.f32 %v3421, %v3425
      %v3434 = vsel %vm3388, %v3426, 0.0
      %3435 = vadd.xlane.f32.xlu0 %v3434
      %v3436 = vpop.xlane.xlu0 %3435
      %v3437 = vsel %vm3388, %v3427, 0.0
      %3438 = vadd.xlane.f32.xlu0 %v3437
      %v3439 = vpop.xlane.xlu0 %3438
      %v3440 = vsel %vm3388, %v3428, 0.0
      %3441 = vadd.xlane.f32.xlu0 %v3440
      %v3442 = vpop.xlane.xlu0 %3441
      %v3443 = vsel %vm3388, %v3429, 0.0
      %3444 = vadd.xlane.f32.xlu0 %v3443
      %v3445 = vpop.xlane.xlu0 %3444
      %v3446 = vsel %vm3388, %v3430, 0.0
      %3447 = vadd.xlane.f32.xlu0 %v3446
      %v3448 = vpop.xlane.xlu0 %3447
      %v3449 = vsel %vm3388, %v3431, 0.0
      %3450 = vadd.xlane.f32.xlu0 %v3449
      %v3451 = vpop.xlane.xlu0 %3450
      %v3452 = vsel %vm3388, %v3432, 0.0
      %3453 = vadd.xlane.f32.xlu0 %v3452
      %v3454 = vpop.xlane.xlu0 %3453
      %v3455 = vsel %vm3402, %v3433, 0.0
      %3456 = vadd.xlane.f32.xlu0 %v3455
      %v3457 = vpop.xlane.xlu0 %3456
      %v3458 = vld [vmem:[%s8] sm:$0xff]
      %v3459 = vld [vmem:[%s8 + $0x8] sm:$0xff]
      %v3460 = vld [vmem:[%s8 + $0x10] sm:$0xff]
      %v3461 = vld [vmem:[%s8 + $0x18] sm:$0xff]
      %v3462 = vld [vmem:[%s8 + $0x20] sm:$0xff]
      %v3463 = vld [vmem:[%s8 + $0x28] sm:$0xff]
      %v3464 = vld [vmem:[%s8 + $0x30] sm:$0xff]
      %v3465 = vld [vmem:[%s8 + $0x38] sm:$0xf]
      %v3466 = vadd.f32 %v3436, %v3458
      %v3467 = vadd.f32 %v3439, %v3459
      %v3468 = vadd.f32 %v3442, %v3460
      %v3469 = vadd.f32 %v3445, %v3461
      %v3470 = vadd.f32 %v3448, %v3462
      %v3471 = vadd.f32 %v3451, %v3463
      %v3472 = vadd.f32 %v3454, %v3464
      %v3473 = vadd.f32 %v3457, %v3465
      %v3474 = vxor.u32 %v3466, 2147483648
      %v3475 = vxor.u32 %v3467, 2147483648
      %v3476 = vxor.u32 %v3468, 2147483648
      %v3477 = vxor.u32 %v3469, 2147483648
      %v3478 = vxor.u32 %v3470, 2147483648
      %v3479 = vxor.u32 %v3471, 2147483648
      %v3480 = vxor.u32 %v3472, 2147483648
      %v3481 = vxor.u32 %v3473, 2147483648
      %v3482 = vmul.f32 %v3474, 1.442695
      %v3483 = vpow.pop %v3482
      %v3484 = vmul.f32 %v3475, 1.442695
      %v3485 = vpow.pop %v3484
      %v3486 = vmul.f32 %v3476, 1.442695
      %v3487 = vpow.pop %v3486
      %v3488 = vmul.f32 %v3477, 1.442695
      %v3489 = vpow.pop %v3488
      %v3490 = vmul.f32 %v3478, 1.442695
      %v3491 = vpow.pop %v3490
      %v3492 = vmul.f32 %v3479, 1.442695
      %v3493 = vpow.pop %v3492
      %v3494 = vmul.f32 %v3480, 1.442695
      %v3495 = vpow.pop %v3494
      %v3496 = vmul.f32 %v3481, 1.442695
      %v3497 = vpow.pop %v3496
      %v3498 = vadd.f32 %v3483, 1.0
      %v3499 = vadd.f32 %v3485, 1.0
      %v3500 = vadd.f32 %v3487, 1.0
      %v3501 = vadd.f32 %v3489, 1.0
      %v3502 = vadd.f32 %v3491, 1.0
      %v3503 = vadd.f32 %v3493, 1.0
      %v3504 = vadd.f32 %v3495, 1.0
      %v3505 = vadd.f32 %v3497, 1.0
      %v3506 = vrcp.pop %v3498
      %v3507 = vmul.f32 1.0, %v3506
      %v3508 = vrcp.pop %v3499
      %v3509 = vmul.f32 1.0, %v3508
      %v3510 = vrcp.pop %v3500
      %v3511 = vmul.f32 1.0, %v3510
      %v3512 = vrcp.pop %v3501
      %v3513 = vmul.f32 1.0, %v3512
      %v3514 = vrcp.pop %v3502
      %v3515 = vmul.f32 1.0, %v3514
      %v3516 = vrcp.pop %v3503
      %v3517 = vmul.f32 1.0, %v3516
      %v3518 = vrcp.pop %v3504
      %v3519 = vmul.f32 1.0, %v3518
      %v3520 = vrcp.pop %v3505
      %v3521 = vmul.f32 1.0, %v3520
      %3523 = vset.pattern.permute.xlu0 0
      %3524 = vperm.xlu0 %3523, %v3507
      %v3525 = vpop.permute.xlu0 %3524
      %3528 = vset.pattern.permute.xlu0 0
      %3529 = vperm.xlu0 %3528, %v3509
      %v3530 = vpop.permute.xlu0 %3529
      %3533 = vset.pattern.permute.xlu0 0
      %3534 = vperm.xlu0 %3533, %v3511
      %v3535 = vpop.permute.xlu0 %3534
      %3538 = vset.pattern.permute.xlu0 0
      %3539 = vperm.xlu0 %3538, %v3513
      %v3540 = vpop.permute.xlu0 %3539
      %3543 = vset.pattern.permute.xlu0 0
      %3544 = vperm.xlu0 %3543, %v3515
      %v3545 = vpop.permute.xlu0 %3544
      %3548 = vset.pattern.permute.xlu0 0
      %3549 = vperm.xlu0 %3548, %v3517
      %v3550 = vpop.permute.xlu0 %3549
      %3553 = vset.pattern.permute.xlu0 0
      %3554 = vperm.xlu0 %3553, %v3519
      %v3555 = vpop.permute.xlu0 %3554
      %3558 = vset.pattern.permute.xlu0 0
      %3559 = vperm.xlu0 %3558, %v3521
      %v3560 = vpop.permute.xlu0 %3559
      %v3562 = vmul.f32 %v3299, %v3525
      %v3563 = vmul.f32 %v3301, %v3525
      %v3564 = vmul.f32 %v3303, %v3530
      %v3565 = vmul.f32 %v3305, %v3530
      %v3566 = vmul.f32 %v3309, %v3535
      %v3567 = vmul.f32 %v3311, %v3535
      %v3568 = vmul.f32 %v3313, %v3540
      %v3569 = vmul.f32 %v3315, %v3540
      %v3570 = vmul.f32 %v3319, %v3545
      %v3571 = vmul.f32 %v3321, %v3545
      %v3572 = vmul.f32 %v3323, %v3550
      %v3573 = vmul.f32 %v3325, %v3550
      %v3574 = vmul.f32 %v3329, %v3555
      %v3575 = vmul.f32 %v3331, %v3555
      %v3576 = vmul.f32 %v3333, %v3560
      %v3577 = vmul.f32 %v3335, %v3560
      %3578 = vst [vmem:[%s386] sm:$0xff] %v3562
      %3579 = vst [vmem:[%s386 + $0x8] sm:$0xff] %v3563
      %3580 = vst [vmem:[%s386 + $0x10] sm:$0xff] %v3564
      %3581 = vst [vmem:[%s386 + $0x18] sm:$0xff] %v3565
      %3582 = vst [vmem:[%s386 + $0x20] sm:$0xff] %v3566
      %3583 = vst [vmem:[%s386 + $0x28] sm:$0xff] %v3567
      %3584 = vst [vmem:[%s386 + $0x30] sm:$0xff] %v3568
      %3585 = vst [vmem:[%s386 + $0x38] sm:$0xff] %v3569
      %3586 = vst [vmem:[%s386 + $0x40] sm:$0xff] %v3570
      %3587 = vst [vmem:[%s386 + $0x48] sm:$0xff] %v3571
      %3588 = vst [vmem:[%s386 + $0x50] sm:$0xff] %v3572
      %3589 = vst [vmem:[%s386 + $0x58] sm:$0xff] %v3573
      %3590 = vst [vmem:[%s386 + $0x60] sm:$0xff] %v3574
      %3591 = vst [vmem:[%s386 + $0x68] sm:$0xff] %v3575
      %3592 = vst [vmem:[%s386 + $0x70] sm:$0xf] %v3576
      %3593 = vst [vmem:[%s386 + $0x78] sm:$0xf] %v3577
      %p3594 = scmp.lt.s32.totalorder %s22, 1
      %s3595 = scalar_select %p3594, %s22, 1
      %s3596 = smul.addr %s3595, 16
      %s3597 = smul.addr %s3596, 8
      %s3598 = scalar_lea.vmem %s11, %s3597
      // Predicated region
      $region69: #{tpu_custom_call.1} parent=63 // pred_check
        %p3599 = pneg %p276
      $region70: #{tpu_custom_call.1} parent=63 // pred_check_branch
        %3601 = sbr.rel (%p3599) target = $region72
      $region71: #{tpu_custom_call.1} parent=63 // pred_region
        _
      $region72: #{tpu_custom_call.1} parent=63 // pred_fallthru
        _
    $region64: #{tpu_custom_call.1} parent=5 // pred_fallthru
      _
    %p3602 = scmp.le.s32.totalorder 2, %s17
    // Predicated region
    $region73: #{tpu_custom_call.1} parent=5 // pred_check
      %p3603 = pneg %p3602
    $region74: #{tpu_custom_call.1} parent=5 // pred_check_branch
      %3605 = sbr.rel (%p3603) target = $region76
    $region75: #{tpu_custom_call.1} parent=5 // pred_region
      %s3606 = ssub.s32 %s17, 2
      // Predicated region
      $region77: #{tpu_custom_call.1} parent=75 // pred_check
        %p3607 = pneg %p282
      $region78: #{tpu_custom_call.1} parent=75 // pred_check_branch
        %3609 = sbr.rel (%p3607) target = $region80
      $region79: #{tpu_custom_call.1} parent=75 // pred_region
        %p3610 = scmp.lt.s32.totalorder %s23, 1
        %s3611 = scalar_select %p3610, %s23, 1
        %s3612 = smul.addr %s3611, 16
        %s3613 = smul.addr %s3612, 8
        %s3614 = scalar_lea.vmem %s11, %s3613
      $region80: #{tpu_custom_call.1} parent=75 // pred_fallthru
        _
    $region76: #{tpu_custom_call.1} parent=5 // pred_fallthru
      _
  $region6: #{tpu_custom_call.1} parent=0 // loop_footer
    %s21 = sadd.s32 1, %s17
  $region7: #{tpu_custom_call.1} parent=0 // loop_footer_branch
    %16 = sbr.rel target = $region3
  $region8: #{tpu_custom_call.1} parent=0 // loop_exit
    _

</llo_original>
